<compile_context>
chip_gen: v7x
topology: tpu7x:2x2x1
jax: 0.10.0
libtpu: 0.0.40
codegen_flags: <defaults>
</compile_context>

<pallas_src>
import math

import jax
import jax.numpy as jnp
from jax.experimental import pallas as pl
from jax.experimental.pallas import tpu as pltpu

# ----------------------------- config (small synthetic ViT) -----------------------------
BATCH = 2
CHANNELS = 3
IMG = 16                 # TODO(synk): real AutoImageProcessor resizes to 224x224 via PIL; skipped at toy size.
PATCH = 8
NUM_PATCHES = (IMG // PATCH) ** 2          # 4
SEQ = NUM_PATCHES + 1                      # 5  (CLS + patches)
SEQ_PAD = ((SEQ + 7) // 8) * 8             # 8  (sublane-aligned token rows)
BS = BATCH * SEQ_PAD                       # 16 (all batch elements' token rows stacked)
HIDDEN = 128                               # lane-aligned hidden (real Phikon: 768)
HEADS = 4
HEAD_DIM = HIDDEN // HEADS                 # 32
MLP = 4 * HIDDEN                           # 512
LAYERS = 2
LN_EPS = 1e-12                             # HF ViT layer_norm_eps
CPP = CHANNELS * PATCH * PATCH             # 192

MXU_DTYPE = jnp.bfloat16                   # matmul operand dtype; accumulation stays f32

IMAGENET_MEAN = jnp.array([0.485, 0.456, 0.406], jnp.float32)
IMAGENET_STD = jnp.array([0.229, 0.224, 0.225], jnp.float32)


# ----------------------------------- in-kernel helpers -----------------------------------
def _ln(x, g, b):
    mean = jnp.mean(x, axis=-1, keepdims=True)
    xc = x - mean
    var = jnp.mean(xc * xc, axis=-1, keepdims=True)
    return xc * jax.lax.rsqrt(var + LN_EPS) * g + b


def _gelu(x):
    # TODO(synk): HF ViT uses exact (erf) GELU; tanh approximation used for robust Mosaic lowering.
    c = math.sqrt(2.0 / math.pi)
    return 0.5 * x * (1.0 + jnp.tanh(c * (x + 0.044715 * x * x * x)))


def _mm(x, w):
    # Cast activation to the (bf16) weight dtype inside the kernel; accumulate in f32 on the MXU.
    return jnp.dot(x.astype(w.dtype), w, preferred_element_type=jnp.float32)


# ------------------------------- fused encoder kernel -------------------------------
def _encoder_kernel(patch_ref, pw_ref, base_ref, bias_ref,
                    ln1g_ref, ln1b_ref, qkvw_ref, qkvb_ref, ow_ref, ob_ref,
                    ln2g_ref, ln2b_ref, fc1w_ref, fc1b_ref, fc2w_ref, fc2b_ref,
                    lnfg_ref, lnfb_ref, out_ref, h_acc):
    layer = pl.program_id(0)

    # ---- stem (layer 0 only): uint8 round-trip rescale + patch embed + (CLS/pos/bias base) ----
    @pl.when(layer == 0)
    def _():
        raw = patch_ref[...]                                    # (BS, CPP); CLS/pad rows are zero
        rescaled = jnp.floor(raw * 255.0) * (1.0 / 255.0)       # emulate tensor->uint8 PIL->rescale
        # ImageNet normalize folded into pw; patch bias / CLS / pos folded into base.
        h_acc[...] = base_ref[...] + _mm(rescaled, pw_ref[...])

    h = h_acc[...]                                              # (BS, HIDDEN) VMEM-resident residual
    attn_bias = bias_ref[...]                                   # (BS, BS) block-diagonal + pad mask

    # ---- self-attention (pre-LN), fused QKV projection, all batch elements at once ----
    x = _ln(h, ln1g_ref[0], ln1b_ref[0])
    qkv = _mm(x, qkvw_ref[0]) + qkvb_ref[0]                     # (BS, 3*HIDDEN)
    q = qkv[:, 0:HIDDEN]                                        # 1/sqrt(dh) folded into q weights
    k = qkv[:, HIDDEN:2 * HIDDEN]
    v = qkv[:, 2 * HIDDEN:3 * HIDDEN]

    o_w = ow_ref[0]                                             # (HIDDEN, HIDDEN) bf16
    attn_out = jnp.zeros((BS, HIDDEN), jnp.float32)
    for hh in range(HEADS):                                     # static unroll; heads live on lane slices
        sl = slice(hh * HEAD_DIM, (hh + 1) * HEAD_DIM)
        qh, kh, vh = q[:, sl], k[:, sl], v[:, sl]
        s = jnp.dot(qh, kh.T, preferred_element_type=jnp.float32) + attn_bias
        s = s - jnp.max(s, axis=-1, keepdims=True)
        p = jnp.exp(s)
        p = p * pl.reciprocal(jnp.sum(p, axis=-1, keepdims=True), approx=True)
        ctx_h = jnp.dot(p, vh, preferred_element_type=jnp.float32)
        attn_out = attn_out + _mm(ctx_h, o_w[sl, :])            # ctx @ o_w accumulated head-by-head
    h = h + attn_out + ob_ref[0]

    # ---- MLP (pre-LN) ----
    x2 = _ln(h, ln2g_ref[0], ln2b_ref[0])
    m = _gelu(_mm(x2, fc1w_ref[0]) + fc1b_ref[0])
    h = h + _mm(m, fc2w_ref[0]) + fc2b_ref[0]

    h_acc[...] = h

    # ---- last layer: final LayerNorm on the CLS rows only, single lane-dense HBM writeback ----
    @pl.when(layer == pl.num_programs(0) - 1)
    def _():
        cls_rows = jnp.concatenate(
            [h[b * SEQ_PAD:b * SEQ_PAD + 1, :] for b in range(BATCH)], axis=0)   # (B, HIDDEN)
        out_ref[...] = _ln(cls_rows, lnfg_ref[...], lnfb_ref[...]).astype(out_ref.dtype)


def encoder_pallas(patch_rows, kp):
    lmap3 = lambda l: (l, 0, 0)
    cmap2 = lambda l: (0, 0)

    in_specs = [
        pl.BlockSpec((BS, CPP), cmap2),                     # raw patch pixels (zero rows at CLS/pad slots)
        pl.BlockSpec((CPP, HIDDEN), cmap2),                 # folded patch weight (bf16)
        pl.BlockSpec((BS, HIDDEN), cmap2),                  # CLS + pos + patch-bias base
        pl.BlockSpec((BS, BS), cmap2),                      # additive attention bias (block-diag + pad)
        pl.BlockSpec((1, 1, HIDDEN), lmap3),                # ln1 gamma
        pl.BlockSpec((1, 1, HIDDEN), lmap3),                # ln1 beta
        pl.BlockSpec((1, HIDDEN, 3 * HIDDEN), lmap3),       # fused QKV weight (bf16)
        pl.BlockSpec((1, 1, 3 * HIDDEN), lmap3),            # fused QKV bias
        pl.BlockSpec((1, HIDDEN, HIDDEN), lmap3),           # attention output weight (bf16)
        pl.BlockSpec((1, 1, HIDDEN), lmap3),                # attention output bias
        pl.BlockSpec((1, 1, HIDDEN), lmap3),                # ln2 gamma
        pl.BlockSpec((1, 1, HIDDEN), lmap3),                # ln2 beta
        pl.BlockSpec((1, HIDDEN, MLP), lmap3),              # fc1 weight (bf16)
        pl.BlockSpec((1, 1, MLP), lmap3),                   # fc1 bias
        pl.BlockSpec((1, MLP, HIDDEN), lmap3),              # fc2 weight (bf16)
        pl.BlockSpec((1, 1, HIDDEN), lmap3),                # fc2 bias
        pl.BlockSpec((1, HIDDEN), cmap2),                   # final LN gamma
        pl.BlockSpec((1, HIDDEN), cmap2),                   # final LN beta
    ]

    return pl.pallas_call(
        _encoder_kernel,
        out_shape=jax.ShapeDtypeStruct((BATCH, HIDDEN), jnp.float32),
        grid_spec=pltpu.PrefetchScalarGridSpec(
            num_scalar_prefetch=0,
            grid=(LAYERS,),
            in_specs=in_specs,
            out_specs=pl.BlockSpec((BATCH, HIDDEN), cmap2),
            scratch_shapes=[pltpu.VMEM((BS, HIDDEN), jnp.float32)],
        ),
        compiler_params=pltpu.CompilerParams(
            dimension_semantics=("arbitrary",),              # layer axis carries the residual scratch
            vmem_limit_bytes=32 * 1024 * 1024,
        ),
    )(patch_rows, kp["pw"], kp["base"], kp["attn_bias"],
      kp["ln1_g"], kp["ln1_b"], kp["qkv_w"], kp["qkv_b"], kp["o_w"], kp["o_b"],
      kp["ln2_g"], kp["ln2_b"], kp["fc1_w"], kp["fc1_b"], kp["fc2_w"], kp["fc2_b"],
      kp["lnf_g"], kp["lnf_b"])


# --------------------------------- parameters (synthetic) ---------------------------------
def init_params(key):
    idx = [0]

    def w(shape, scale=0.02):
        idx[0] += 1
        return scale * jax.random.normal(jax.random.fold_in(key, idx[0]), shape, jnp.float32)

    zeros = lambda s: jnp.zeros(s, jnp.float32)
    ones = lambda s: jnp.ones(s, jnp.float32)

    params = {
        "patch_w": w((CPP, HIDDEN)),     # Conv2d(P, stride=P) flattened as (C,P,P) -> D
        "patch_b": zeros((1, HIDDEN)),
        "cls": w((1, HIDDEN)),
        "pos": w((SEQ, HIDDEN)),
        "ln_g": ones((1, HIDDEN)),
        "ln_b": zeros((1, HIDDEN)),
        "layers": [],
    }
    for _ in range(LAYERS):
        params["layers"].append({
            "ln1_g": ones((1, HIDDEN)), "ln1_b": zeros((1, HIDDEN)),
            "q_w": w((HIDDEN, HIDDEN)), "q_b": zeros((1, HIDDEN)),
            "k_w": w((HIDDEN, HIDDEN)), "k_b": zeros((1, HIDDEN)),
            "v_w": w((HIDDEN, HIDDEN)), "v_b": zeros((1, HIDDEN)),
            "o_w": w((HIDDEN, HIDDEN)), "o_b": zeros((1, HIDDEN)),
            "ln2_g": ones((1, HIDDEN)), "ln2_b": zeros((1, HIDDEN)),
            "fc1_w": w((HIDDEN, MLP)), "fc1_b": zeros((1, MLP)),
            "fc2_w": w((MLP, HIDDEN)), "fc2_b": zeros((1, HIDDEN)),
        })
    return params


def pack_params(params):
    """Canonical per-layer params -> kernel-ready stacked arrays (bf16 matmul weights)."""
    layers = params["layers"]
    stack = lambda name: jnp.stack([lp[name] for lp in layers], axis=0)

    # Fold the processor's ImageNet normalization into the patch projection:
    #   ((x/255 - mean)/std) @ W + b  ==  (x/255) @ (W/std)  +  (b - (mean/std) . W)
    inv_std = 1.0 / IMAGENET_STD
    row_scale = jnp.repeat(inv_std, PATCH * PATCH)[:, None]                  # (CPP, 1), channel-major rows
    row_shift = jnp.repeat(IMAGENET_MEAN * inv_std, PATCH * PATCH)[:, None]
    pw = (params["patch_w"] * row_scale).astype(MXU_DTYPE)
    pb = params["patch_b"] - jnp.sum(row_shift * params["patch_w"], axis=0, keepdims=True)

    # Base tensor: CLS + pos[0] on CLS rows, pos[i] + patch bias on patch rows, 0 on pad rows.
    base_tok = jnp.zeros((SEQ_PAD, HIDDEN), jnp.float32)
    base_tok = base_tok.at[0].set(params["cls"][0] + params["pos"][0])
    base_tok = base_tok.at[1:SEQ].set(params["pos"][1:SEQ] + pb)
    base = jnp.tile(base_tok, (BATCH, 1))                                    # (BS, HIDDEN)

    # Additive attention bias: block-diagonal across batch elements + mask padded key rows.
    rows = jnp.arange(BS)
    same_batch = (rows[:, None] // SEQ_PAD) == (rows[None, :] // SEQ_PAD)
    key_valid = (rows[None, :] % SEQ_PAD) < SEQ
    attn_bias = jnp.where(same_batch & key_valid, 0.0, -1e30).astype(jnp.float32)  # (BS, BS)

    # Fuse QKV; fold 1/sqrt(head_dim) into the Q projection (weights + bias).
    scale = 1.0 / math.sqrt(HEAD_DIM)
    qkv_w = jnp.stack([jnp.concatenate([lp["q_w"] * scale, lp["k_w"], lp["v_w"]], axis=1)
                       for lp in layers], axis=0).astype(MXU_DTYPE)
    qkv_b = jnp.stack([jnp.concatenate([lp["q_b"] * scale, lp["k_b"], lp["v_b"]], axis=1)
                       for lp in layers], axis=0)

    return {
        "pw": pw, "base": base, "attn_bias": attn_bias,
        "ln1_g": stack("ln1_g"), "ln1_b": stack("ln1_b"),
        "qkv_w": qkv_w, "qkv_b": qkv_b,
        "o_w": stack("o_w").astype(MXU_DTYPE), "o_b": stack("o_b"),
        "ln2_g": stack("ln2_g"), "ln2_b": stack("ln2_b"),
        "fc1_w": stack("fc1_w").astype(MXU_DTYPE), "fc1_b": stack("fc1_b"),
        "fc2_w": stack("fc2_w").astype(MXU_DTYPE), "fc2_b": stack("fc2_b"),
        "lnf_g": params["ln_g"], "lnf_b": params["ln_b"],
    }


# --------------------------------------- forward ---------------------------------------
def phikon_forward(images, params):
    """images: (B, C, H, W) float32 in [0, 1] (NCHW, like the PyTorch module's input tensors)."""
    B, C, H, W = images.shape
    assert (B, C, H, W) == (BATCH, CHANNELS, IMG, IMG), (B, C, H, W)
    # Patchify NCHW -> (B, N, C*P*P); feature ordering matches Conv2d weight flattening (C, P, P).
    x = images.reshape(B, C, H // PATCH, PATCH, W // PATCH, PATCH)
    x = x.transpose(0, 2, 4, 1, 3, 5).reshape(B, NUM_PATCHES, CPP)
    # Insert a zero row for the CLS slot and zero pad rows, then stack batch into the token axis.
    x = jnp.pad(x, ((0, 0), (1, SEQ_PAD - SEQ), (0, 0)))
    patch_rows = x.reshape(BATCH * SEQ_PAD, CPP)
    kp = pack_params(params)
    return encoder_pallas(patch_rows, kp)     # (B, HIDDEN) == last_hidden_state[:, 0, :] (CLS embedding)


# ----------------------------------------- main -----------------------------------------
if __name__ == "__main__":
    key = jax.random.PRNGKey(0)
    k_img, k_par = jax.random.split(key)
    images = jax.random.uniform(k_img, (BATCH, CHANNELS, IMG, IMG), jnp.float32)   # NCHW in [0, 1)
    params = init_params(k_par)

    fwd = jax.jit(phikon_forward)
    out = jax.block_until_ready(fwd(images, params))

    assert out.shape == (BATCH, HIDDEN), out.shape
    assert bool(jnp.all(jnp.isfinite(out)))
    print("KERNEL_OK")
</pallas_src>

<mosaic_0001>
module attributes {stable_mosaic.version = 11 : i64} {
  func.func @_encoder_kernel(%arg0: i32, %arg1: memref<16x192xf32, #tpu.memory_space<vmem>>, %arg2: memref<192x128xbf16, #tpu.memory_space<vmem>>, %arg3: memref<16x128xf32, #tpu.memory_space<vmem>>, %arg4: memref<16x16xf32, #tpu.memory_space<vmem>>, %arg5: memref<1x1x128xf32, #tpu.memory_space<vmem>>, %arg6: memref<1x1x128xf32, #tpu.memory_space<vmem>>, %arg7: memref<1x128x384xbf16, #tpu.memory_space<vmem>>, %arg8: memref<1x1x384xf32, #tpu.memory_space<vmem>>, %arg9: memref<1x128x128xbf16, #tpu.memory_space<vmem>>, %arg10: memref<1x1x128xf32, #tpu.memory_space<vmem>>, %arg11: memref<1x1x128xf32, #tpu.memory_space<vmem>>, %arg12: memref<1x1x128xf32, #tpu.memory_space<vmem>>, %arg13: memref<1x128x512xbf16, #tpu.memory_space<vmem>>, %arg14: memref<1x1x512xf32, #tpu.memory_space<vmem>>, %arg15: memref<1x512x128xbf16, #tpu.memory_space<vmem>>, %arg16: memref<1x1x128xf32, #tpu.memory_space<vmem>>, %arg17: memref<1x128xf32, #tpu.memory_space<vmem>>, %arg18: memref<1x128xf32, #tpu.memory_space<vmem>>, %arg19: memref<2x128xf32, #tpu.memory_space<vmem>>, %arg20: memref<16x128xf32, #tpu.memory_space<vmem>>) attributes {dimension_semantics = [#tpu.dimension_semantics<arbitrary>], iteration_bounds = array<i64: 2>, scalar_prefetch = 0 : i64, scratch_operands = 1 : i64, tpu.core_type = #tpu.core_type<tc>, window_params = [{pipeline_mode = #tpu.pipeline_mode<synchronous>, transform_indices = @transform_0, window_bounds = array<i64: 16, 192>}, {pipeline_mode = #tpu.pipeline_mode<synchronous>, transform_indices = @transform_1, window_bounds = array<i64: 192, 128>}, {pipeline_mode = #tpu.pipeline_mode<synchronous>, transform_indices = @transform_2, window_bounds = array<i64: 16, 128>}, {pipeline_mode = #tpu.pipeline_mode<synchronous>, transform_indices = @transform_3, window_bounds = array<i64: 16, 16>}, {transform_indices = @transform_4, window_bounds = array<i64: 1, 1, 128>}, {transform_indices = @transform_5, window_bounds = array<i64: 1, 1, 128>}, {transform_indices = @transform_6, window_bounds = array<i64: 1, 128, 384>}, {transform_indices = @transform_7, window_bounds = array<i64: 1, 1, 384>}, {transform_indices = @transform_8, window_bounds = array<i64: 1, 128, 128>}, {transform_indices = @transform_9, window_bounds = array<i64: 1, 1, 128>}, {transform_indices = @transform_10, window_bounds = array<i64: 1, 1, 128>}, {transform_indices = @transform_11, window_bounds = array<i64: 1, 1, 128>}, {transform_indices = @transform_12, window_bounds = array<i64: 1, 128, 512>}, {transform_indices = @transform_13, window_bounds = array<i64: 1, 1, 512>}, {transform_indices = @transform_14, window_bounds = array<i64: 1, 512, 128>}, {transform_indices = @transform_15, window_bounds = array<i64: 1, 1, 128>}, {pipeline_mode = #tpu.pipeline_mode<synchronous>, transform_indices = @transform_16, window_bounds = array<i64: 1, 128>}, {pipeline_mode = #tpu.pipeline_mode<synchronous>, transform_indices = @transform_17, window_bounds = array<i64: 1, 128>}, {pipeline_mode = #tpu.pipeline_mode<synchronous>, transform_indices = @transform_18, window_bounds = array<i64: 2, 128>}]} {
    %c0_i32 = arith.constant 0 : i32
    %0 = arith.cmpi eq, %arg0, %c0_i32 : i32
    %1 = arith.extui %0 : i1 to i32
    %c0_i32_0 = arith.constant 0 : i32
    %2 = arith.cmpi ne, %1, %c0_i32_0 : i32
    scf.if %2 {
      %c0_80 = arith.constant 0 : index
      %c0_81 = arith.constant 0 : index
      %190 = vector.load %arg1[%c0_80, %c0_81] : memref<16x192xf32, #tpu.memory_space<vmem>>, vector<16x192xf32>
      %cst_82 = arith.constant 2.550000e+02 : f32
      %191 = vector.broadcast %cst_82 : f32 to vector<16x192xf32>
      %192 = arith.mulf %190, %191 : vector<16x192xf32>
      %193 = math.floor %192 : vector<16x192xf32>
      %cst_83 = arith.constant 0.00392156886 : f32
      %194 = vector.broadcast %cst_83 : f32 to vector<16x192xf32>
      %195 = arith.mulf %193, %194 : vector<16x192xf32>
      %c0_84 = arith.constant 0 : index
      %c0_85 = arith.constant 0 : index
      %196 = vector.load %arg3[%c0_84, %c0_85] : memref<16x128xf32, #tpu.memory_space<vmem>>, vector<16x128xf32>
      %c0_86 = arith.constant 0 : index
      %c0_87 = arith.constant 0 : index
      %197 = vector.load %arg2[%c0_86, %c0_87] : memref<192x128xbf16, #tpu.memory_space<vmem>>, vector<192x128xbf16>
      %198 = arith.truncf %195 : vector<16x192xf32> to vector<16x192xbf16>
      %cst_88 = arith.constant dense<0.000000e+00> : vector<16x128xf32>
      %199 = tpu.matmul %198, %197, %cst_88 {dimension_numbers = #tpu.dot_dimension_numbers<[1], [0], [0], [1], [0, 0, 1, 1], [], []>} : vector<16x192xbf16>, vector<192x128xbf16>, vector<16x128xf32> -> vector<16x128xf32>
      %200 = arith.addf %196, %199 : vector<16x128xf32>
      %c0_89 = arith.constant 0 : index
      %c0_90 = arith.constant 0 : index
      %201 = vector.load %arg20[%c0_89, %c0_90] : memref<16x128xf32, #tpu.memory_space<vmem>>, vector<16x128xf32>
      tpu.vector_store %arg20[%c0_89, %c0_90], %200 {strides = array<i32>} : memref<16x128xf32, #tpu.memory_space<vmem>>, vector<16x128xf32>,
    } else {
    }
    %c0 = arith.constant 0 : index
    %c0_1 = arith.constant 0 : index
    %3 = vector.load %arg20[%c0, %c0_1] : memref<16x128xf32, #tpu.memory_space<vmem>>, vector<16x128xf32>
    %c0_2 = arith.constant 0 : index
    %c0_3 = arith.constant 0 : index
    %4 = vector.load %arg4[%c0_2, %c0_3] : memref<16x16xf32, #tpu.memory_space<vmem>>, vector<16x16xf32>
    %c0_4 = arith.constant 0 : index
    %c0_5 = arith.constant 0 : index
    %c0_6 = arith.constant 0 : index
    %5 = vector.load %arg5[%c0_4, %c0_5, %c0_6] : memref<1x1x128xf32, #tpu.memory_space<vmem>>, vector<1x1x128xf32>
    %6 = vector.shape_cast %5 : vector<1x1x128xf32> to vector<1x128xf32>
    %c0_7 = arith.constant 0 : index
    %c0_8 = arith.constant 0 : index
    %c0_9 = arith.constant 0 : index
    %7 = vector.load %arg6[%c0_7, %c0_8, %c0_9] : memref<1x1x128xf32, #tpu.memory_space<vmem>>, vector<1x1x128xf32>
    %8 = vector.shape_cast %7 : vector<1x1x128xf32> to vector<1x128xf32>
    %cst = arith.constant dense<0.000000e+00> : vector<16xf32>
    %9 = vector.multi_reduction <add>, %3, %cst [1] : vector<16x128xf32> to vector<16xf32>
    %10 = vector.shape_cast %9 : vector<16xf32> to vector<16x1xf32>
    %cst_10 = arith.constant 1.280000e+02 : f32
    %11 = vector.broadcast %cst_10 : f32 to vector<16x1xf32>
    %12 = arith.divf %10, %11 : vector<16x1xf32>
    %13 = vector.broadcast %12 : vector<16x1xf32> to vector<16x128xf32>
    %14 = arith.subf %3, %13 : vector<16x128xf32>
    %15 = arith.mulf %14, %14 : vector<16x128xf32>
    %cst_11 = arith.constant dense<0.000000e+00> : vector<16xf32>
    %16 = vector.multi_reduction <add>, %15, %cst_11 [1] : vector<16x128xf32> to vector<16xf32>
    %17 = vector.shape_cast %16 : vector<16xf32> to vector<16x1xf32>
    %cst_12 = arith.constant 1.280000e+02 : f32
    %18 = vector.broadcast %cst_12 : f32 to vector<16x1xf32>
    %19 = arith.divf %17, %18 : vector<16x1xf32>
    %cst_13 = arith.constant 9.99999996E-13 : f32
    %20 = vector.broadcast %cst_13 : f32 to vector<16x1xf32>
    %21 = arith.addf %19, %20 : vector<16x1xf32>
    %22 = math.rsqrt %21 : vector<16x1xf32>
    %23 = vector.broadcast %22 : vector<16x1xf32> to vector<16x128xf32>
    %24 = arith.mulf %14, %23 : vector<16x128xf32>
    %25 = vector.broadcast %6 : vector<1x128xf32> to vector<16x128xf32>
    %26 = arith.mulf %24, %25 : vector<16x128xf32>
    %27 = vector.broadcast %8 : vector<1x128xf32> to vector<16x128xf32>
    %28 = arith.addf %26, %27 : vector<16x128xf32>
    %c0_14 = arith.constant 0 : index
    %c0_15 = arith.constant 0 : index
    %c0_16 = arith.constant 0 : index
    %29 = vector.load %arg7[%c0_14, %c0_15, %c0_16] : memref<1x128x384xbf16, #tpu.memory_space<vmem>>, vector<1x128x384xbf16>
    %30 = vector.shape_cast %29 : vector<1x128x384xbf16> to vector<128x384xbf16>
    %31 = arith.truncf %28 : vector<16x128xf32> to vector<16x128xbf16>
    %cst_17 = arith.constant dense<0.000000e+00> : vector<16x384xf32>
    %32 = tpu.matmul %31, %30, %cst_17 {dimension_numbers = #tpu.dot_dimension_numbers<[1], [0], [0], [1], [0, 0, 1, 1], [], []>} : vector<16x128xbf16>, vector<128x384xbf16>, vector<16x384xf32> -> vector<16x384xf32>
    %c0_18 = arith.constant 0 : index
    %c0_19 = arith.constant 0 : index
    %c0_20 = arith.constant 0 : index
    %33 = vector.load %arg8[%c0_18, %c0_19, %c0_20] : memref<1x1x384xf32, #tpu.memory_space<vmem>>, vector<1x1x384xf32>
    %34 = vector.shape_cast %33 : vector<1x1x384xf32> to vector<1x384xf32>
    %35 = vector.broadcast %34 : vector<1x384xf32> to vector<16x384xf32>
    %36 = arith.addf %32, %35 : vector<16x384xf32>
    %37 = vector.extract_strided_slice %36 {offsets = [0, 0], sizes = [16, 128], strides = [1, 1]} : vector<16x384xf32> to vector<16x128xf32>
    %38 = vector.extract_strided_slice %36 {offsets = [0, 128], sizes = [16, 128], strides = [1, 1]} : vector<16x384xf32> to vector<16x128xf32>
    %39 = vector.extract_strided_slice %36 {offsets = [0, 256], sizes = [16, 128], strides = [1, 1]} : vector<16x384xf32> to vector<16x128xf32>
    %c0_21 = arith.constant 0 : index
    %c0_22 = arith.constant 0 : index
    %c0_23 = arith.constant 0 : index
    %40 = vector.load %arg9[%c0_21, %c0_22, %c0_23] : memref<1x128x128xbf16, #tpu.memory_space<vmem>>, vector<1x128x128xbf16>
    %41 = vector.shape_cast %40 : vector<1x128x128xbf16> to vector<128x128xbf16>
    %cst_24 = arith.constant 0.000000e+00 : f32
    %42 = vector.broadcast %cst_24 : f32 to vector<16x128xf32>
    %43 = vector.extract_strided_slice %37 {offsets = [0, 0], sizes = [16, 32], strides = [1, 1]} : vector<16x128xf32> to vector<16x32xf32>
    %44 = vector.extract_strided_slice %38 {offsets = [0, 0], sizes = [16, 32], strides = [1, 1]} : vector<16x128xf32> to vector<16x32xf32>
    %45 = vector.extract_strided_slice %39 {offsets = [0, 0], sizes = [16, 32], strides = [1, 1]} : vector<16x128xf32> to vector<16x32xf32>
    %46 = tpu.transpose %44, [1, 0] : vector<16x32xf32> -> vector<32x16xf32>
    %cst_25 = arith.constant dense<0.000000e+00> : vector<16x16xf32>
    %47 = tpu.matmul %43, %46, %cst_25 {dimension_numbers = #tpu.dot_dimension_numbers<[1], [0], [0], [1], [0, 0, 1, 1], [], []>} : vector<16x32xf32>, vector<32x16xf32>, vector<16x16xf32> -> vector<16x16xf32>
    %48 = arith.addf %47, %4 : vector<16x16xf32>
    %cst_26 = arith.constant dense<0xFF800000> : vector<16xf32>
    %49 = vector.multi_reduction <maximumf>, %48, %cst_26 [1] : vector<16x16xf32> to vector<16xf32>
    %50 = vector.shape_cast %49 : vector<16xf32> to vector<16x1xf32>
    %51 = vector.broadcast %50 : vector<16x1xf32> to vector<16x16xf32>
    %52 = arith.subf %48, %51 : vector<16x16xf32>
    %53 = math.exp %52 : vector<16x16xf32>
    %cst_27 = arith.constant dense<0.000000e+00> : vector<16xf32>
    %54 = vector.multi_reduction <add>, %53, %cst_27 [1] : vector<16x16xf32> to vector<16xf32>
    %55 = vector.shape_cast %54 : vector<16xf32> to vector<16x1xf32>
    %56 = tpu.reciprocal %55 {approx = true} : vector<16x1xf32> -> vector<16x1xf32>
    %57 = vector.broadcast %56 : vector<16x1xf32> to vector<16x16xf32>
    %58 = arith.mulf %53, %57 : vector<16x16xf32>
    %cst_28 = arith.constant dense<0.000000e+00> : vector<16x32xf32>
    %59 = tpu.matmul %58, %45, %cst_28 {dimension_numbers = #tpu.dot_dimension_numbers<[1], [0], [0], [1], [0, 0, 1, 1], [], []>} : vector<16x16xf32>, vector<16x32xf32>, vector<16x32xf32> -> vector<16x32xf32>
    %60 = vector.extract_strided_slice %41 {offsets = [0, 0], sizes = [32, 128], strides = [1, 1]} : vector<128x128xbf16> to vector<32x128xbf16>
    %61 = arith.truncf %59 : vector<16x32xf32> to vector<16x32xbf16>
    %cst_29 = arith.constant dense<0.000000e+00> : vector<16x128xf32>
    %62 = tpu.matmul %61, %60, %cst_29 {dimension_numbers = #tpu.dot_dimension_numbers<[1], [0], [0], [1], [0, 0, 1, 1], [], []>} : vector<16x32xbf16>, vector<32x128xbf16>, vector<16x128xf32> -> vector<16x128xf32>
    %63 = arith.addf %42, %62 : vector<16x128xf32>
    %64 = vector.extract_strided_slice %37 {offsets = [0, 32], sizes = [16, 32], strides = [1, 1]} : vector<16x128xf32> to vector<16x32xf32>
    %65 = vector.extract_strided_slice %38 {offsets = [0, 32], sizes = [16, 32], strides = [1, 1]} : vector<16x128xf32> to vector<16x32xf32>
    %66 = vector.extract_strided_slice %39 {offsets = [0, 32], sizes = [16, 32], strides = [1, 1]} : vector<16x128xf32> to vector<16x32xf32>
    %67 = tpu.transpose %65, [1, 0] : vector<16x32xf32> -> vector<32x16xf32>
    %cst_30 = arith.constant dense<0.000000e+00> : vector<16x16xf32>
    %68 = tpu.matmul %64, %67, %cst_30 {dimension_numbers = #tpu.dot_dimension_numbers<[1], [0], [0], [1], [0, 0, 1, 1], [], []>} : vector<16x32xf32>, vector<32x16xf32>, vector<16x16xf32> -> vector<16x16xf32>
    %69 = arith.addf %68, %4 : vector<16x16xf32>
    %cst_31 = arith.constant dense<0xFF800000> : vector<16xf32>
    %70 = vector.multi_reduction <maximumf>, %69, %cst_31 [1] : vector<16x16xf32> to vector<16xf32>
    %71 = vector.shape_cast %70 : vector<16xf32> to vector<16x1xf32>
    %72 = vector.broadcast %71 : vector<16x1xf32> to vector<16x16xf32>
    %73 = arith.subf %69, %72 : vector<16x16xf32>
    %74 = math.exp %73 : vector<16x16xf32>
    %cst_32 = arith.constant dense<0.000000e+00> : vector<16xf32>
    %75 = vector.multi_reduction <add>, %74, %cst_32 [1] : vector<16x16xf32> to vector<16xf32>
    %76 = vector.shape_cast %75 : vector<16xf32> to vector<16x1xf32>
    %77 = tpu.reciprocal %76 {approx = true} : vector<16x1xf32> -> vector<16x1xf32>
    %78 = vector.broadcast %77 : vector<16x1xf32> to vector<16x16xf32>
    %79 = arith.mulf %74, %78 : vector<16x16xf32>
    %cst_33 = arith.constant dense<0.000000e+00> : vector<16x32xf32>
    %80 = tpu.matmul %79, %66, %cst_33 {dimension_numbers = #tpu.dot_dimension_numbers<[1], [0], [0], [1], [0, 0, 1, 1], [], []>} : vector<16x16xf32>, vector<16x32xf32>, vector<16x32xf32> -> vector<16x32xf32>
    %81 = vector.extract_strided_slice %41 {offsets = [32, 0], sizes = [32, 128], strides = [1, 1]} : vector<128x128xbf16> to vector<32x128xbf16>
    %82 = arith.truncf %80 : vector<16x32xf32> to vector<16x32xbf16>
    %cst_34 = arith.constant dense<0.000000e+00> : vector<16x128xf32>
    %83 = tpu.matmul %82, %81, %cst_34 {dimension_numbers = #tpu.dot_dimension_numbers<[1], [0], [0], [1], [0, 0, 1, 1], [], []>} : vector<16x32xbf16>, vector<32x128xbf16>, vector<16x128xf32> -> vector<16x128xf32>
    %84 = arith.addf %63, %83 : vector<16x128xf32>
    %85 = vector.extract_strided_slice %37 {offsets = [0, 64], sizes = [16, 32], strides = [1, 1]} : vector<16x128xf32> to vector<16x32xf32>
    %86 = vector.extract_strided_slice %38 {offsets = [0, 64], sizes = [16, 32], strides = [1, 1]} : vector<16x128xf32> to vector<16x32xf32>
    %87 = vector.extract_strided_slice %39 {offsets = [0, 64], sizes = [16, 32], strides = [1, 1]} : vector<16x128xf32> to vector<16x32xf32>
    %88 = tpu.transpose %86, [1, 0] : vector<16x32xf32> -> vector<32x16xf32>
    %cst_35 = arith.constant dense<0.000000e+00> : vector<16x16xf32>
    %89 = tpu.matmul %85, %88, %cst_35 {dimension_numbers = #tpu.dot_dimension_numbers<[1], [0], [0], [1], [0, 0, 1, 1], [], []>} : vector<16x32xf32>, vector<32x16xf32>, vector<16x16xf32> -> vector<16x16xf32>
    %90 = arith.addf %89, %4 : vector<16x16xf32>
    %cst_36 = arith.constant dense<0xFF800000> : vector<16xf32>
    %91 = vector.multi_reduction <maximumf>, %90, %cst_36 [1] : vector<16x16xf32> to vector<16xf32>
    %92 = vector.shape_cast %91 : vector<16xf32> to vector<16x1xf32>
    %93 = vector.broadcast %92 : vector<16x1xf32> to vector<16x16xf32>
    %94 = arith.subf %90, %93 : vector<16x16xf32>
    %95 = math.exp %94 : vector<16x16xf32>
    %cst_37 = arith.constant dense<0.000000e+00> : vector<16xf32>
    %96 = vector.multi_reduction <add>, %95, %cst_37 [1] : vector<16x16xf32> to vector<16xf32>
    %97 = vector.shape_cast %96 : vector<16xf32> to vector<16x1xf32>
    %98 = tpu.reciprocal %97 {approx = true} : vector<16x1xf32> -> vector<16x1xf32>
    %99 = vector.broadcast %98 : vector<16x1xf32> to vector<16x16xf32>
    %100 = arith.mulf %95, %99 : vector<16x16xf32>
    %cst_38 = arith.constant dense<0.000000e+00> : vector<16x32xf32>
    %101 = tpu.matmul %100, %87, %cst_38 {dimension_numbers = #tpu.dot_dimension_numbers<[1], [0], [0], [1], [0, 0, 1, 1], [], []>} : vector<16x16xf32>, vector<16x32xf32>, vector<16x32xf32> -> vector<16x32xf32>
    %102 = vector.extract_strided_slice %41 {offsets = [64, 0], sizes = [32, 128], strides = [1, 1]} : vector<128x128xbf16> to vector<32x128xbf16>
    %103 = arith.truncf %101 : vector<16x32xf32> to vector<16x32xbf16>
    %cst_39 = arith.constant dense<0.000000e+00> : vector<16x128xf32>
    %104 = tpu.matmul %103, %102, %cst_39 {dimension_numbers = #tpu.dot_dimension_numbers<[1], [0], [0], [1], [0, 0, 1, 1], [], []>} : vector<16x32xbf16>, vector<32x128xbf16>, vector<16x128xf32> -> vector<16x128xf32>
    %105 = arith.addf %84, %104 : vector<16x128xf32>
    %106 = vector.extract_strided_slice %37 {offsets = [0, 96], sizes = [16, 32], strides = [1, 1]} : vector<16x128xf32> to vector<16x32xf32>
    %107 = vector.extract_strided_slice %38 {offsets = [0, 96], sizes = [16, 32], strides = [1, 1]} : vector<16x128xf32> to vector<16x32xf32>
    %108 = vector.extract_strided_slice %39 {offsets = [0, 96], sizes = [16, 32], strides = [1, 1]} : vector<16x128xf32> to vector<16x32xf32>
    %109 = tpu.transpose %107, [1, 0] : vector<16x32xf32> -> vector<32x16xf32>
    %cst_40 = arith.constant dense<0.000000e+00> : vector<16x16xf32>
    %110 = tpu.matmul %106, %109, %cst_40 {dimension_numbers = #tpu.dot_dimension_numbers<[1], [0], [0], [1], [0, 0, 1, 1], [], []>} : vector<16x32xf32>, vector<32x16xf32>, vector<16x16xf32> -> vector<16x16xf32>
    %111 = arith.addf %110, %4 : vector<16x16xf32>
    %cst_41 = arith.constant dense<0xFF800000> : vector<16xf32>
    %112 = vector.multi_reduction <maximumf>, %111, %cst_41 [1] : vector<16x16xf32> to vector<16xf32>
    %113 = vector.shape_cast %112 : vector<16xf32> to vector<16x1xf32>
    %114 = vector.broadcast %113 : vector<16x1xf32> to vector<16x16xf32>
    %115 = arith.subf %111, %114 : vector<16x16xf32>
    %116 = math.exp %115 : vector<16x16xf32>
    %cst_42 = arith.constant dense<0.000000e+00> : vector<16xf32>
    %117 = vector.multi_reduction <add>, %116, %cst_42 [1] : vector<16x16xf32> to vector<16xf32>
    %118 = vector.shape_cast %117 : vector<16xf32> to vector<16x1xf32>
    %119 = tpu.reciprocal %118 {approx = true} : vector<16x1xf32> -> vector<16x1xf32>
    %120 = vector.broadcast %119 : vector<16x1xf32> to vector<16x16xf32>
    %121 = arith.mulf %116, %120 : vector<16x16xf32>
    %cst_43 = arith.constant dense<0.000000e+00> : vector<16x32xf32>
    %122 = tpu.matmul %121, %108, %cst_43 {dimension_numbers = #tpu.dot_dimension_numbers<[1], [0], [0], [1], [0, 0, 1, 1], [], []>} : vector<16x16xf32>, vector<16x32xf32>, vector<16x32xf32> -> vector<16x32xf32>
    %123 = vector.extract_strided_slice %41 {offsets = [96, 0], sizes = [32, 128], strides = [1, 1]} : vector<128x128xbf16> to vector<32x128xbf16>
    %124 = arith.truncf %122 : vector<16x32xf32> to vector<16x32xbf16>
    %cst_44 = arith.constant dense<0.000000e+00> : vector<16x128xf32>
    %125 = tpu.matmul %124, %123, %cst_44 {dimension_numbers = #tpu.dot_dimension_numbers<[1], [0], [0], [1], [0, 0, 1, 1], [], []>} : vector<16x32xbf16>, vector<32x128xbf16>, vector<16x128xf32> -> vector<16x128xf32>
    %126 = arith.addf %105, %125 : vector<16x128xf32>
    %127 = arith.addf %3, %126 : vector<16x128xf32>
    %c0_45 = arith.constant 0 : index
    %c0_46 = arith.constant 0 : index
    %c0_47 = arith.constant 0 : index
    %128 = vector.load %arg10[%c0_45, %c0_46, %c0_47] : memref<1x1x128xf32, #tpu.memory_space<vmem>>, vector<1x1x128xf32>
    %129 = vector.shape_cast %128 : vector<1x1x128xf32> to vector<1x128xf32>
    %130 = vector.broadcast %129 : vector<1x128xf32> to vector<16x128xf32>
    %131 = arith.addf %127, %130 : vector<16x128xf32>
    %c0_48 = arith.constant 0 : index
    %c0_49 = arith.constant 0 : index
    %c0_50 = arith.constant 0 : index
    %132 = vector.load %arg11[%c0_48, %c0_49, %c0_50] : memref<1x1x128xf32, #tpu.memory_space<vmem>>, vector<1x1x128xf32>
    %133 = vector.shape_cast %132 : vector<1x1x128xf32> to vector<1x128xf32>
    %c0_51 = arith.constant 0 : index
    %c0_52 = arith.constant 0 : index
    %c0_53 = arith.constant 0 : index
    %134 = vector.load %arg12[%c0_51, %c0_52, %c0_53] : memref<1x1x128xf32, #tpu.memory_space<vmem>>, vector<1x1x128xf32>
    %135 = vector.shape_cast %134 : vector<1x1x128xf32> to vector<1x128xf32>
    %cst_54 = arith.constant dense<0.000000e+00> : vector<16xf32>
    %136 = vector.multi_reduction <add>, %131, %cst_54 [1] : vector<16x128xf32> to vector<16xf32>
    %137 = vector.shape_cast %136 : vector<16xf32> to vector<16x1xf32>
    %cst_55 = arith.constant 1.280000e+02 : f32
    %138 = vector.broadcast %cst_55 : f32 to vector<16x1xf32>
    %139 = arith.divf %137, %138 : vector<16x1xf32>
    %140 = vector.broadcast %139 : vector<16x1xf32> to vector<16x128xf32>
    %141 = arith.subf %131, %140 : vector<16x128xf32>
    %142 = arith.mulf %141, %141 : vector<16x128xf32>
    %cst_56 = arith.constant dense<0.000000e+00> : vector<16xf32>
    %143 = vector.multi_reduction <add>, %142, %cst_56 [1] : vector<16x128xf32> to vector<16xf32>
    %144 = vector.shape_cast %143 : vector<16xf32> to vector<16x1xf32>
    %cst_57 = arith.constant 1.280000e+02 : f32
    %145 = vector.broadcast %cst_57 : f32 to vector<16x1xf32>
    %146 = arith.divf %144, %145 : vector<16x1xf32>
    %cst_58 = arith.constant 9.99999996E-13 : f32
    %147 = vector.broadcast %cst_58 : f32 to vector<16x1xf32>
    %148 = arith.addf %146, %147 : vector<16x1xf32>
    %149 = math.rsqrt %148 : vector<16x1xf32>
    %150 = vector.broadcast %149 : vector<16x1xf32> to vector<16x128xf32>
    %151 = arith.mulf %141, %150 : vector<16x128xf32>
    %152 = vector.broadcast %133 : vector<1x128xf32> to vector<16x128xf32>
    %153 = arith.mulf %151, %152 : vector<16x128xf32>
    %154 = vector.broadcast %135 : vector<1x128xf32> to vector<16x128xf32>
    %155 = arith.addf %153, %154 : vector<16x128xf32>
    %c0_59 = arith.constant 0 : index
    %c0_60 = arith.constant 0 : index
    %c0_61 = arith.constant 0 : index
    %156 = vector.load %arg13[%c0_59, %c0_60, %c0_61] : memref<1x128x512xbf16, #tpu.memory_space<vmem>>, vector<1x128x512xbf16>
    %157 = vector.shape_cast %156 : vector<1x128x512xbf16> to vector<128x512xbf16>
    %158 = arith.truncf %155 : vector<16x128xf32> to vector<16x128xbf16>
    %cst_62 = arith.constant dense<0.000000e+00> : vector<16x512xf32>
    %159 = tpu.matmul %158, %157, %cst_62 {dimension_numbers = #tpu.dot_dimension_numbers<[1], [0], [0], [1], [0, 0, 1, 1], [], []>} : vector<16x128xbf16>, vector<128x512xbf16>, vector<16x512xf32> -> vector<16x512xf32>
    %c0_63 = arith.constant 0 : index
    %c0_64 = arith.constant 0 : index
    %c0_65 = arith.constant 0 : index
    %160 = vector.load %arg14[%c0_63, %c0_64, %c0_65] : memref<1x1x512xf32, #tpu.memory_space<vmem>>, vector<1x1x512xf32>
    %161 = vector.shape_cast %160 : vector<1x1x512xf32> to vector<1x512xf32>
    %162 = vector.broadcast %161 : vector<1x512xf32> to vector<16x512xf32>
    %163 = arith.addf %159, %162 : vector<16x512xf32>
    %cst_66 = arith.constant 5.000000e-01 : f32
    %164 = vector.broadcast %cst_66 : f32 to vector<16x512xf32>
    %165 = arith.mulf %164, %163 : vector<16x512xf32>
    %cst_67 = arith.constant 4.471500e-02 : f32
    %166 = vector.broadcast %cst_67 : f32 to vector<16x512xf32>
    %167 = arith.mulf %166, %163 : vector<16x512xf32>
    %168 = arith.mulf %167, %163 : vector<16x512xf32>
    %169 = arith.mulf %168, %163 : vector<16x512xf32>
    %170 = arith.addf %163, %169 : vector<16x512xf32>
    %cst_68 = arith.constant 0.797884583 : f32
    %171 = vector.broadcast %cst_68 : f32 to vector<16x512xf32>
    %172 = arith.mulf %171, %170 : vector<16x512xf32>
    %173 = math.tanh %172 : vector<16x512xf32>
    %cst_69 = arith.constant 1.000000e+00 : f32
    %174 = vector.broadcast %cst_69 : f32 to vector<16x512xf32>
    %175 = arith.addf %174, %173 : vector<16x512xf32>
    %176 = arith.mulf %165, %175 : vector<16x512xf32>
    %c0_70 = arith.constant 0 : index
    %c0_71 = arith.constant 0 : index
    %c0_72 = arith.constant 0 : index
    %177 = vector.load %arg15[%c0_70, %c0_71, %c0_72] : memref<1x512x128xbf16, #tpu.memory_space<vmem>>, vector<1x512x128xbf16>
    %178 = vector.shape_cast %177 : vector<1x512x128xbf16> to vector<512x128xbf16>
    %179 = arith.truncf %176 : vector<16x512xf32> to vector<16x512xbf16>
    %cst_73 = arith.constant dense<0.000000e+00> : vector<16x128xf32>
    %180 = tpu.matmul %179, %178, %cst_73 {dimension_numbers = #tpu.dot_dimension_numbers<[1], [0], [0], [1], [0, 0, 1, 1], [], []>} : vector<16x512xbf16>, vector<512x128xbf16>, vector<16x128xf32> -> vector<16x128xf32>
    %181 = arith.addf %131, %180 : vector<16x128xf32>
    %c0_74 = arith.constant 0 : index
    %c0_75 = arith.constant 0 : index
    %c0_76 = arith.constant 0 : index
    %182 = vector.load %arg16[%c0_74, %c0_75, %c0_76] : memref<1x1x128xf32, #tpu.memory_space<vmem>>, vector<1x1x128xf32>
    %183 = vector.shape_cast %182 : vector<1x1x128xf32> to vector<1x128xf32>
    %184 = vector.broadcast %183 : vector<1x128xf32> to vector<16x128xf32>
    %185 = arith.addf %181, %184 : vector<16x128xf32>
    %c0_77 = arith.constant 0 : index
    %c0_78 = arith.constant 0 : index
    %186 = vector.load %arg20[%c0_77, %c0_78] : memref<16x128xf32, #tpu.memory_space<vmem>>, vector<16x128xf32>
    tpu.vector_store %arg20[%c0_77, %c0_78], %185 {strides = array<i32>} : memref<16x128xf32, #tpu.memory_space<vmem>>, vector<16x128xf32>,
    %c1_i32 = arith.constant 1 : i32
    %187 = arith.cmpi eq, %arg0, %c1_i32 : i32
    %188 = arith.extui %187 : i1 to i32
    %c0_i32_79 = arith.constant 0 : i32
    %189 = arith.cmpi ne, %188, %c0_i32_79 : i32
    scf.if %189 {
      %190 = vector.extract_strided_slice %185 {offsets = [0, 0], sizes = [1, 128], strides = [1, 1]} : vector<16x128xf32> to vector<1x128xf32>
      %191 = vector.extract_strided_slice %185 {offsets = [8, 0], sizes = [1, 128], strides = [1, 1]} : vector<16x128xf32> to vector<1x128xf32>
      %192 = tpu.concatenate %190, %191 in 0 : vector<1x128xf32>, vector<1x128xf32> -> vector<2x128xf32>
      %c0_80 = arith.constant 0 : index
      %c0_81 = arith.constant 0 : index
      %193 = vector.load %arg17[%c0_80, %c0_81] : memref<1x128xf32, #tpu.memory_space<vmem>>, vector<1x128xf32>
      %c0_82 = arith.constant 0 : index
      %c0_83 = arith.constant 0 : index
      %194 = vector.load %arg18[%c0_82, %c0_83] : memref<1x128xf32, #tpu.memory_space<vmem>>, vector<1x128xf32>
      %cst_84 = arith.constant dense<0.000000e+00> : vector<2xf32>
      %195 = vector.multi_reduction <add>, %192, %cst_84 [1] : vector<2x128xf32> to vector<2xf32>
      %196 = vector.shape_cast %195 : vector<2xf32> to vector<2x1xf32>
      %cst_85 = arith.constant 1.280000e+02 : f32
      %197 = vector.broadcast %cst_85 : f32 to vector<2x1xf32>
      %198 = arith.divf %196, %197 : vector<2x1xf32>
      %199 = vector.broadcast %198 : vector<2x1xf32> to vector<2x128xf32>
      %200 = arith.subf %192, %199 : vector<2x128xf32>
      %201 = arith.mulf %200, %200 : vector<2x128xf32>
      %cst_86 = arith.constant dense<0.000000e+00> : vector<2xf32>
      %202 = vector.multi_reduction <add>, %201, %cst_86 [1] : vector<2x128xf32> to vector<2xf32>
      %203 = vector.shape_cast %202 : vector<2xf32> to vector<2x1xf32>
      %cst_87 = arith.constant 1.280000e+02 : f32
      %204 = vector.broadcast %cst_87 : f32 to vector<2x1xf32>
      %205 = arith.divf %203, %204 : vector<2x1xf32>
      %cst_88 = arith.constant 9.99999996E-13 : f32
      %206 = vector.broadcast %cst_88 : f32 to vector<2x1xf32>
      %207 = arith.addf %205, %206 : vector<2x1xf32>
      %208 = math.rsqrt %207 : vector<2x1xf32>
      %209 = vector.broadcast %208 : vector<2x1xf32> to vector<2x128xf32>
      %210 = arith.mulf %200, %209 : vector<2x128xf32>
      %211 = vector.broadcast %193 : vector<1x128xf32> to vector<2x128xf32>
      %212 = arith.mulf %210, %211 : vector<2x128xf32>
      %213 = vector.broadcast %194 : vector<1x128xf32> to vector<2x128xf32>
      %214 = arith.addf %212, %213 : vector<2x128xf32>
      %c0_89 = arith.constant 0 : index
      %c0_90 = arith.constant 0 : index
      %215 = vector.load %arg19[%c0_89, %c0_90] : memref<2x128xf32, #tpu.memory_space<vmem>>, vector<2x128xf32>
      tpu.vector_store %arg19[%c0_89, %c0_90], %214 {strides = array<i32>} : memref<2x128xf32, #tpu.memory_space<vmem>>, vector<2x128xf32>,
    } else {
    }
    return
  }
  func.func @transform_0(%arg0: i32) -> (i32, i32) {
    %c0_i32 = arith.constant 0 : i32
    %c0_i32_0 = arith.constant 0 : i32
    %c0_i32_1 = arith.constant 0 : i32
    return %c0_i32, %c0_i32_0 : i32, i32
  }
  func.func @transform_1(%arg0: i32) -> (i32, i32) {
    %c0_i32 = arith.constant 0 : i32
    %c0_i32_0 = arith.constant 0 : i32
    %c0_i32_1 = arith.constant 0 : i32
    return %c0_i32, %c0_i32_0 : i32, i32
  }
  func.func @transform_2(%arg0: i32) -> (i32, i32) {
    %c0_i32 = arith.constant 0 : i32
    %c0_i32_0 = arith.constant 0 : i32
    %c0_i32_1 = arith.constant 0 : i32
    return %c0_i32, %c0_i32_0 : i32, i32
  }
  func.func @transform_3(%arg0: i32) -> (i32, i32) {
    %c0_i32 = arith.constant 0 : i32
    %c0_i32_0 = arith.constant 0 : i32
    %c0_i32_1 = arith.constant 0 : i32
    return %c0_i32, %c0_i32_0 : i32, i32
  }
  func.func @transform_4(%arg0: i32) -> (i32, i32, i32) {
    %c0_i32 = arith.constant 0 : i32
    %c0_i32_0 = arith.constant 0 : i32
    %c0_i32_1 = arith.constant 0 : i32
    return %arg0, %c0_i32, %c0_i32_0 : i32, i32, i32
  }
  func.func @transform_5(%arg0: i32) -> (i32, i32, i32) {
    %c0_i32 = arith.constant 0 : i32
    %c0_i32_0 = arith.constant 0 : i32
    %c0_i32_1 = arith.constant 0 : i32
    return %arg0, %c0_i32, %c0_i32_0 : i32, i32, i32
  }
  func.func @transform_6(%arg0: i32) -> (i32, i32, i32) {
    %c0_i32 = arith.constant 0 : i32
    %c0_i32_0 = arith.constant 0 : i32
    %c0_i32_1 = arith.constant 0 : i32
    return %arg0, %c0_i32, %c0_i32_0 : i32, i32, i32
  }
  func.func @transform_7(%arg0: i32) -> (i32, i32, i32) {
    %c0_i32 = arith.constant 0 : i32
    %c0_i32_0 = arith.constant 0 : i32
    %c0_i32_1 = arith.constant 0 : i32
    return %arg0, %c0_i32, %c0_i32_0 : i32, i32, i32
  }
  func.func @transform_8(%arg0: i32) -> (i32, i32, i32) {
    %c0_i32 = arith.constant 0 : i32
    %c0_i32_0 = arith.constant 0 : i32
    %c0_i32_1 = arith.constant 0 : i32
    return %arg0, %c0_i32, %c0_i32_0 : i32, i32, i32
  }
  func.func @transform_9(%arg0: i32) -> (i32, i32, i32) {
    %c0_i32 = arith.constant 0 : i32
    %c0_i32_0 = arith.constant 0 : i32
    %c0_i32_1 = arith.constant 0 : i32
    return %arg0, %c0_i32, %c0_i32_0 : i32, i32, i32
  }
  func.func @transform_10(%arg0: i32) -> (i32, i32, i32) {
    %c0_i32 = arith.constant 0 : i32
    %c0_i32_0 = arith.constant 0 : i32
    %c0_i32_1 = arith.constant 0 : i32
    return %arg0, %c0_i32, %c0_i32_0 : i32, i32, i32
  }
  func.func @transform_11(%arg0: i32) -> (i32, i32, i32) {
    %c0_i32 = arith.constant 0 : i32
    %c0_i32_0 = arith.constant 0 : i32
    %c0_i32_1 = arith.constant 0 : i32
    return %arg0, %c0_i32, %c0_i32_0 : i32, i32, i32
  }
  func.func @transform_12(%arg0: i32) -> (i32, i32, i32) {
    %c0_i32 = arith.constant 0 : i32
    %c0_i32_0 = arith.constant 0 : i32
    %c0_i32_1 = arith.constant 0 : i32
    return %arg0, %c0_i32, %c0_i32_0 : i32, i32, i32
  }
  func.func @transform_13(%arg0: i32) -> (i32, i32, i32) {
    %c0_i32 = arith.constant 0 : i32
    %c0_i32_0 = arith.constant 0 : i32
    %c0_i32_1 = arith.constant 0 : i32
    return %arg0, %c0_i32, %c0_i32_0 : i32, i32, i32
  }
  func.func @transform_14(%arg0: i32) -> (i32, i32, i32) {
    %c0_i32 = arith.constant 0 : i32
    %c0_i32_0 = arith.constant 0 : i32
    %c0_i32_1 = arith.constant 0 : i32
    return %arg0, %c0_i32, %c0_i32_0 : i32, i32, i32
  }
  func.func @transform_15(%arg0: i32) -> (i32, i32, i32) {
    %c0_i32 = arith.constant 0 : i32
    %c0_i32_0 = arith.constant 0 : i32
    %c0_i32_1 = arith.constant 0 : i32
    return %arg0, %c0_i32, %c0_i32_0 : i32, i32, i32
  }
  func.func @transform_16(%arg0: i32) -> (i32, i32) {
    %c0_i32 = arith.constant 0 : i32
    %c0_i32_0 = arith.constant 0 : i32
    %c0_i32_1 = arith.constant 0 : i32
    return %c0_i32, %c0_i32_0 : i32, i32
  }
  func.func @transform_17(%arg0: i32) -> (i32, i32) {
    %c0_i32 = arith.constant 0 : i32
    %c0_i32_0 = arith.constant 0 : i32
    %c0_i32_1 = arith.constant 0 : i32
    return %c0_i32, %c0_i32_0 : i32, i32
  }
  func.func @transform_18(%arg0: i32) -> (i32, i32) {
    %c0_i32 = arith.constant 0 : i32
    %c0_i32_0 = arith.constant 0 : i32
    %c0_i32_1 = arith.constant 0 : i32
    return %c0_i32, %c0_i32_0 : i32, i32
  }
}

</mosaic_0001>

<llo_original>
// kernel: mul.13
$region0: #{mul.13}
  %s0 = inlined_call_operand.vmem [shape: f32[3,64], index: 0, kind: input, shape index: {}]
  %s1 = inlined_call_operand.vmem [shape: f32[192], index: 1, kind: output, shape index: {}]
  $region1: #{mul.13} parent=0
    #allocation0 [shape = 'u8[4096]{0}', space=vmem, size = 0x1000, scoped, tag = 'scoped mem for output reshape']
    #allocation1 [shape = 'u8[4096]{0}', space=vmem, size = 0x1000, scoped, tag = 'scoped mem for input reshape']
    %s3 = sshllo.u32 0, 4
    %v4 = vld [vmem:[%s0] sm:%s3]
    %5 = vst [vmem:[#allocation1] sm:%s3] %v4
    %s6 = smov 3
    %v7 = vld [vmem:[#allocation1] ss:$2 sm:%s6]
    %vm8 = vcmask 523264
    %9 = vst.msk [vmem:[#allocation0] sm:$0x3] %vm8, %v7
    %s10 = scalar_lea.vmem [#allocation1], 1
    %v11 = vld [vmem:[%s10] sm:$0x1]
    %12 = vrot.lane.b32.xlu0 %v11, 64
    %v13 = vpop.permute.xlu0 %12
    %vm14 = vcmask 1048064
    %15 = vst.msk [vmem:[#allocation0] sm:$0x1] %vm14, %v13
    %s17 = sshllo.u32 0, 2
    %v19 = vld [vmem:[#allocation0] sm:%s17]
    %s20 = sshllo.u32 0, 2
    %21 = vst [vmem:[%s1] sm:%s20] %v19

// kernel: phikon_forward.1
$region0: #{phikon_forward.1}
  #allocation0 [shape = 'u32[]', space=smem, size = 0x4, offset = 0x4, fixed_abs, tag = 'smem constant byte address 0x4 - core index']
  #allocation1 [shape = 'u32[144,128]{1,0:T(1,128)}', space=vmem, size = 0x12000, scoped, tag = 'internal scratch']
  #allocation2 [shape = 'f32[16,128]{1,0:T(8,128)}', space=vmem, size = 0x2000, scoped, tag = 'scratch operand']
  %s0 = inlined_call_operand.vmem [shape: f32[16,192], index: 0, kind: input, shape index: {}]
  %s1 = inlined_call_operand.vmem [shape: bf16[192,128], index: 1, kind: input, shape index: {}]
  %s2 = inlined_call_operand.vmem [shape: f32[16,128], index: 2, kind: input, shape index: {}]
  %s3 = inlined_call_operand.vmem [shape: f32[16,16], index: 3, kind: input, shape index: {}]
  %s4 = inlined_call_operand.vmem [shape: f32[2,1,128], index: 4, kind: input, shape index: {}]
  %s5 = inlined_call_operand.vmem [shape: f32[2,1,128], index: 5, kind: input, shape index: {}]
  %s6 = inlined_call_operand.vmem [shape: bf16[2,128,384], index: 6, kind: input, shape index: {}]
  %s7 = inlined_call_operand.vmem [shape: f32[2,1,384], index: 7, kind: input, shape index: {}]
  %s8 = inlined_call_operand.vmem [shape: bf16[2,128,128], index: 8, kind: input, shape index: {}]
  %s9 = inlined_call_operand.vmem [shape: f32[2,1,128], index: 9, kind: input, shape index: {}]
  %s10 = inlined_call_operand.vmem [shape: f32[2,1,128], index: 10, kind: input, shape index: {}]
  %s11 = inlined_call_operand.vmem [shape: f32[2,1,128], index: 11, kind: input, shape index: {}]
  %s12 = inlined_call_operand.vmem [shape: bf16[2,128,512], index: 12, kind: input, shape index: {}]
  %s13 = inlined_call_operand.vmem [shape: f32[2,1,512], index: 13, kind: input, shape index: {}]
  %s14 = inlined_call_operand.vmem [shape: bf16[2,512,128], index: 14, kind: input, shape index: {}]
  %s15 = inlined_call_operand.vmem [shape: f32[2,1,128], index: 15, kind: input, shape index: {}]
  %s16 = inlined_call_operand.vmem [shape: f32[1,128], index: 16, kind: input, shape index: {}]
  %s17 = inlined_call_operand.vmem [shape: f32[1,128], index: 17, kind: input, shape index: {}]
  %s18 = inlined_call_operand.hbm [shape: f32[2,128], index: 18, kind: output, shape index: {}]
  %s19 = sld [smem:[#allocation0]]
  $region113: #{phikon_forward.1} parent=0
    _
  %s21 = ssub.s32 1, %s19
  %s22 = scalar_select 0, %s21, %s19
  $region1: #{phikon_forward.1} parent=0
    #allocation3 [shape = 'u8[1024]{0}', space=vmem, size = 0x400, scoped, tag = 'output window, operand 0, single buffered']
    #allocation4 [shape = 's32[2]{0}', space=sflag, size = 0x8, scoped, tag = 'scoped memory for phikon_forward.1']
    %23 = vsyncpa [#allocation4], 0
    loop: start=0, step=1, limit=4
    $region2: #{phikon_forward.1} parent=1 // loop_pre_header
      _
    $region3: #{phikon_forward.1} parent=1 // loop_header
      %s25 = sphi 0, %s29
      %p26 = scmp.ge.s32.totalorder %s25, 4
      %s33 = sphi 0, %s33
      %s35 = sphi 0, %s33
      %s36 = sphi 0, %s35
      %s50 = sphi 0, %s36
      %s54 = sphi 0, %s54
      %s56 = sphi 0, %s54
      %s57 = sphi 0, %s56
      %s71 = sphi 0, %s57
      %s75 = sphi 0, %s75
      %s77 = sphi 0, %s75
      %s78 = sphi 0, %s77
      %s92 = sphi 0, %s78
      %s96 = sphi 0, %s96
      %s98 = sphi 0, %s96
      %s99 = sphi 0, %s98
      %s113 = sphi 0, %s99
      %s119 = sphi 0, %s121
      %s122 = sphi 0, %s119
      %s123 = sphi 0, %s122
      %s139 = sphi 0, %s123
      %s145 = sphi 0, %s147
      %s148 = sphi 0, %s145
      %s149 = sphi 0, %s148
      %s165 = sphi 0, %s149
      %s171 = sphi 0, %s173
      %s174 = sphi 0, %s171
      %s175 = sphi 0, %s174
      %s191 = sphi 0, %s175
      %s197 = sphi 0, %s199
      %s200 = sphi 0, %s197
      %s201 = sphi 0, %s200
      %s217 = sphi 0, %s201
      %s223 = sphi 0, %s225
      %s226 = sphi 0, %s223
      %s227 = sphi 0, %s226
      %s243 = sphi 0, %s227
      %s249 = sphi 0, %s251
      %s252 = sphi 0, %s249
      %s253 = sphi 0, %s252
      %s269 = sphi 0, %s253
      %s275 = sphi 0, %s277
      %s278 = sphi 0, %s275
      %s279 = sphi 0, %s278
      %s295 = sphi 0, %s279
      %s301 = sphi 0, %s303
      %s304 = sphi 0, %s301
      %s305 = sphi 0, %s304
      %s321 = sphi 0, %s305
      %s327 = sphi 0, %s329
      %s330 = sphi 0, %s327
      %s331 = sphi 0, %s330
      %s347 = sphi 0, %s331
      %s353 = sphi 0, %s355
      %s356 = sphi 0, %s353
      %s357 = sphi 0, %s356
      %s373 = sphi 0, %s357
      %s379 = sphi 0, %s381
      %s382 = sphi 0, %s379
      %s383 = sphi 0, %s382
      %s399 = sphi 0, %s383
      %s405 = sphi 0, %s407
      %s408 = sphi 0, %s405
      %s409 = sphi 0, %s408
      %s425 = sphi 0, %s409
      %s429 = sphi 0, %s429
      %s431 = sphi 0, %s429
      %s432 = sphi 0, %s431
      %s446 = sphi 0, %s432
      %s450 = sphi 0, %s450
      %s452 = sphi 0, %s450
      %s453 = sphi 0, %s452
      %s467 = sphi 0, %s453
      %s471 = sphi 0, %s471
      %s473 = sphi 0, %s471
      %s474 = sphi 0, %s473
      %s488 = sphi 0, %s474
    $region4: #{phikon_forward.1} parent=1 // loop_header_branch
      %28 = sbr.rel (%p26) target = $region8
    $region5: #{phikon_forward.1} parent=1 // loop_body
      %s30 = ssub.s32 %s25, 1
      %s31 = ssub.s32 %s25, 2
      %s32 = sadd.s32 %s25, 1
      %s34 = sadd.s32 %s33, 1
      %p37 = scmp.eq.s32.totalorder %s25, 1
      %p38 = scmp.ne.s32.totalorder %s33, %s35
      %p39 = scmp.eq.s32.totalorder %s25, 0
      %p40 = por %p38, %p39
      %p41 = scmp.ne.s32.totalorder %s33, %s35
      %p42 = scmp.eq.s32.totalorder %s30, 1
      %p43 = por %p41, %p42
      %p44 = scmp.ne.s32.totalorder %s35, %s36
      %p45 = scmp.eq.s32.totalorder %s30, 0
      %p46 = por %p44, %p45
      %p47 = scmp.ne.s32.totalorder %s35, %s36
      %p48 = scmp.eq.s32.totalorder %s31, 1
      %p49 = por %p47, %p48
      %p51 = scmp.ne.s32.totalorder %s36, %s50
      %p52 = scmp.eq.s32.totalorder %s31, 0
      %p53 = por %p51, %p52
      %s55 = sadd.s32 %s54, 1
      %p58 = scmp.eq.s32.totalorder %s25, 1
      %p59 = scmp.ne.s32.totalorder %s54, %s56
      %p60 = scmp.eq.s32.totalorder %s25, 0
      %p61 = por %p59, %p60
      %p62 = scmp.ne.s32.totalorder %s54, %s56
      %p63 = scmp.eq.s32.totalorder %s30, 1
      %p64 = por %p62, %p63
      %p65 = scmp.ne.s32.totalorder %s56, %s57
      %p66 = scmp.eq.s32.totalorder %s30, 0
      %p67 = por %p65, %p66
      %p68 = scmp.ne.s32.totalorder %s56, %s57
      %p69 = scmp.eq.s32.totalorder %s31, 1
      %p70 = por %p68, %p69
      %p72 = scmp.ne.s32.totalorder %s57, %s71
      %p73 = scmp.eq.s32.totalorder %s31, 0
      %p74 = por %p72, %p73
      %s76 = sadd.s32 %s75, 1
      %p79 = scmp.eq.s32.totalorder %s25, 1
      %p80 = scmp.ne.s32.totalorder %s75, %s77
      %p81 = scmp.eq.s32.totalorder %s25, 0
      %p82 = por %p80, %p81
      %p83 = scmp.ne.s32.totalorder %s75, %s77
      %p84 = scmp.eq.s32.totalorder %s30, 1
      %p85 = por %p83, %p84
      %p86 = scmp.ne.s32.totalorder %s77, %s78
      %p87 = scmp.eq.s32.totalorder %s30, 0
      %p88 = por %p86, %p87
      %p89 = scmp.ne.s32.totalorder %s77, %s78
      %p90 = scmp.eq.s32.totalorder %s31, 1
      %p91 = por %p89, %p90
      %p93 = scmp.ne.s32.totalorder %s78, %s92
      %p94 = scmp.eq.s32.totalorder %s31, 0
      %p95 = por %p93, %p94
      %s97 = sadd.s32 %s96, 1
      %p100 = scmp.eq.s32.totalorder %s25, 1
      %p101 = scmp.ne.s32.totalorder %s96, %s98
      %p102 = scmp.eq.s32.totalorder %s25, 0
      %p103 = por %p101, %p102
      %p104 = scmp.ne.s32.totalorder %s96, %s98
      %p105 = scmp.eq.s32.totalorder %s30, 1
      %p106 = por %p104, %p105
      %p107 = scmp.ne.s32.totalorder %s98, %s99
      %p108 = scmp.eq.s32.totalorder %s30, 0
      %p109 = por %p107, %p108
      %p110 = scmp.ne.s32.totalorder %s98, %s99
      %p111 = scmp.eq.s32.totalorder %s31, 1
      %p112 = por %p110, %p111
      %p114 = scmp.ne.s32.totalorder %s99, %s113
      %p115 = scmp.eq.s32.totalorder %s31, 0
      %p116 = por %p114, %p115
      %s117 = ssub.s32 %s25, %s32
      %p118 = scmp.eq.s32.totalorder %s117, 0
      %s120 = sadd.s32 %s119, 1
      %s121 = scalar_select %p118, %s119, %s120
      %p124 = pneg %p118
      %p125 = scmp.eq.s32.totalorder %s25, 1
      %p126 = por %p124, %p125
      %p127 = scmp.ne.s32.totalorder %s119, %s122
      %p128 = scmp.eq.s32.totalorder %s25, 0
      %p129 = por %p127, %p128
      %p130 = scmp.ne.s32.totalorder %s119, %s122
      %p131 = scmp.eq.s32.totalorder %s30, 1
      %p132 = por %p130, %p131
      %p133 = scmp.ne.s32.totalorder %s122, %s123
      %p134 = scmp.eq.s32.totalorder %s30, 0
      %p135 = por %p133, %p134
      %p136 = scmp.ne.s32.totalorder %s122, %s123
      %p137 = scmp.eq.s32.totalorder %s31, 1
      %p138 = por %p136, %p137
      %p140 = scmp.ne.s32.totalorder %s123, %s139
      %p141 = scmp.eq.s32.totalorder %s31, 0
      %p142 = por %p140, %p141
      %s143 = ssub.s32 %s25, %s32
      %p144 = scmp.eq.s32.totalorder %s143, 0
      %s146 = sadd.s32 %s145, 1
      %s147 = scalar_select %p144, %s145, %s146
      %p150 = pneg %p144
      %p151 = scmp.eq.s32.totalorder %s25, 1
      %p152 = por %p150, %p151
      %p153 = scmp.ne.s32.totalorder %s145, %s148
      %p154 = scmp.eq.s32.totalorder %s25, 0
      %p155 = por %p153, %p154
      %p156 = scmp.ne.s32.totalorder %s145, %s148
      %p157 = scmp.eq.s32.totalorder %s30, 1
      %p158 = por %p156, %p157
      %p159 = scmp.ne.s32.totalorder %s148, %s149
      %p160 = scmp.eq.s32.totalorder %s30, 0
      %p161 = por %p159, %p160
      %p162 = scmp.ne.s32.totalorder %s148, %s149
      %p163 = scmp.eq.s32.totalorder %s31, 1
      %p164 = por %p162, %p163
      %p166 = scmp.ne.s32.totalorder %s149, %s165
      %p167 = scmp.eq.s32.totalorder %s31, 0
      %p168 = por %p166, %p167
      %s169 = ssub.s32 %s25, %s32
      %p170 = scmp.eq.s32.totalorder %s169, 0
      %s172 = sadd.s32 %s171, 1
      %s173 = scalar_select %p170, %s171, %s172
      %p176 = pneg %p170
      %p177 = scmp.eq.s32.totalorder %s25, 1
      %p178 = por %p176, %p177
      %p179 = scmp.ne.s32.totalorder %s171, %s174
      %p180 = scmp.eq.s32.totalorder %s25, 0
      %p181 = por %p179, %p180
      %p182 = scmp.ne.s32.totalorder %s171, %s174
      %p183 = scmp.eq.s32.totalorder %s30, 1
      %p184 = por %p182, %p183
      %p185 = scmp.ne.s32.totalorder %s174, %s175
      %p186 = scmp.eq.s32.totalorder %s30, 0
      %p187 = por %p185, %p186
      %p188 = scmp.ne.s32.totalorder %s174, %s175
      %p189 = scmp.eq.s32.totalorder %s31, 1
      %p190 = por %p188, %p189
      %p192 = scmp.ne.s32.totalorder %s175, %s191
      %p193 = scmp.eq.s32.totalorder %s31, 0
      %p194 = por %p192, %p193
      %s195 = ssub.s32 %s25, %s32
      %p196 = scmp.eq.s32.totalorder %s195, 0
      %s198 = sadd.s32 %s197, 1
      %s199 = scalar_select %p196, %s197, %s198
      %p202 = pneg %p196
      %p203 = scmp.eq.s32.totalorder %s25, 1
      %p204 = por %p202, %p203
      %p205 = scmp.ne.s32.totalorder %s197, %s200
      %p206 = scmp.eq.s32.totalorder %s25, 0
      %p207 = por %p205, %p206
      %p208 = scmp.ne.s32.totalorder %s197, %s200
      %p209 = scmp.eq.s32.totalorder %s30, 1
      %p210 = por %p208, %p209
      %p211 = scmp.ne.s32.totalorder %s200, %s201
      %p212 = scmp.eq.s32.totalorder %s30, 0
      %p213 = por %p211, %p212
      %p214 = scmp.ne.s32.totalorder %s200, %s201
      %p215 = scmp.eq.s32.totalorder %s31, 1
      %p216 = por %p214, %p215
      %p218 = scmp.ne.s32.totalorder %s201, %s217
      %p219 = scmp.eq.s32.totalorder %s31, 0
      %p220 = por %p218, %p219
      %s221 = ssub.s32 %s25, %s32
      %p222 = scmp.eq.s32.totalorder %s221, 0
      %s224 = sadd.s32 %s223, 1
      %s225 = scalar_select %p222, %s223, %s224
      %p228 = pneg %p222
      %p229 = scmp.eq.s32.totalorder %s25, 1
      %p230 = por %p228, %p229
      %p231 = scmp.ne.s32.totalorder %s223, %s226
      %p232 = scmp.eq.s32.totalorder %s25, 0
      %p233 = por %p231, %p232
      %p234 = scmp.ne.s32.totalorder %s223, %s226
      %p235 = scmp.eq.s32.totalorder %s30, 1
      %p236 = por %p234, %p235
      %p237 = scmp.ne.s32.totalorder %s226, %s227
      %p238 = scmp.eq.s32.totalorder %s30, 0
      %p239 = por %p237, %p238
      %p240 = scmp.ne.s32.totalorder %s226, %s227
      %p241 = scmp.eq.s32.totalorder %s31, 1
      %p242 = por %p240, %p241
      %p244 = scmp.ne.s32.totalorder %s227, %s243
      %p245 = scmp.eq.s32.totalorder %s31, 0
      %p246 = por %p244, %p245
      %s247 = ssub.s32 %s25, %s32
      %p248 = scmp.eq.s32.totalorder %s247, 0
      %s250 = sadd.s32 %s249, 1
      %s251 = scalar_select %p248, %s249, %s250
      %p254 = pneg %p248
      %p255 = scmp.eq.s32.totalorder %s25, 1
      %p256 = por %p254, %p255
      %p257 = scmp.ne.s32.totalorder %s249, %s252
      %p258 = scmp.eq.s32.totalorder %s25, 0
      %p259 = por %p257, %p258
      %p260 = scmp.ne.s32.totalorder %s249, %s252
      %p261 = scmp.eq.s32.totalorder %s30, 1
      %p262 = por %p260, %p261
      %p263 = scmp.ne.s32.totalorder %s252, %s253
      %p264 = scmp.eq.s32.totalorder %s30, 0
      %p265 = por %p263, %p264
      %p266 = scmp.ne.s32.totalorder %s252, %s253
      %p267 = scmp.eq.s32.totalorder %s31, 1
      %p268 = por %p266, %p267
      %p270 = scmp.ne.s32.totalorder %s253, %s269
      %p271 = scmp.eq.s32.totalorder %s31, 0
      %p272 = por %p270, %p271
      %s273 = ssub.s32 %s25, %s32
      %p274 = scmp.eq.s32.totalorder %s273, 0
      %s276 = sadd.s32 %s275, 1
      %s277 = scalar_select %p274, %s275, %s276
      %p280 = pneg %p274
      %p281 = scmp.eq.s32.totalorder %s25, 1
      %p282 = por %p280, %p281
      %p283 = scmp.ne.s32.totalorder %s275, %s278
      %p284 = scmp.eq.s32.totalorder %s25, 0
      %p285 = por %p283, %p284
      %p286 = scmp.ne.s32.totalorder %s275, %s278
      %p287 = scmp.eq.s32.totalorder %s30, 1
      %p288 = por %p286, %p287
      %p289 = scmp.ne.s32.totalorder %s278, %s279
      %p290 = scmp.eq.s32.totalorder %s30, 0
      %p291 = por %p289, %p290
      %p292 = scmp.ne.s32.totalorder %s278, %s279
      %p293 = scmp.eq.s32.totalorder %s31, 1
      %p294 = por %p292, %p293
      %p296 = scmp.ne.s32.totalorder %s279, %s295
      %p297 = scmp.eq.s32.totalorder %s31, 0
      %p298 = por %p296, %p297
      %s299 = ssub.s32 %s25, %s32
      %p300 = scmp.eq.s32.totalorder %s299, 0
      %s302 = sadd.s32 %s301, 1
      %s303 = scalar_select %p300, %s301, %s302
      %p306 = pneg %p300
      %p307 = scmp.eq.s32.totalorder %s25, 1
      %p308 = por %p306, %p307
      %p309 = scmp.ne.s32.totalorder %s301, %s304
      %p310 = scmp.eq.s32.totalorder %s25, 0
      %p311 = por %p309, %p310
      %p312 = scmp.ne.s32.totalorder %s301, %s304
      %p313 = scmp.eq.s32.totalorder %s30, 1
      %p314 = por %p312, %p313
      %p315 = scmp.ne.s32.totalorder %s304, %s305
      %p316 = scmp.eq.s32.totalorder %s30, 0
      %p317 = por %p315, %p316
      %p318 = scmp.ne.s32.totalorder %s304, %s305
      %p319 = scmp.eq.s32.totalorder %s31, 1
      %p320 = por %p318, %p319
      %p322 = scmp.ne.s32.totalorder %s305, %s321
      %p323 = scmp.eq.s32.totalorder %s31, 0
      %p324 = por %p322, %p323
      %s325 = ssub.s32 %s25, %s32
      %p326 = scmp.eq.s32.totalorder %s325, 0
      %s328 = sadd.s32 %s327, 1
      %s329 = scalar_select %p326, %s327, %s328
      %p332 = pneg %p326
      %p333 = scmp.eq.s32.totalorder %s25, 1
      %p334 = por %p332, %p333
      %p335 = scmp.ne.s32.totalorder %s327, %s330
      %p336 = scmp.eq.s32.totalorder %s25, 0
      %p337 = por %p335, %p336
      %p338 = scmp.ne.s32.totalorder %s327, %s330
      %p339 = scmp.eq.s32.totalorder %s30, 1
      %p340 = por %p338, %p339
      %p341 = scmp.ne.s32.totalorder %s330, %s331
      %p342 = scmp.eq.s32.totalorder %s30, 0
      %p343 = por %p341, %p342
      %p344 = scmp.ne.s32.totalorder %s330, %s331
      %p345 = scmp.eq.s32.totalorder %s31, 1
      %p346 = por %p344, %p345
      %p348 = scmp.ne.s32.totalorder %s331, %s347
      %p349 = scmp.eq.s32.totalorder %s31, 0
      %p350 = por %p348, %p349
      %s351 = ssub.s32 %s25, %s32
      %p352 = scmp.eq.s32.totalorder %s351, 0
      %s354 = sadd.s32 %s353, 1
      %s355 = scalar_select %p352, %s353, %s354
      %p358 = pneg %p352
      %p359 = scmp.eq.s32.totalorder %s25, 1
      %p360 = por %p358, %p359
      %p361 = scmp.ne.s32.totalorder %s353, %s356
      %p362 = scmp.eq.s32.totalorder %s25, 0
      %p363 = por %p361, %p362
      %p364 = scmp.ne.s32.totalorder %s353, %s356
      %p365 = scmp.eq.s32.totalorder %s30, 1
      %p366 = por %p364, %p365
      %p367 = scmp.ne.s32.totalorder %s356, %s357
      %p368 = scmp.eq.s32.totalorder %s30, 0
      %p369 = por %p367, %p368
      %p370 = scmp.ne.s32.totalorder %s356, %s357
      %p371 = scmp.eq.s32.totalorder %s31, 1
      %p372 = por %p370, %p371
      %p374 = scmp.ne.s32.totalorder %s357, %s373
      %p375 = scmp.eq.s32.totalorder %s31, 0
      %p376 = por %p374, %p375
      %s377 = ssub.s32 %s25, %s32
      %p378 = scmp.eq.s32.totalorder %s377, 0
      %s380 = sadd.s32 %s379, 1
      %s381 = scalar_select %p378, %s379, %s380
      %p384 = pneg %p378
      %p385 = scmp.eq.s32.totalorder %s25, 1
      %p386 = por %p384, %p385
      %p387 = scmp.ne.s32.totalorder %s379, %s382
      %p388 = scmp.eq.s32.totalorder %s25, 0
      %p389 = por %p387, %p388
      %p390 = scmp.ne.s32.totalorder %s379, %s382
      %p391 = scmp.eq.s32.totalorder %s30, 1
      %p392 = por %p390, %p391
      %p393 = scmp.ne.s32.totalorder %s382, %s383
      %p394 = scmp.eq.s32.totalorder %s30, 0
      %p395 = por %p393, %p394
      %p396 = scmp.ne.s32.totalorder %s382, %s383
      %p397 = scmp.eq.s32.totalorder %s31, 1
      %p398 = por %p396, %p397
      %p400 = scmp.ne.s32.totalorder %s383, %s399
      %p401 = scmp.eq.s32.totalorder %s31, 0
      %p402 = por %p400, %p401
      %s403 = ssub.s32 %s25, %s32
      %p404 = scmp.eq.s32.totalorder %s403, 0
      %s406 = sadd.s32 %s405, 1
      %s407 = scalar_select %p404, %s405, %s406
      %p410 = pneg %p404
      %p411 = scmp.eq.s32.totalorder %s25, 1
      %p412 = por %p410, %p411
      %p413 = scmp.ne.s32.totalorder %s405, %s408
      %p414 = scmp.eq.s32.totalorder %s25, 0
      %p415 = por %p413, %p414
      %p416 = scmp.ne.s32.totalorder %s405, %s408
      %p417 = scmp.eq.s32.totalorder %s30, 1
      %p418 = por %p416, %p417
      %p419 = scmp.ne.s32.totalorder %s408, %s409
      %p420 = scmp.eq.s32.totalorder %s30, 0
      %p421 = por %p419, %p420
      %p422 = scmp.ne.s32.totalorder %s408, %s409
      %p423 = scmp.eq.s32.totalorder %s31, 1
      %p424 = por %p422, %p423
      %p426 = scmp.ne.s32.totalorder %s409, %s425
      %p427 = scmp.eq.s32.totalorder %s31, 0
      %p428 = por %p426, %p427
      %s430 = sadd.s32 %s429, 1
      %p433 = scmp.eq.s32.totalorder %s25, 1
      %p434 = scmp.ne.s32.totalorder %s429, %s431
      %p435 = scmp.eq.s32.totalorder %s25, 0
      %p436 = por %p434, %p435
      %p437 = scmp.ne.s32.totalorder %s429, %s431
      %p438 = scmp.eq.s32.totalorder %s30, 1
      %p439 = por %p437, %p438
      %p440 = scmp.ne.s32.totalorder %s431, %s432
      %p441 = scmp.eq.s32.totalorder %s30, 0
      %p442 = por %p440, %p441
      %p443 = scmp.ne.s32.totalorder %s431, %s432
      %p444 = scmp.eq.s32.totalorder %s31, 1
      %p445 = por %p443, %p444
      %p447 = scmp.ne.s32.totalorder %s432, %s446
      %p448 = scmp.eq.s32.totalorder %s31, 0
      %p449 = por %p447, %p448
      %s451 = sadd.s32 %s450, 1
      %p454 = scmp.eq.s32.totalorder %s25, 1
      %p455 = scmp.ne.s32.totalorder %s450, %s452
      %p456 = scmp.eq.s32.totalorder %s25, 0
      %p457 = por %p455, %p456
      %p458 = scmp.ne.s32.totalorder %s450, %s452
      %p459 = scmp.eq.s32.totalorder %s30, 1
      %p460 = por %p458, %p459
      %p461 = scmp.ne.s32.totalorder %s452, %s453
      %p462 = scmp.eq.s32.totalorder %s30, 0
      %p463 = por %p461, %p462
      %p464 = scmp.ne.s32.totalorder %s452, %s453
      %p465 = scmp.eq.s32.totalorder %s31, 1
      %p466 = por %p464, %p465
      %p468 = scmp.ne.s32.totalorder %s453, %s467
      %p469 = scmp.eq.s32.totalorder %s31, 0
      %p470 = por %p468, %p469
      %s472 = sadd.s32 %s471, 1
      %p475 = scmp.eq.s32.totalorder %s25, 1
      %p476 = scmp.ne.s32.totalorder %s471, %s473
      %p477 = scmp.eq.s32.totalorder %s25, 0
      %p478 = por %p476, %p477
      %p479 = scmp.ne.s32.totalorder %s471, %s473
      %p480 = scmp.eq.s32.totalorder %s30, 1
      %p481 = por %p479, %p480
      %p482 = scmp.ne.s32.totalorder %s473, %s474
      %p483 = scmp.eq.s32.totalorder %s30, 0
      %p484 = por %p482, %p483
      %p485 = scmp.ne.s32.totalorder %s473, %s474
      %p486 = scmp.eq.s32.totalorder %s31, 1
      %p487 = por %p485, %p486
      %p489 = scmp.ne.s32.totalorder %s474, %s488
      %p490 = scmp.eq.s32.totalorder %s31, 0
      %p491 = por %p489, %p490
      %p492 = scmp.le.s32.totalorder 1, %s25
      %p493 = scmp.lt.s32.totalorder %s25, 3
      %p494 = pnand %p492, %p493
      %p495 = pneg %p494
      // Predicated region
      $region9: #{phikon_forward.1} parent=5 // pred_check
        _
      $region10: #{phikon_forward.1} parent=5 // pred_check_branch
        %497 = sbr.rel (%p494) target = $region12
      $region11: #{phikon_forward.1} parent=5 // pred_region
        %s498 = ssub.s32 %s25, 1
        // Predicated region
        $region13: #{phikon_forward.1} parent=11 // pred_check
          %p499 = pneg %p46
        $region14: #{phikon_forward.1} parent=11 // pred_check_branch
          %501 = sbr.rel (%p499) target = $region16
        $region15: #{phikon_forward.1} parent=11 // pred_region
          _
        $region16: #{phikon_forward.1} parent=11 // pred_fallthru
          _
        // Predicated region
        $region17: #{phikon_forward.1} parent=11 // pred_check
          %p502 = pneg %p67
        $region18: #{phikon_forward.1} parent=11 // pred_check_branch
          %504 = sbr.rel (%p502) target = $region20
        $region19: #{phikon_forward.1} parent=11 // pred_region
          _
        $region20: #{phikon_forward.1} parent=11 // pred_fallthru
          _
        // Predicated region
        $region21: #{phikon_forward.1} parent=11 // pred_check
          %p505 = pneg %p88
        $region22: #{phikon_forward.1} parent=11 // pred_check_branch
          %507 = sbr.rel (%p505) target = $region24
        $region23: #{phikon_forward.1} parent=11 // pred_region
          _
        $region24: #{phikon_forward.1} parent=11 // pred_fallthru
          _
        // Predicated region
        $region25: #{phikon_forward.1} parent=11 // pred_check
          %p508 = pneg %p109
        $region26: #{phikon_forward.1} parent=11 // pred_check_branch
          %510 = sbr.rel (%p508) target = $region28
        $region27: #{phikon_forward.1} parent=11 // pred_region
          _
        $region28: #{phikon_forward.1} parent=11 // pred_fallthru
          _
        // Predicated region
        $region29: #{phikon_forward.1} parent=11 // pred_check
          %p511 = pneg %p442
        $region30: #{phikon_forward.1} parent=11 // pred_check_branch
          %513 = sbr.rel (%p511) target = $region32
        $region31: #{phikon_forward.1} parent=11 // pred_region
          _
        $region32: #{phikon_forward.1} parent=11 // pred_fallthru
          _
        // Predicated region
        $region33: #{phikon_forward.1} parent=11 // pred_check
          %p514 = pneg %p463
        $region34: #{phikon_forward.1} parent=11 // pred_check_branch
          %516 = sbr.rel (%p514) target = $region36
        $region35: #{phikon_forward.1} parent=11 // pred_region
          _
        $region36: #{phikon_forward.1} parent=11 // pred_fallthru
          _
      $region12: #{phikon_forward.1} parent=5 // pred_fallthru
        _
      %p517 = scmp.lt.s32.totalorder %s25, 2
      // Predicated region
      $region37: #{phikon_forward.1} parent=5 // pred_check
        %p518 = pneg %p517
      $region38: #{phikon_forward.1} parent=5 // pred_check_branch
        %520 = sbr.rel (%p518) target = $region40
      $region39: #{phikon_forward.1} parent=5 // pred_region
        // Predicated region
        $region41: #{phikon_forward.1} parent=39 // pred_check
          %p521 = pneg %p129
        $region42: #{phikon_forward.1} parent=39 // pred_check_branch
          %523 = sbr.rel (%p521) target = $region44
        $region43: #{phikon_forward.1} parent=39 // pred_region
          %p524 = scmp.lt.s32.totalorder %s25, 1
          %s525 = scalar_select %p524, %s25, 1
          %s526 = scalar_lea.vmem %s4, %s525
        $region44: #{phikon_forward.1} parent=39 // pred_fallthru
          _
        // Predicated region
        $region45: #{phikon_forward.1} parent=39 // pred_check
          %p527 = pneg %p155
        $region46: #{phikon_forward.1} parent=39 // pred_check_branch
          %529 = sbr.rel (%p527) target = $region48
        $region47: #{phikon_forward.1} parent=39 // pred_region
          %p530 = scmp.lt.s32.totalorder %s25, 1
          %s531 = scalar_select %p530, %s25, 1
          %s532 = scalar_lea.vmem %s5, %s531
        $region48: #{phikon_forward.1} parent=39 // pred_fallthru
          _
        // Predicated region
        $region49: #{phikon_forward.1} parent=39 // pred_check
          %p533 = pneg %p181
        $region50: #{phikon_forward.1} parent=39 // pred_check_branch
          %535 = sbr.rel (%p533) target = $region52
        $region51: #{phikon_forward.1} parent=39 // pred_region
          %p536 = scmp.lt.s32.totalorder %s25, 1
          %s537 = scalar_select %p536, %s25, 1
          %s538 = smul.addr %s537, 48
          %s539 = smul.addr %s538, 4
          %s540 = scalar_lea.vmem %s6, %s539
        $region52: #{phikon_forward.1} parent=39 // pred_fallthru
          _
        // Predicated region
        $region53: #{phikon_forward.1} parent=39 // pred_check
          %p541 = pneg %p207
        $region54: #{phikon_forward.1} parent=39 // pred_check_branch
          %543 = sbr.rel (%p541) target = $region56
        $region55: #{phikon_forward.1} parent=39 // pred_region
          %p544 = scmp.lt.s32.totalorder %s25, 1
          %s545 = scalar_select %p544, %s25, 1
          %s546 = smul.addr %s545, 3
          %s547 = scalar_lea.vmem %s7, %s546
        $region56: #{phikon_forward.1} parent=39 // pred_fallthru
          _
        // Predicated region
        $region57: #{phikon_forward.1} parent=39 // pred_check
          %p548 = pneg %p233
        $region58: #{phikon_forward.1} parent=39 // pred_check_branch
          %550 = sbr.rel (%p548) target = $region60
        $region59: #{phikon_forward.1} parent=39 // pred_region
          %p551 = scmp.lt.s32.totalorder %s25, 1
          %s552 = scalar_select %p551, %s25, 1
          %s553 = smul.addr %s552, 16
          %s554 = smul.addr %s553, 4
          %s555 = scalar_lea.vmem %s8, %s554
        $region60: #{phikon_forward.1} parent=39 // pred_fallthru
          _
        // Predicated region
        $region61: #{phikon_forward.1} parent=39 // pred_check
          %p556 = pneg %p259
        $region62: #{phikon_forward.1} parent=39 // pred_check_branch
          %558 = sbr.rel (%p556) target = $region64
        $region63: #{phikon_forward.1} parent=39 // pred_region
          %p559 = scmp.lt.s32.totalorder %s25, 1
          %s560 = scalar_select %p559, %s25, 1
          %s561 = scalar_lea.vmem %s9, %s560
        $region64: #{phikon_forward.1} parent=39 // pred_fallthru
          _
        // Predicated region
        $region65: #{phikon_forward.1} parent=39 // pred_check
          %p562 = pneg %p285
        $region66: #{phikon_forward.1} parent=39 // pred_check_branch
          %564 = sbr.rel (%p562) target = $region68
        $region67: #{phikon_forward.1} parent=39 // pred_region
          %p565 = scmp.lt.s32.totalorder %s25, 1
          %s566 = scalar_select %p565, %s25, 1
          %s567 = scalar_lea.vmem %s10, %s566
        $region68: #{phikon_forward.1} parent=39 // pred_fallthru
          _
        // Predicated region
        $region69: #{phikon_forward.1} parent=39 // pred_check
          %p568 = pneg %p311
        $region70: #{phikon_forward.1} parent=39 // pred_check_branch
          %570 = sbr.rel (%p568) target = $region72
        $region71: #{phikon_forward.1} parent=39 // pred_region
          %p571 = scmp.lt.s32.totalorder %s25, 1
          %s572 = scalar_select %p571, %s25, 1
          %s573 = scalar_lea.vmem %s11, %s572
        $region72: #{phikon_forward.1} parent=39 // pred_fallthru
          _
        // Predicated region
        $region73: #{phikon_forward.1} parent=39 // pred_check
          %p574 = pneg %p337
        $region74: #{phikon_forward.1} parent=39 // pred_check_branch
          %576 = sbr.rel (%p574) target = $region76
        $region75: #{phikon_forward.1} parent=39 // pred_region
          %p577 = scmp.lt.s32.totalorder %s25, 1
          %s578 = scalar_select %p577, %s25, 1
          %s579 = smul.addr %s578, 64
          %s580 = smul.addr %s579, 4
          %s581 = scalar_lea.vmem %s12, %s580
        $region76: #{phikon_forward.1} parent=39 // pred_fallthru
          _
        // Predicated region
        $region77: #{phikon_forward.1} parent=39 // pred_check
          %p582 = pneg %p363
        $region78: #{phikon_forward.1} parent=39 // pred_check_branch
          %584 = sbr.rel (%p582) target = $region80
        $region79: #{phikon_forward.1} parent=39 // pred_region
          %p585 = scmp.lt.s32.totalorder %s25, 1
          %s586 = scalar_select %p585, %s25, 1
          %s587 = smul.addr %s586, 4
          %s588 = scalar_lea.vmem %s13, %s587
        $region80: #{phikon_forward.1} parent=39 // pred_fallthru
          _
        // Predicated region
        $region81: #{phikon_forward.1} parent=39 // pred_check
          %p589 = pneg %p389
        $region82: #{phikon_forward.1} parent=39 // pred_check_branch
          %591 = sbr.rel (%p589) target = $region84
        $region83: #{phikon_forward.1} parent=39 // pred_region
          %p592 = scmp.lt.s32.totalorder %s25, 1
          %s593 = scalar_select %p592, %s25, 1
          %s594 = smul.addr %s593, 64
          %s595 = smul.addr %s594, 4
          %s596 = scalar_lea.vmem %s14, %s595
        $region84: #{phikon_forward.1} parent=39 // pred_fallthru
          _
        // Predicated region
        $region85: #{phikon_forward.1} parent=39 // pred_check
          %p597 = pneg %p415
        $region86: #{phikon_forward.1} parent=39 // pred_check_branch
          %599 = sbr.rel (%p597) target = $region88
        $region87: #{phikon_forward.1} parent=39 // pred_region
          %p600 = scmp.lt.s32.totalorder %s25, 1
          %s601 = scalar_select %p600, %s25, 1
          %s602 = scalar_lea.vmem %s15, %s601
        $region88: #{phikon_forward.1} parent=39 // pred_fallthru
          _
      $region40: #{phikon_forward.1} parent=5 // pred_fallthru
        _
      %p603 = scmp.le.s32.totalorder 1, %s25
      %p604 = scmp.lt.s32.totalorder %s25, 3
      %p605 = pnand %p603, %p604
      %p606 = pneg %p605
      // Predicated region
      $region89: #{phikon_forward.1} parent=5 // pred_check
        _
      $region90: #{phikon_forward.1} parent=5 // pred_check_branch
        %608 = sbr.rel (%p605) target = $region92
      $region91: #{phikon_forward.1} parent=5 // pred_region
        %s609 = ssub.s32 %s25, 1
        %p610 = pneg %p46
        %p611 = pneg %p43
        %p612 = pneg %p67
        %p613 = pneg %p64
        %p614 = pneg %p88
        %p615 = pneg %p85
        %p616 = pneg %p109
        %p617 = pneg %p106
        %p618 = scmp.lt.s32.totalorder %s30, 1
        %s619 = scalar_select %p618, %s30, 1
        %s620 = scalar_lea.vmem %s4, %s619
        %p621 = pneg %p135
        %p622 = pneg %p132
        %p623 = scmp.lt.s32.totalorder %s30, 1
        %s624 = scalar_select %p623, %s30, 1
        %s625 = scalar_lea.vmem %s5, %s624
        %p626 = pneg %p161
        %p627 = pneg %p158
        %p628 = scmp.lt.s32.totalorder %s30, 1
        %s629 = scalar_select %p628, %s30, 1
        %s630 = smul.addr %s629, 48
        %s631 = smul.addr %s630, 4
        %s632 = scalar_lea.vmem %s6, %s631
        %p633 = pneg %p187
        %p634 = pneg %p184
        %p635 = scmp.lt.s32.totalorder %s30, 1
        %s636 = scalar_select %p635, %s30, 1
        %s637 = smul.addr %s636, 3
        %s638 = scalar_lea.vmem %s7, %s637
        %p639 = pneg %p213
        %p640 = pneg %p210
        %p641 = scmp.lt.s32.totalorder %s30, 1
        %s642 = scalar_select %p641, %s30, 1
        %s643 = smul.addr %s642, 16
        %s644 = smul.addr %s643, 4
        %s645 = scalar_lea.vmem %s8, %s644
        %p646 = pneg %p239
        %p647 = pneg %p236
        %p648 = scmp.lt.s32.totalorder %s30, 1
        %s649 = scalar_select %p648, %s30, 1
        %s650 = scalar_lea.vmem %s9, %s649
        %p651 = pneg %p265
        %p652 = pneg %p262
        %p653 = scmp.lt.s32.totalorder %s30, 1
        %s654 = scalar_select %p653, %s30, 1
        %s655 = scalar_lea.vmem %s10, %s654
        %p656 = pneg %p291
        %p657 = pneg %p288
        %p658 = scmp.lt.s32.totalorder %s30, 1
        %s659 = scalar_select %p658, %s30, 1
        %s660 = scalar_lea.vmem %s11, %s659
        %p661 = pneg %p317
        %p662 = pneg %p314
        %p663 = scmp.lt.s32.totalorder %s30, 1
        %s664 = scalar_select %p663, %s30, 1
        %s665 = smul.addr %s664, 64
        %s666 = smul.addr %s665, 4
        %s667 = scalar_lea.vmem %s12, %s666
        %p668 = pneg %p343
        %p669 = pneg %p340
        %p670 = scmp.lt.s32.totalorder %s30, 1
        %s671 = scalar_select %p670, %s30, 1
        %s672 = smul.addr %s671, 4
        %s673 = scalar_lea.vmem %s13, %s672
        %p674 = pneg %p369
        %p675 = pneg %p366
        %p676 = scmp.lt.s32.totalorder %s30, 1
        %s677 = scalar_select %p676, %s30, 1
        %s678 = smul.addr %s677, 64
        %s679 = smul.addr %s678, 4
        %s680 = scalar_lea.vmem %s14, %s679
        %p681 = pneg %p395
        %p682 = pneg %p392
        %p683 = scmp.lt.s32.totalorder %s30, 1
        %s684 = scalar_select %p683, %s30, 1
        %s685 = scalar_lea.vmem %s15, %s684
        %p686 = pneg %p421
        %p687 = pneg %p418
        %p688 = pneg %p442
        %p689 = pneg %p439
        %p690 = pneg %p463
        %p691 = pneg %p460
        %p692 = pneg %p484
        %p693 = pneg %p481
        %p694 = scmp.lt.s32.totalorder %s30, 1
        %s695 = scalar_select %p694, %s30, 1
        %s696 = scalar_lea.vmem %s4, %s695
        %p697 = scmp.lt.s32.totalorder %s30, 1
        %s698 = scalar_select %p697, %s30, 1
        %s699 = scalar_lea.vmem %s5, %s698
        %p700 = scmp.lt.s32.totalorder %s30, 1
        %s701 = scalar_select %p700, %s30, 1
        %s702 = smul.addr %s701, 48
        %s703 = smul.addr %s702, 4
        %s704 = scalar_lea.vmem %s6, %s703
        %p705 = scmp.lt.s32.totalorder %s30, 1
        %s706 = scalar_select %p705, %s30, 1
        %s707 = smul.addr %s706, 3
        %s708 = scalar_lea.vmem %s7, %s707
        %p709 = scmp.lt.s32.totalorder %s30, 1
        %s710 = scalar_select %p709, %s30, 1
        %s711 = smul.addr %s710, 16
        %s712 = smul.addr %s711, 4
        %s713 = scalar_lea.vmem %s8, %s712
        %p714 = scmp.lt.s32.totalorder %s30, 1
        %s715 = scalar_select %p714, %s30, 1
        %s716 = scalar_lea.vmem %s9, %s715
        %p717 = scmp.lt.s32.totalorder %s30, 1
        %s718 = scalar_select %p717, %s30, 1
        %s719 = scalar_lea.vmem %s10, %s718
        %p720 = scmp.lt.s32.totalorder %s30, 1
        %s721 = scalar_select %p720, %s30, 1
        %s722 = scalar_lea.vmem %s11, %s721
        %p723 = scmp.lt.s32.totalorder %s30, 1
        %s724 = scalar_select %p723, %s30, 1
        %s725 = smul.addr %s724, 64
        %s726 = smul.addr %s725, 4
        %s727 = scalar_lea.vmem %s12, %s726
        %p728 = scmp.lt.s32.totalorder %s30, 1
        %s729 = scalar_select %p728, %s30, 1
        %s730 = smul.addr %s729, 4
        %s731 = scalar_lea.vmem %s13, %s730
        %p732 = scmp.lt.s32.totalorder %s30, 1
        %s733 = scalar_select %p732, %s30, 1
        %s734 = smul.addr %s733, 64
        %s735 = smul.addr %s734, 4
        %s736 = scalar_lea.vmem %s14, %s735
        %p737 = scmp.lt.s32.totalorder %s30, 1
        %s738 = scalar_select %p737, %s30, 1
        %s739 = scalar_lea.vmem %s15, %s738
        %p741 = scmp.eq.s32.totalorder %s30, 0
        // Predicated region
        $region93: #{phikon_forward.1} parent=91 // pred_check
          %p742 = pneg %p741
        $region94: #{phikon_forward.1} parent=91 // pred_check_branch
          %744 = sbr.rel (%p742) target = $region96
        $region95: #{phikon_forward.1} parent=91 // pred_region
          %v745 = vld [vmem:[%s0] sm:$0xff]
          %v746 = vld [vmem:[%s0 + $0x8] sm:$0xff]
          %v747 = vld [vmem:[%s0 + $0x10] sm:$0xff]
          %v748 = vld [vmem:[%s0 + $0x18] sm:$0xff]
          %v749 = vmul.f32 %v745, 255.0
          %v750 = vmul.f32 %v746, 255.0
          %v751 = vmul.f32 %v747, 255.0
          %v752 = vmul.f32 %v748, 255.0
          %v753 = vfloor.f32 %v749
          %v754 = vfloor.f32 %v750
          %v755 = vfloor.f32 %v751
          %v756 = vfloor.f32 %v752
          %v757 = vmul.f32 %v753, 0.003921569
          %v758 = vmul.f32 %v754, 0.003921569
          %v759 = vmul.f32 %v755, 0.003921569
          %v760 = vmul.f32 %v756, 0.003921569
          %v761 = vld [vmem:[%s2] sm:$0xff]
          %v762 = vld [vmem:[%s2 + $0x8] sm:$0xff]
          %v763 = vld [vmem:[%s1] sm:$0xf]
          %v764 = vld [vmem:[%s1 + $0x4] sm:$0xf]
          %v765 = vld [vmem:[%s1 + $0x8] sm:$0xf]
          %v766 = vld [vmem:[%s1 + $0xc] sm:$0xf]
          %v767 = vld [vmem:[%s1 + $0x10] sm:$0xf]
          %v768 = vld [vmem:[%s1 + $0x14] sm:$0xf]
          %v769 = vld [vmem:[%s1 + $0x18] sm:$0xf]
          %v770 = vld [vmem:[%s1 + $0x1c] sm:$0xf]
          %v771 = vld [vmem:[%s1 + $0x20] sm:$0xf]
          %v772 = vld [vmem:[%s1 + $0x24] sm:$0xf]
          %v773 = vld [vmem:[%s1 + $0x28] sm:$0xf]
          %v774 = vld [vmem:[%s1 + $0x2c] sm:$0xf]
          %v775 = vld [vmem:[%s1 + $0x30] sm:$0xf]
          %v776 = vld [vmem:[%s1 + $0x34] sm:$0xf]
          %v777 = vld [vmem:[%s1 + $0x38] sm:$0xf]
          %v778 = vld [vmem:[%s1 + $0x3c] sm:$0xf]
          %v779 = vld [vmem:[%s1 + $0x40] sm:$0xf]
          %v780 = vld [vmem:[%s1 + $0x44] sm:$0xf]
          %v781 = vld [vmem:[%s1 + $0x48] sm:$0xf]
          %v782 = vld [vmem:[%s1 + $0x4c] sm:$0xf]
          %v783 = vld [vmem:[%s1 + $0x50] sm:$0xf]
          %v784 = vld [vmem:[%s1 + $0x54] sm:$0xf]
          %v785 = vld [vmem:[%s1 + $0x58] sm:$0xf]
          %v786 = vld [vmem:[%s1 + $0x5c] sm:$0xf]
          %v787 = vpack.c.bf16 %v759, %v757
          %v788 = vpack.c.bf16 %v760, %v758
          %v813 = vunpack.c.l.b16 %v763
          %v814 = vunpack.c.l.b16 %v764
          %v815 = vunpack.c.l.b16 %v765
          %v816 = vunpack.c.l.b16 %v766
          %v817 = vunpack.c.l.b16 %v767
          %v818 = vunpack.c.l.b16 %v768
          %v819 = vunpack.c.l.b16 %v769
          %v820 = vunpack.c.l.b16 %v770
          %v821 = vunpack.c.l.b16 %v771
          %v822 = vunpack.c.l.b16 %v772
          %v823 = vunpack.c.l.b16 %v773
          %v824 = vunpack.c.l.b16 %v774
          %v825 = vunpack.c.l.b16 %v775
          %v826 = vunpack.c.l.b16 %v776
          %v827 = vunpack.c.l.b16 %v777
          %v828 = vunpack.c.l.b16 %v778
          %v829 = vunpack.c.l.b16 %v779
          %v830 = vunpack.c.l.b16 %v780
          %v831 = vunpack.c.l.b16 %v781
          %v832 = vunpack.c.l.b16 %v782
          %v833 = vunpack.c.l.b16 %v783
          %v834 = vunpack.c.l.b16 %v784
          %v835 = vunpack.c.l.b16 %v785
          %v836 = vunpack.c.l.b16 %v786
          %v837 = vpack.c.b16 %v814, %v813
          %v838 = vpack.c.b16 %v816, %v815
          %v839 = vpack.c.b16 %v818, %v817
          %v840 = vpack.c.b16 %v820, %v819
          %v841 = vpack.c.b16 %v822, %v821
          %v842 = vpack.c.b16 %v824, %v823
          %v843 = vpack.c.b16 %v826, %v825
          %v844 = vpack.c.b16 %v828, %v827
          %v845 = vpack.c.b16 %v830, %v829
          %v846 = vpack.c.b16 %v832, %v831
          %v847 = vpack.c.b16 %v834, %v833
          %v848 = vpack.c.b16 %v836, %v835
          %vm861 = vcmask 523264
          %v863 = vsel %vm861, %v788, 0
          %865 = vmatprep.subr.bf16.mxu0 0
          %866 = vmatpush1.bf16.msra.mxu0 %v837
          %867 = vmatprep.subr.bf16.mxu0 0
          %868 = vmatpush1.bf16.msra.mxu0 %v838
          %869 = vmatprep.subr.bf16.mxu0 0
          %870 = vmatpush1.bf16.msra.mxu0 %v839
          %871 = vmatprep.subr.bf16.mxu0 0
          %872 = vmatpush1.bf16.msra.mxu0 %v840
          %873 = vmatprep.subr.bf16.mxu0 0
          %874 = vmatpush1.bf16.msra.mxu0 %v841
          %875 = vmatprep.subr.bf16.mxu0 0
          %876 = vmatpush1.bf16.msra.mxu0 %v842
          %877 = vmatprep.subr.bf16.mxu0 0
          %878 = vmatpush1.bf16.msra.mxu0 %v843
          %879 = vmatprep.subr.bf16.mxu0 0
          %880 = vmatpush1.bf16.msra.mxu0 %v844
          %881 = vmatprep.subr.bf16.mxu0 0
          %882 = vmatpush1.bf16.msra.mxu0 %v845
          %883 = vmatprep.subr.bf16.mxu0 0
          %884 = vmatpush1.bf16.msra.mxu0 %v846
          %885 = vmatprep.subr.bf16.mxu0 0
          %886 = vmatpush1.bf16.msra.mxu0 %v847
          %887 = vmatprep.subr.bf16.mxu0 0
          %888 = vmatpush1.bf16.msra.mxu0 %v848
          %889 = vmatprep.subr.bf16.mxu0 0
          %890 = vmatpush1.bf16.msra.mxu0 0
          %891 = vmatprep.subr.bf16.mxu0 0
          %892 = vmatpush1.bf16.msra.mxu0 0
          %893 = vmatprep.subr.bf16.mxu0 0
          %894 = vmatpush1.bf16.msra.mxu0 0
          %895 = vmatprep.subr.bf16.mxu0 0
          %896 = vmatpush1.bf16.msra.mxu0 0
          %897 = vmatprep.mubr.bf16.mxu0 %v863
          %898 = vmatmul.mubr.bf16.gmra.mrb[0].mxu0 %v787
          %v899 = vpop.f32.mrb[0].mxu0
          %v900 = vadd.f32 0.0, %v899
          %v901 = vpop.f32.mrb[0].mxu0
          %v902 = vpop.f32.mrb[0].mxu0
          %v903 = vadd.f32 0.0, %v902
          %v904 = vpop.f32.mrb[0].mxu0
          %905 = vdwg.mxu0
          %v906 = vadd.f32 %v761, %v900
          %v907 = vadd.f32 %v762, %v903
          %908 = vst [vmem:[#allocation2] sm:$0xff] %v906
          %909 = vst [vmem:[#allocation2 + $0x8] sm:$0xff] %v907
        $region96: #{phikon_forward.1} parent=91 // pred_fallthru
          _
        %v910 = vld [vmem:[#allocation2] sm:$0xff]
        %v911 = vld [vmem:[#allocation2 + $0x8] sm:$0xff]
        %v912 = vld [vmem:[%s3] sm:$0xff]
        %v913 = vld [vmem:[%s3 + $0x8] sm:$0xff]
        %v914 = vld [vmem:[%s696] sm:$0x1]
        %v915 = vld [vmem:[%s699] sm:$0x1]
        %916 = vadd.xlane.f32.xlu0 %v910
        %v917 = vpop.xlane.xlu0 %916
        %918 = vadd.xlane.f32.xlu0 %v911
        %v919 = vpop.xlane.xlu0 %918
        %v920 = vrcp.pop 128.0
        %v921 = vmul.f32 %v917, %v920
        %v922 = vmul.f32 %v919, %v920
        %v923 = vsub.f32 %v910, %v921
        %v924 = vsub.f32 %v911, %v922
        %v925 = vmul.f32 %v923, %v923
        %v926 = vmul.f32 %v924, %v924
        %927 = vadd.xlane.f32.xlu0 %v925
        %v928 = vpop.xlane.xlu0 %927
        %929 = vadd.xlane.f32.xlu0 %v926
        %v930 = vpop.xlane.xlu0 %929
        %v931 = vmul.f32 %v928, %v920
        %v932 = vmul.f32 %v930, %v920
        %v933 = vadd.f32 %v931, 1e-12
        %v934 = vadd.f32 %v932, 1e-12
        %v935 = vrsqrt.pop %v933
        %v936 = vrsqrt.pop %v934
        %v937 = vmul.f32 %v923, %v935
        %v938 = vmul.f32 %v924, %v936
        %v940 = vlaneseq
        %v941 = vshrl.u32 %v940, 7
        %v942 = vsub.s32 0, %v941
        %v943 = vrot.slane %v914, %v942
        %v945 = vmul.f32 %v937, %v943
        %v946 = vmul.f32 %v938, %v943
        %v948 = vlaneseq
        %v949 = vshrl.u32 %v948, 7
        %v950 = vsub.s32 0, %v949
        %v951 = vrot.slane %v915, %v950
        %v953 = vadd.f32 %v945, %v951
        %v954 = vadd.f32 %v946, %v951
        %v955 = vld [vmem:[%s704] sm:$0xff]
        %v956 = vld [vmem:[%s704 + $0x8] sm:$0xf]
        %v957 = vld [vmem:[%s704 + $0xc] sm:$0xff]
        %v958 = vld [vmem:[%s704 + $0x14] sm:$0xf]
        %v959 = vld [vmem:[%s704 + $0x18] sm:$0xff]
        %v960 = vld [vmem:[%s704 + $0x20] sm:$0xf]
        %v961 = vld [vmem:[%s704 + $0x24] sm:$0xff]
        %v962 = vld [vmem:[%s704 + $0x2c] sm:$0xf]
        %v963 = vld [vmem:[%s704 + $0x30] sm:$0xff]
        %v964 = vld [vmem:[%s704 + $0x38] sm:$0xf]
        %v965 = vld [vmem:[%s704 + $0x3c] sm:$0xff]
        %v966 = vld [vmem:[%s704 + $0x44] sm:$0xf]
        %v967 = vld [vmem:[%s704 + $0x48] sm:$0xff]
        %v968 = vld [vmem:[%s704 + $0x50] sm:$0xf]
        %v969 = vld [vmem:[%s704 + $0x54] sm:$0xff]
        %v970 = vld [vmem:[%s704 + $0x5c] sm:$0xf]
        %v971 = vld [vmem:[%s704 + $0x60] sm:$0xff]
        %v972 = vld [vmem:[%s704 + $0x68] sm:$0xf]
        %v973 = vld [vmem:[%s704 + $0x6c] sm:$0xff]
        %v974 = vld [vmem:[%s704 + $0x74] sm:$0xf]
        %v975 = vld [vmem:[%s704 + $0x78] sm:$0xff]
        %v976 = vld [vmem:[%s704 + $0x80] sm:$0xf]
        %v977 = vld [vmem:[%s704 + $0x84] sm:$0xff]
        %v978 = vld [vmem:[%s704 + $0x8c] sm:$0xf]
        %v979 = vld [vmem:[%s704 + $0x90] sm:$0xff]
        %v980 = vld [vmem:[%s704 + $0x98] sm:$0xf]
        %v981 = vld [vmem:[%s704 + $0x9c] sm:$0xff]
        %v982 = vld [vmem:[%s704 + $0xa4] sm:$0xf]
        %v983 = vld [vmem:[%s704 + $0xa8] sm:$0xff]
        %v984 = vld [vmem:[%s704 + $0xb0] sm:$0xf]
        %v985 = vld [vmem:[%s704 + $0xb4] sm:$0xff]
        %v986 = vld [vmem:[%s704 + $0xbc] sm:$0xf]
        %v987 = vpack.c.bf16 %v954, %v953
        %v988 = vld [vmem:[%s708] sm:$0x7]
        %v990 = vlaneseq
        %v991 = vshrl.u32 %v990, 7
        %v992 = vsub.s32 0, %v991
        %v993 = vrot.slane %v988, %v992
        %v994 = vlaneseq
        %v995 = vshrl.u32 %v994, 7
        %v996 = vsub.s32 1, %v995
        %v997 = vrot.slane %v988, %v996
        %v998 = vlaneseq
        %v999 = vshrl.u32 %v998, 7
        %v1000 = vsub.s32 2, %v999
        %v1001 = vrot.slane %v988, %v1000
        %v1037 = vunpack.c.l.b16 %v955
        %v1038 = vunpack.c.h.b16 %v955
        %v1039 = vunpack.c.l.b16 %v956
        %v1040 = vunpack.c.l.b16 %v957
        %v1041 = vunpack.c.h.b16 %v957
        %v1042 = vunpack.c.l.b16 %v958
        %v1043 = vunpack.c.l.b16 %v959
        %v1044 = vunpack.c.h.b16 %v959
        %v1045 = vunpack.c.l.b16 %v960
        %v1046 = vunpack.c.l.b16 %v961
        %v1047 = vunpack.c.h.b16 %v961
        %v1048 = vunpack.c.l.b16 %v962
        %v1049 = vunpack.c.l.b16 %v963
        %v1050 = vunpack.c.h.b16 %v963
        %v1051 = vunpack.c.l.b16 %v964
        %v1052 = vunpack.c.l.b16 %v965
        %v1053 = vunpack.c.h.b16 %v965
        %v1054 = vunpack.c.l.b16 %v966
        %v1055 = vunpack.c.l.b16 %v967
        %v1056 = vunpack.c.h.b16 %v967
        %v1057 = vunpack.c.l.b16 %v968
        %v1058 = vunpack.c.l.b16 %v969
        %v1059 = vunpack.c.h.b16 %v969
        %v1060 = vunpack.c.l.b16 %v970
        %v1061 = vunpack.c.l.b16 %v971
        %v1062 = vunpack.c.h.b16 %v971
        %v1063 = vunpack.c.l.b16 %v972
        %v1064 = vunpack.c.l.b16 %v973
        %v1065 = vunpack.c.h.b16 %v973
        %v1066 = vunpack.c.l.b16 %v974
        %v1067 = vunpack.c.l.b16 %v975
        %v1068 = vunpack.c.h.b16 %v975
        %v1069 = vunpack.c.l.b16 %v976
        %v1070 = vunpack.c.l.b16 %v977
        %v1071 = vunpack.c.h.b16 %v977
        %v1072 = vunpack.c.l.b16 %v978
        %v1073 = vunpack.c.l.b16 %v979
        %v1074 = vunpack.c.h.b16 %v979
        %v1075 = vunpack.c.l.b16 %v980
        %v1076 = vunpack.c.l.b16 %v981
        %v1077 = vunpack.c.h.b16 %v981
        %v1078 = vunpack.c.l.b16 %v982
        %v1079 = vunpack.c.l.b16 %v983
        %v1080 = vunpack.c.h.b16 %v983
        %v1081 = vunpack.c.l.b16 %v984
        %v1082 = vunpack.c.l.b16 %v985
        %v1083 = vunpack.c.h.b16 %v985
        %v1084 = vunpack.c.l.b16 %v986
        %v1085 = vpack.c.b16 %v1040, %v1037
        %v1086 = vpack.c.b16 %v1041, %v1038
        %v1087 = vpack.c.b16 %v1042, %v1039
        %v1088 = vpack.c.b16 %v1046, %v1043
        %v1089 = vpack.c.b16 %v1047, %v1044
        %v1090 = vpack.c.b16 %v1048, %v1045
        %v1091 = vpack.c.b16 %v1052, %v1049
        %v1092 = vpack.c.b16 %v1053, %v1050
        %v1093 = vpack.c.b16 %v1054, %v1051
        %v1094 = vpack.c.b16 %v1058, %v1055
        %v1095 = vpack.c.b16 %v1059, %v1056
        %v1096 = vpack.c.b16 %v1060, %v1057
        %v1097 = vpack.c.b16 %v1064, %v1061
        %v1098 = vpack.c.b16 %v1065, %v1062
        %v1099 = vpack.c.b16 %v1066, %v1063
        %v1100 = vpack.c.b16 %v1070, %v1067
        %v1101 = vpack.c.b16 %v1071, %v1068
        %v1102 = vpack.c.b16 %v1072, %v1069
        %v1103 = vpack.c.b16 %v1076, %v1073
        %v1104 = vpack.c.b16 %v1077, %v1074
        %v1105 = vpack.c.b16 %v1078, %v1075
        %v1106 = vpack.c.b16 %v1082, %v1079
        %v1107 = vpack.c.b16 %v1083, %v1080
        %v1108 = vpack.c.b16 %v1084, %v1081
        %1133 = vmatprep.subr.bf16.mxu0 %v1086
        %1134 = vmatpush1.bf16.msra.mxu0 %v1085
        %1135 = vmatprep.subr.bf16.mxu0 %v1089
        %1136 = vmatpush1.bf16.msra.mxu0 %v1088
        %1137 = vmatprep.subr.bf16.mxu0 %v1092
        %1138 = vmatpush1.bf16.msra.mxu0 %v1091
        %1139 = vmatprep.subr.bf16.mxu0 %v1095
        %1140 = vmatpush1.bf16.msra.mxu0 %v1094
        %1141 = vmatprep.subr.bf16.mxu0 %v1098
        %1142 = vmatpush1.bf16.msra.mxu0 %v1097
        %1143 = vmatprep.subr.bf16.mxu0 %v1101
        %1144 = vmatpush1.bf16.msra.mxu0 %v1100
        %1145 = vmatprep.subr.bf16.mxu0 %v1104
        %1146 = vmatpush1.bf16.msra.mxu0 %v1103
        %1147 = vmatprep.subr.bf16.mxu0 %v1107
        %1148 = vmatpush1.bf16.msra.mxu0 %v1106
        %1149 = vmatprep.subr.bf16.mxu0 0
        %1150 = vmatpush1.bf16.msra.mxu0 0
        %1151 = vmatprep.subr.bf16.mxu0 0
        %1152 = vmatpush1.bf16.msra.mxu0 0
        %1153 = vmatprep.subr.bf16.mxu0 0
        %1154 = vmatpush1.bf16.msra.mxu0 0
        %1155 = vmatprep.subr.bf16.mxu0 0
        %1156 = vmatpush1.bf16.msra.mxu0 0
        %1157 = vmatprep.subr.bf16.mxu0 0
        %1158 = vmatpush1.bf16.msra.mxu0 0
        %1159 = vmatprep.subr.bf16.mxu0 0
        %1160 = vmatpush1.bf16.msra.mxu0 0
        %1161 = vmatprep.subr.bf16.mxu0 0
        %1162 = vmatpush1.bf16.msra.mxu0 0
        %1163 = vmatprep.subr.bf16.mxu0 0
        %1164 = vmatpush1.bf16.msra.mxu0 0
        %1165 = vmatprep.mubr.bf16.mxu0 0
        %1166 = vmatmul.mubr.bf16.gmra.mrb[0].mxu0 %v987
        %v1167 = vpop.f32.mrb[0].mxu0
        %v1168 = vadd.f32 %v993, %v1167
        %v1169 = vpop.f32.mrb[0].mxu0
        %v1170 = vadd.f32 %v997, %v1169
        %v1171 = vpop.f32.mrb[0].mxu0
        %v1172 = vadd.f32 %v993, %v1171
        %v1173 = vpop.f32.mrb[0].mxu0
        %v1174 = vadd.f32 %v997, %v1173
        %1175 = vdwg.mxu0
        %1176 = vmatprep.subr.bf16.mxu0 0
        %1177 = vmatpush1.bf16.msra.mxu0 %v1087
        %1178 = vmatprep.subr.bf16.mxu0 0
        %1179 = vmatpush1.bf16.msra.mxu0 %v1090
        %1180 = vmatprep.subr.bf16.mxu0 0
        %1181 = vmatpush1.bf16.msra.mxu0 %v1093
        %1182 = vmatprep.subr.bf16.mxu0 0
        %1183 = vmatpush1.bf16.msra.mxu0 %v1096
        %1184 = vmatprep.subr.bf16.mxu0 0
        %1185 = vmatpush1.bf16.msra.mxu0 %v1099
        %1186 = vmatprep.subr.bf16.mxu0 0
        %1187 = vmatpush1.bf16.msra.mxu0 %v1102
        %1188 = vmatprep.subr.bf16.mxu0 0
        %1189 = vmatpush1.bf16.msra.mxu0 %v1105
        %1190 = vmatprep.subr.bf16.mxu0 0
        %1191 = vmatpush1.bf16.msra.mxu0 %v1108
        %1192 = vmatprep.subr.bf16.mxu0 0
        %1193 = vmatpush1.bf16.msra.mxu0 0
        %1194 = vmatprep.subr.bf16.mxu0 0
        %1195 = vmatpush1.bf16.msra.mxu0 0
        %1196 = vmatprep.subr.bf16.mxu0 0
        %1197 = vmatpush1.bf16.msra.mxu0 0
        %1198 = vmatprep.subr.bf16.mxu0 0
        %1199 = vmatpush1.bf16.msra.mxu0 0
        %1200 = vmatprep.subr.bf16.mxu0 0
        %1201 = vmatpush1.bf16.msra.mxu0 0
        %1202 = vmatprep.subr.bf16.mxu0 0
        %1203 = vmatpush1.bf16.msra.mxu0 0
        %1204 = vmatprep.subr.bf16.mxu0 0
        %1205 = vmatpush1.bf16.msra.mxu0 0
        %1206 = vmatprep.subr.bf16.mxu0 0
        %1207 = vmatpush1.bf16.msra.mxu0 0
        %1208 = vmatprep.mubr.bf16.mxu0 0
        %1209 = vmatmul.mubr.bf16.gmra.mrb[0].mxu0 %v987
        %v1210 = vpop.f32.mrb[0].mxu0
        %v1211 = vadd.f32 %v1001, %v1210
        %v1212 = vpop.f32.mrb[0].mxu0
        %v1213 = vpop.f32.mrb[0].mxu0
        %v1214 = vadd.f32 %v1001, %v1213
        %v1215 = vpop.f32.mrb[0].mxu0
        %1216 = vdwg.mxu0
        %v1217 = vld [vmem:[%s713] sm:$0xf]
        %v1218 = vld [vmem:[%s713 + $0x4] sm:$0xf]
        %v1219 = vld [vmem:[%s713 + $0x8] sm:$0xf]
        %v1220 = vld [vmem:[%s713 + $0xc] sm:$0xf]
        %v1221 = vld [vmem:[%s713 + $0x10] sm:$0xf]
        %v1222 = vld [vmem:[%s713 + $0x14] sm:$0xf]
        %v1223 = vld [vmem:[%s713 + $0x18] sm:$0xf]
        %v1224 = vld [vmem:[%s713 + $0x1c] sm:$0xf]
        %v1225 = vld [vmem:[%s713 + $0x20] sm:$0xf]
        %v1226 = vld [vmem:[%s713 + $0x24] sm:$0xf]
        %v1227 = vld [vmem:[%s713 + $0x28] sm:$0xf]
        %v1228 = vld [vmem:[%s713 + $0x2c] sm:$0xf]
        %v1229 = vld [vmem:[%s713 + $0x30] sm:$0xf]
        %v1230 = vld [vmem:[%s713 + $0x34] sm:$0xf]
        %v1231 = vld [vmem:[%s713 + $0x38] sm:$0xf]
        %v1232 = vld [vmem:[%s713 + $0x3c] sm:$0xf]
        %vm1233 = vcmask 261120
        %v1235 = vsel %vm1233, %v1168, 0
        %v1238 = vsel %vm1233, %v1172, 0
        %v1241 = vsel %vm1233, %v1170, 0
        %v1244 = vsel %vm1233, %v1174, 0
        %1246 = vmatprep.subr.mxu0 0.0
        %1247 = vmatpush1.xpose.msra.mxu0 %v1241
        %1248 = vmatprep.subr.mxu0 0.0
        %1249 = vmatpush1.xpose.msra.mxu0 %v1244
        %1250 = vmatprep.subr.mxu0 0.0
        %1251 = vmatpush1.xpose.msra.mxu0 0.0
        %1252 = vmatprep.subr.mxu0 0.0
        %1253 = vmatpush1.xpose.msra.mxu0 0.0
        %1254 = vmatprep.subr.mxu0 0.0
        %1255 = vmatpush1.xpose.msra.mxu0 0.0
        %1256 = vmatprep.subr.mxu0 0.0
        %1257 = vmatpush1.xpose.msra.mxu0 0.0
        %1258 = vmatprep.subr.mxu0 0.0
        %1259 = vmatpush1.xpose.msra.mxu0 0.0
        %1260 = vmatprep.subr.mxu0 0.0
        %1261 = vmatpush1.xpose.msra.mxu0 0.0
        %1262 = vmatprep.subr.mxu0 0.0
        %1263 = vmatpush1.xpose.msra.mxu0 0.0
        %1264 = vmatprep.subr.mxu0 0.0
        %1265 = vmatpush1.xpose.msra.mxu0 0.0
        %1266 = vmatprep.subr.mxu0 0.0
        %1267 = vmatpush1.xpose.msra.mxu0 0.0
        %1268 = vmatprep.subr.mxu0 0.0
        %1269 = vmatpush1.xpose.msra.mxu0 0.0
        %1270 = vmatprep.subr.mxu0 0.0
        %1271 = vmatpush1.xpose.msra.mxu0 0.0
        %1272 = vmatprep.subr.mxu0 0.0
        %1273 = vmatpush1.xpose.msra.mxu0 0.0
        %1274 = vmatprep.subr.mxu0 0.0
        %1275 = vmatpush1.xpose.msra.mxu0 0.0
        %1276 = vmatprep.subr.mxu0 0.0
        %1277 = vmatpush1.xpose.msra.mxu0 0.0
        %1278 = vmatprep.subr.mxu0 0.0
        %1279 = vmatpush1.xpose.msra.mxu0 0.0
        %1280 = vmatprep.subr.mxu0 0.0
        %1281 = vmatpush1.xpose.msra.mxu0 0.0
        %1282 = vmatprep.subr.mxu0 0.0
        %1283 = vmatpush1.xpose.msra.mxu0 0.0
        %1284 = vmatprep.subr.mxu0 0.0
        %1285 = vmatpush1.xpose.msra.mxu0 0.0
        %1286 = vmatprep.subr.mxu0 0.0
        %1287 = vmatpush1.xpose.msra.mxu0 0.0
        %1288 = vmatprep.subr.mxu0 0.0
        %1289 = vmatpush1.xpose.msra.mxu0 0.0
        %1290 = vmatprep.subr.mxu0 0.0
        %1291 = vmatpush1.xpose.msra.mxu0 0.0
        %1292 = vmatprep.subr.mxu0 0.0
        %1293 = vmatpush1.xpose.msra.mxu0 0.0
        %1294 = vmatprep.subr.mxu0 0.0
        %1295 = vmatpush1.xpose.msra.mxu0 0.0
        %1296 = vmatprep.subr.mxu0 0.0
        %1297 = vmatpush1.xpose.msra.mxu0 0.0
        %1298 = vmatprep.subr.mxu0 0.0
        %1299 = vmatpush1.xpose.msra.mxu0 0.0
        %1300 = vmatprep.subr.mxu0 0.0
        %1301 = vmatpush1.xpose.msra.mxu0 0.0
        %1302 = vmatprep.subr.mxu0 0.0
        %1303 = vmatpush1.xpose.msra.mxu0 0.0
        %1304 = vmatprep.subr.mxu0 0.0
        %1305 = vmatpush1.xpose.msra.mxu0 0.0
        %1306 = vmatprep.subr.mxu0 0.0
        %1307 = vmatpush1.xpose.msra.mxu0 0.0
        %1308 = vmatprep.subr.mxu0 0.0
        %1309 = vmatpush1.xpose.msra.mxu0 0.0
        %1310 = vmatprep.mubr.f32.mxu0 0.0
        %1311 = vmatmul.mubr.f32.gmra.mrb[0].mxu0 %v1235
        %v1312 = vpop.f32.mrb[0].mxu0
        %v1313 = vadd.f32 %v912, %v1312
        %v1314 = vpop.f32.mrb[0].mxu0
        %1315 = vmatprep.mubr.f32.mxu0 0.0
        %1316 = vmatmul.mubr.f32.gmra.mrb[0].mxu0 %v1238
        %v1317 = vpop.f32.mrb[0].mxu0
        %v1318 = vadd.f32 %v913, %v1317
        %v1319 = vpop.f32.mrb[0].mxu0
        %1320 = vdwg.mxu0
        %vm1321 = vcmask 130048
        %v1322 = vsel %vm1321, %v1313, -inf
        %1323 = vmax.xlane.f32.xlu0 %v1322
        %v1324 = vpop.xlane.xlu0 %1323
        %v1325 = vsel %vm1321, %v1318, -inf
        %1326 = vmax.xlane.f32.xlu0 %v1325
        %v1327 = vpop.xlane.xlu0 %1326
        %v1328 = vsub.f32 %v1313, %v1324
        %v1329 = vsub.f32 %v1318, %v1327
        %v1330 = vmul.f32 %v1328, 1.442695
        %v1331 = vpow.pop %v1330
        %v1332 = vmul.f32 %v1329, 1.442695
        %v1333 = vpow.pop %v1332
        %v1334 = vsel %vm1321, %v1331, 0.0
        %1335 = vadd.xlane.f32.xlu0 %v1334
        %v1336 = vpop.xlane.xlu0 %1335
        %v1337 = vsel %vm1321, %v1333, 0.0
        %1338 = vadd.xlane.f32.xlu0 %v1337
        %v1339 = vpop.xlane.xlu0 %1338
        %v1340 = vrcp.pop %v1336
        %v1341 = vrcp.pop %v1339
        %v1342 = vmul.f32 %v1331, %v1340
        %v1343 = vmul.f32 %v1333, %v1341
        %v1345 = vsel %vm1321, %v1342, 0
        %v1348 = vsel %vm1321, %v1343, 0
        %1350 = vmatprep.subr.mxu0 0.0
        %1351 = vmatpush1.msra.mxu0 %v1211
        %1352 = vmatprep.subr.mxu0 0.0
        %1353 = vmatpush1.msra.mxu0 %v1214
        %1354 = vmatprep.subr.mxu0 0.0
        %1355 = vmatpush1.msra.mxu0 0.0
        %1356 = vmatprep.subr.mxu0 0.0
        %1357 = vmatpush1.msra.mxu0 0.0
        %1358 = vmatprep.subr.mxu0 0.0
        %1359 = vmatpush1.msra.mxu0 0.0
        %1360 = vmatprep.subr.mxu0 0.0
        %1361 = vmatpush1.msra.mxu0 0.0
        %1362 = vmatprep.subr.mxu0 0.0
        %1363 = vmatpush1.msra.mxu0 0.0
        %1364 = vmatprep.subr.mxu0 0.0
        %1365 = vmatpush1.msra.mxu0 0.0
        %1366 = vmatprep.subr.mxu0 0.0
        %1367 = vmatpush1.msra.mxu0 0.0
        %1368 = vmatprep.subr.mxu0 0.0
        %1369 = vmatpush1.msra.mxu0 0.0
        %1370 = vmatprep.subr.mxu0 0.0
        %1371 = vmatpush1.msra.mxu0 0.0
        %1372 = vmatprep.subr.mxu0 0.0
        %1373 = vmatpush1.msra.mxu0 0.0
        %1374 = vmatprep.subr.mxu0 0.0
        %1375 = vmatpush1.msra.mxu0 0.0
        %1376 = vmatprep.subr.mxu0 0.0
        %1377 = vmatpush1.msra.mxu0 0.0
        %1378 = vmatprep.subr.mxu0 0.0
        %1379 = vmatpush1.msra.mxu0 0.0
        %1380 = vmatprep.subr.mxu0 0.0
        %1381 = vmatpush1.msra.mxu0 0.0
        %1382 = vmatprep.subr.mxu0 0.0
        %1383 = vmatpush1.msra.mxu0 0.0
        %1384 = vmatprep.subr.mxu0 0.0
        %1385 = vmatpush1.msra.mxu0 0.0
        %1386 = vmatprep.subr.mxu0 0.0
        %1387 = vmatpush1.msra.mxu0 0.0
        %1388 = vmatprep.subr.mxu0 0.0
        %1389 = vmatpush1.msra.mxu0 0.0
        %1390 = vmatprep.subr.mxu0 0.0
        %1391 = vmatpush1.msra.mxu0 0.0
        %1392 = vmatprep.subr.mxu0 0.0
        %1393 = vmatpush1.msra.mxu0 0.0
        %1394 = vmatprep.subr.mxu0 0.0
        %1395 = vmatpush1.msra.mxu0 0.0
        %1396 = vmatprep.subr.mxu0 0.0
        %1397 = vmatpush1.msra.mxu0 0.0
        %1398 = vmatprep.subr.mxu0 0.0
        %1399 = vmatpush1.msra.mxu0 0.0
        %1400 = vmatprep.subr.mxu0 0.0
        %1401 = vmatpush1.msra.mxu0 0.0
        %1402 = vmatprep.subr.mxu0 0.0
        %1403 = vmatpush1.msra.mxu0 0.0
        %1404 = vmatprep.subr.mxu0 0.0
        %1405 = vmatpush1.msra.mxu0 0.0
        %1406 = vmatprep.subr.mxu0 0.0
        %1407 = vmatpush1.msra.mxu0 0.0
        %1408 = vmatprep.subr.mxu0 0.0
        %1409 = vmatpush1.msra.mxu0 0.0
        %1410 = vmatprep.subr.mxu0 0.0
        %1411 = vmatpush1.msra.mxu0 0.0
        %1412 = vmatprep.subr.mxu0 0.0
        %1413 = vmatpush1.msra.mxu0 0.0
        %1414 = vmatprep.mubr.f32.mxu0 0.0
        %1415 = vmatmul.mubr.f32.gmra.mrb[0].mxu0 %v1345
        %v1416 = vpop.f32.mrb[0].mxu0
        %v1417 = vadd.f32 0.0, %v1416
        %v1418 = vpop.f32.mrb[0].mxu0
        %1419 = vmatprep.mubr.f32.mxu0 0.0
        %1420 = vmatmul.mubr.f32.gmra.mrb[0].mxu0 %v1348
        %v1421 = vpop.f32.mrb[0].mxu0
        %v1422 = vadd.f32 0.0, %v1421
        %v1423 = vpop.f32.mrb[0].mxu0
        %1424 = vdwg.mxu0
        %v1425 = vpack.c.bf16 %v1422, %v1417
        %1426 = vrot.lane.b32.xlu0 %v1168, 96
        %v1427 = vpop.permute.xlu0 %1426
        %1428 = vrot.lane.b32.xlu0 %v1172, 96
        %v1429 = vpop.permute.xlu0 %1428
        %1430 = vrot.lane.b32.xlu0 %v1170, 96
        %v1431 = vpop.permute.xlu0 %1430
        %1432 = vrot.lane.b32.xlu0 %v1174, 96
        %v1433 = vpop.permute.xlu0 %1432
        %v1434 = vsel %vm1233, %v1427, 0
        %v1436 = vsel %vm1233, %v1429, 0
        %v1438 = vsel %vm1233, %v1431, 0
        %v1440 = vsel %vm1233, %v1433, 0
        %1442 = vmatprep.subr.mxu0 0.0
        %1443 = vmatpush1.xpose.msra.mxu0 %v1438
        %1444 = vmatprep.subr.mxu0 0.0
        %1445 = vmatpush1.xpose.msra.mxu0 %v1440
        %1446 = vmatprep.subr.mxu0 0.0
        %1447 = vmatpush1.xpose.msra.mxu0 0.0
        %1448 = vmatprep.subr.mxu0 0.0
        %1449 = vmatpush1.xpose.msra.mxu0 0.0
        %1450 = vmatprep.subr.mxu0 0.0
        %1451 = vmatpush1.xpose.msra.mxu0 0.0
        %1452 = vmatprep.subr.mxu0 0.0
        %1453 = vmatpush1.xpose.msra.mxu0 0.0
        %1454 = vmatprep.subr.mxu0 0.0
        %1455 = vmatpush1.xpose.msra.mxu0 0.0
        %1456 = vmatprep.subr.mxu0 0.0
        %1457 = vmatpush1.xpose.msra.mxu0 0.0
        %1458 = vmatprep.subr.mxu0 0.0
        %1459 = vmatpush1.xpose.msra.mxu0 0.0
        %1460 = vmatprep.subr.mxu0 0.0
        %1461 = vmatpush1.xpose.msra.mxu0 0.0
        %1462 = vmatprep.subr.mxu0 0.0
        %1463 = vmatpush1.xpose.msra.mxu0 0.0
        %1464 = vmatprep.subr.mxu0 0.0
        %1465 = vmatpush1.xpose.msra.mxu0 0.0
        %1466 = vmatprep.subr.mxu0 0.0
        %1467 = vmatpush1.xpose.msra.mxu0 0.0
        %1468 = vmatprep.subr.mxu0 0.0
        %1469 = vmatpush1.xpose.msra.mxu0 0.0
        %1470 = vmatprep.subr.mxu0 0.0
        %1471 = vmatpush1.xpose.msra.mxu0 0.0
        %1472 = vmatprep.subr.mxu0 0.0
        %1473 = vmatpush1.xpose.msra.mxu0 0.0
        %1474 = vmatprep.subr.mxu0 0.0
        %1475 = vmatpush1.xpose.msra.mxu0 0.0
        %1476 = vmatprep.subr.mxu0 0.0
        %1477 = vmatpush1.xpose.msra.mxu0 0.0
        %1478 = vmatprep.subr.mxu0 0.0
        %1479 = vmatpush1.xpose.msra.mxu0 0.0
        %1480 = vmatprep.subr.mxu0 0.0
        %1481 = vmatpush1.xpose.msra.mxu0 0.0
        %1482 = vmatprep.subr.mxu0 0.0
        %1483 = vmatpush1.xpose.msra.mxu0 0.0
        %1484 = vmatprep.subr.mxu0 0.0
        %1485 = vmatpush1.xpose.msra.mxu0 0.0
        %1486 = vmatprep.subr.mxu0 0.0
        %1487 = vmatpush1.xpose.msra.mxu0 0.0
        %1488 = vmatprep.subr.mxu0 0.0
        %1489 = vmatpush1.xpose.msra.mxu0 0.0
        %1490 = vmatprep.subr.mxu0 0.0
        %1491 = vmatpush1.xpose.msra.mxu0 0.0
        %1492 = vmatprep.subr.mxu0 0.0
        %1493 = vmatpush1.xpose.msra.mxu0 0.0
        %1494 = vmatprep.subr.mxu0 0.0
        %1495 = vmatpush1.xpose.msra.mxu0 0.0
        %1496 = vmatprep.subr.mxu0 0.0
        %1497 = vmatpush1.xpose.msra.mxu0 0.0
        %1498 = vmatprep.subr.mxu0 0.0
        %1499 = vmatpush1.xpose.msra.mxu0 0.0
        %1500 = vmatprep.subr.mxu0 0.0
        %1501 = vmatpush1.xpose.msra.mxu0 0.0
        %1502 = vmatprep.subr.mxu0 0.0
        %1503 = vmatpush1.xpose.msra.mxu0 0.0
        %1504 = vmatprep.subr.mxu0 0.0
        %1505 = vmatpush1.xpose.msra.mxu0 0.0
        %1506 = vmatprep.mubr.f32.mxu0 0.0
        %1507 = vmatmul.mubr.f32.gmra.mrb[0].mxu0 %v1434
        %v1508 = vpop.f32.mrb[0].mxu0
        %v1509 = vadd.f32 %v912, %v1508
        %v1510 = vpop.f32.mrb[0].mxu0
        %1511 = vmatprep.mubr.f32.mxu0 0.0
        %1512 = vmatmul.mubr.f32.gmra.mrb[0].mxu0 %v1436
        %v1513 = vpop.f32.mrb[0].mxu0
        %v1514 = vadd.f32 %v913, %v1513
        %v1515 = vpop.f32.mrb[0].mxu0
        %1516 = vdwg.mxu0
        %v1517 = vsel %vm1321, %v1509, -inf
        %1518 = vmax.xlane.f32.xlu0 %v1517
        %v1519 = vpop.xlane.xlu0 %1518
        %v1520 = vsel %vm1321, %v1514, -inf
        %1521 = vmax.xlane.f32.xlu0 %v1520
        %v1522 = vpop.xlane.xlu0 %1521
        %v1523 = vsub.f32 %v1509, %v1519
        %v1524 = vsub.f32 %v1514, %v1522
        %v1525 = vmul.f32 %v1523, 1.442695
        %v1526 = vpow.pop %v1525
        %v1527 = vmul.f32 %v1524, 1.442695
        %v1528 = vpow.pop %v1527
        %v1529 = vsel %vm1321, %v1526, 0.0
        %1530 = vadd.xlane.f32.xlu0 %v1529
        %v1531 = vpop.xlane.xlu0 %1530
        %v1532 = vsel %vm1321, %v1528, 0.0
        %1533 = vadd.xlane.f32.xlu0 %v1532
        %v1534 = vpop.xlane.xlu0 %1533
        %v1535 = vrcp.pop %v1531
        %v1536 = vrcp.pop %v1534
        %v1537 = vmul.f32 %v1526, %v1535
        %v1538 = vmul.f32 %v1528, %v1536
        %1541 = vrot.lane.b32.xlu0 %v1211, 96
        %v1542 = vpop.permute.xlu0 %1541
        %1543 = vrot.lane.b32.xlu0 %v1214, 96
        %v1544 = vpop.permute.xlu0 %1543
        %v1548 = vsel %vm1321, %v1537, 0
        %v1551 = vsel %vm1321, %v1538, 0
        %1553 = vmatprep.subr.mxu0 0.0
        %1554 = vmatpush1.msra.mxu0 %v1542
        %1555 = vmatprep.subr.mxu0 0.0
        %1556 = vmatpush1.msra.mxu0 %v1544
        %1557 = vmatprep.subr.mxu0 0.0
        %1558 = vmatpush1.msra.mxu0 0.0
        %1559 = vmatprep.subr.mxu0 0.0
        %1560 = vmatpush1.msra.mxu0 0.0
        %1561 = vmatprep.subr.mxu0 0.0
        %1562 = vmatpush1.msra.mxu0 0.0
        %1563 = vmatprep.subr.mxu0 0.0
        %1564 = vmatpush1.msra.mxu0 0.0
        %1565 = vmatprep.subr.mxu0 0.0
        %1566 = vmatpush1.msra.mxu0 0.0
        %1567 = vmatprep.subr.mxu0 0.0
        %1568 = vmatpush1.msra.mxu0 0.0
        %1569 = vmatprep.subr.mxu0 0.0
        %1570 = vmatpush1.msra.mxu0 0.0
        %1571 = vmatprep.subr.mxu0 0.0
        %1572 = vmatpush1.msra.mxu0 0.0
        %1573 = vmatprep.subr.mxu0 0.0
        %1574 = vmatpush1.msra.mxu0 0.0
        %1575 = vmatprep.subr.mxu0 0.0
        %1576 = vmatpush1.msra.mxu0 0.0
        %1577 = vmatprep.subr.mxu0 0.0
        %1578 = vmatpush1.msra.mxu0 0.0
        %1579 = vmatprep.subr.mxu0 0.0
        %1580 = vmatpush1.msra.mxu0 0.0
        %1581 = vmatprep.subr.mxu0 0.0
        %1582 = vmatpush1.msra.mxu0 0.0
        %1583 = vmatprep.subr.mxu0 0.0
        %1584 = vmatpush1.msra.mxu0 0.0
        %1585 = vmatprep.subr.mxu0 0.0
        %1586 = vmatpush1.msra.mxu0 0.0
        %1587 = vmatprep.subr.mxu0 0.0
        %1588 = vmatpush1.msra.mxu0 0.0
        %1589 = vmatprep.subr.mxu0 0.0
        %1590 = vmatpush1.msra.mxu0 0.0
        %1591 = vmatprep.subr.mxu0 0.0
        %1592 = vmatpush1.msra.mxu0 0.0
        %1593 = vmatprep.subr.mxu0 0.0
        %1594 = vmatpush1.msra.mxu0 0.0
        %1595 = vmatprep.subr.mxu0 0.0
        %1596 = vmatpush1.msra.mxu0 0.0
        %1597 = vmatprep.subr.mxu0 0.0
        %1598 = vmatpush1.msra.mxu0 0.0
        %1599 = vmatprep.subr.mxu0 0.0
        %1600 = vmatpush1.msra.mxu0 0.0
        %1601 = vmatprep.subr.mxu0 0.0
        %1602 = vmatpush1.msra.mxu0 0.0
        %1603 = vmatprep.subr.mxu0 0.0
        %1604 = vmatpush1.msra.mxu0 0.0
        %1605 = vmatprep.subr.mxu0 0.0
        %1606 = vmatpush1.msra.mxu0 0.0
        %1607 = vmatprep.subr.mxu0 0.0
        %1608 = vmatpush1.msra.mxu0 0.0
        %1609 = vmatprep.subr.mxu0 0.0
        %1610 = vmatpush1.msra.mxu0 0.0
        %1611 = vmatprep.subr.mxu0 0.0
        %1612 = vmatpush1.msra.mxu0 0.0
        %1613 = vmatprep.subr.mxu0 0.0
        %1614 = vmatpush1.msra.mxu0 0.0
        %1615 = vmatprep.subr.mxu0 0.0
        %1616 = vmatpush1.msra.mxu0 0.0
        %1617 = vmatprep.mubr.f32.mxu0 0.0
        %1618 = vmatmul.mubr.f32.gmra.mrb[0].mxu0 %v1548
        %v1619 = vpop.f32.mrb[0].mxu0
        %v1620 = vadd.f32 0.0, %v1619
        %v1621 = vpop.f32.mrb[0].mxu0
        %1622 = vmatprep.mubr.f32.mxu0 0.0
        %1623 = vmatmul.mubr.f32.gmra.mrb[0].mxu0 %v1551
        %v1624 = vpop.f32.mrb[0].mxu0
        %v1625 = vadd.f32 0.0, %v1624
        %v1626 = vpop.f32.mrb[0].mxu0
        %1627 = vdwg.mxu0
        %v1628 = vpack.c.bf16 %v1625, %v1620
        %v1633 = vunpack.c.l.b16 %v1221
        %v1634 = vunpack.c.l.b16 %v1222
        %v1635 = vunpack.c.l.b16 %v1223
        %v1636 = vunpack.c.l.b16 %v1224
        %v1637 = vpack.c.b16 %v1634, %v1633
        %v1638 = vpack.c.b16 %v1636, %v1635
        %v1642 = vsel %vm1233, %v1628, 0
        %1644 = vmatprep.subr.bf16.mxu0 0
        %1645 = vmatpush1.bf16.msra.mxu0 %v1637
        %1646 = vmatprep.subr.bf16.mxu0 0
        %1647 = vmatpush1.bf16.msra.mxu0 %v1638
        %1648 = vmatprep.subr.bf16.mxu0 0
        %1649 = vmatpush1.bf16.msra.mxu0 0
        %1650 = vmatprep.subr.bf16.mxu0 0
        %1651 = vmatpush1.bf16.msra.mxu0 0
        %1652 = vmatprep.subr.bf16.mxu0 0
        %1653 = vmatpush1.bf16.msra.mxu0 0
        %1654 = vmatprep.subr.bf16.mxu0 0
        %1655 = vmatpush1.bf16.msra.mxu0 0
        %1656 = vmatprep.subr.bf16.mxu0 0
        %1657 = vmatpush1.bf16.msra.mxu0 0
        %1658 = vmatprep.subr.bf16.mxu0 0
        %1659 = vmatpush1.bf16.msra.mxu0 0
        %1660 = vmatprep.subr.bf16.mxu0 0
        %1661 = vmatpush1.bf16.msra.mxu0 0
        %1662 = vmatprep.subr.bf16.mxu0 0
        %1663 = vmatpush1.bf16.msra.mxu0 0
        %1664 = vmatprep.subr.bf16.mxu0 0
        %1665 = vmatpush1.bf16.msra.mxu0 0
        %1666 = vmatprep.subr.bf16.mxu0 0
        %1667 = vmatpush1.bf16.msra.mxu0 0
        %1668 = vmatprep.subr.bf16.mxu0 0
        %1669 = vmatpush1.bf16.msra.mxu0 0
        %1670 = vmatprep.subr.bf16.mxu0 0
        %1671 = vmatpush1.bf16.msra.mxu0 0
        %1672 = vmatprep.subr.bf16.mxu0 0
        %1673 = vmatpush1.bf16.msra.mxu0 0
        %1674 = vmatprep.subr.bf16.mxu0 0
        %1675 = vmatpush1.bf16.msra.mxu0 0
        %1676 = vmatprep.mubr.bf16.mxu0 0
        %1677 = vmatmul.mubr.bf16.gmra.mrb[0].mxu0 %v1642
        %v1678 = vpop.f32.mrb[0].mxu0
        %v1679 = vadd.f32 0.0, %v1678
        %v1680 = vpop.f32.mrb[0].mxu0
        %v1681 = vpop.f32.mrb[0].mxu0
        %v1682 = vadd.f32 0.0, %v1681
        %v1683 = vpop.f32.mrb[0].mxu0
        %1684 = vdwg.mxu0
        %v1689 = vunpack.c.l.b16 %v1217
        %v1690 = vunpack.c.l.b16 %v1218
        %v1691 = vunpack.c.l.b16 %v1219
        %v1692 = vunpack.c.l.b16 %v1220
        %v1693 = vpack.c.b16 %v1690, %v1689
        %v1694 = vpack.c.b16 %v1692, %v1691
        %v1698 = vsel %vm1233, %v1425, 0
        %1700 = vmatprep.subr.bf16.mxu0 0
        %1701 = vmatpush1.bf16.msra.mxu0 %v1693
        %1702 = vmatprep.subr.bf16.mxu0 0
        %1703 = vmatpush1.bf16.msra.mxu0 %v1694
        %1704 = vmatprep.subr.bf16.mxu0 0
        %1705 = vmatpush1.bf16.msra.mxu0 0
        %1706 = vmatprep.subr.bf16.mxu0 0
        %1707 = vmatpush1.bf16.msra.mxu0 0
        %1708 = vmatprep.subr.bf16.mxu0 0
        %1709 = vmatpush1.bf16.msra.mxu0 0
        %1710 = vmatprep.subr.bf16.mxu0 0
        %1711 = vmatpush1.bf16.msra.mxu0 0
        %1712 = vmatprep.subr.bf16.mxu0 0
        %1713 = vmatpush1.bf16.msra.mxu0 0
        %1714 = vmatprep.subr.bf16.mxu0 0
        %1715 = vmatpush1.bf16.msra.mxu0 0
        %1716 = vmatprep.subr.bf16.mxu0 0
        %1717 = vmatpush1.bf16.msra.mxu0 0
        %1718 = vmatprep.subr.bf16.mxu0 0
        %1719 = vmatpush1.bf16.msra.mxu0 0
        %1720 = vmatprep.subr.bf16.mxu0 0
        %1721 = vmatpush1.bf16.msra.mxu0 0
        %1722 = vmatprep.subr.bf16.mxu0 0
        %1723 = vmatpush1.bf16.msra.mxu0 0
        %1724 = vmatprep.subr.bf16.mxu0 0
        %1725 = vmatpush1.bf16.msra.mxu0 0
        %1726 = vmatprep.subr.bf16.mxu0 0
        %1727 = vmatpush1.bf16.msra.mxu0 0
        %1728 = vmatprep.subr.bf16.mxu0 0
        %1729 = vmatpush1.bf16.msra.mxu0 0
        %1730 = vmatprep.subr.bf16.mxu0 0
        %1731 = vmatpush1.bf16.msra.mxu0 0
        %1732 = vmatprep.mubr.bf16.mxu0 0
        %1733 = vmatmul.mubr.bf16.gmra.mrb[0].mxu0 %v1698
        %v1734 = vpop.f32.mrb[0].mxu0
        %v1735 = vadd.f32 %v1679, %v1734
        %v1736 = vpop.f32.mrb[0].mxu0
        %v1737 = vpop.f32.mrb[0].mxu0
        %v1738 = vadd.f32 %v1682, %v1737
        %v1739 = vpop.f32.mrb[0].mxu0
        %1740 = vdwg.mxu0
        %1741 = vrot.lane.b32.xlu0 %v1168, 64
        %v1742 = vpop.permute.xlu0 %1741
        %1743 = vrot.lane.b32.xlu0 %v1172, 64
        %v1744 = vpop.permute.xlu0 %1743
        %1745 = vrot.lane.b32.xlu0 %v1170, 64
        %v1746 = vpop.permute.xlu0 %1745
        %1747 = vrot.lane.b32.xlu0 %v1174, 64
        %v1748 = vpop.permute.xlu0 %1747
        %v1749 = vsel %vm1233, %v1742, 0
        %v1751 = vsel %vm1233, %v1744, 0
        %v1753 = vsel %vm1233, %v1746, 0
        %v1755 = vsel %vm1233, %v1748, 0
        %1757 = vmatprep.subr.mxu0 0.0
        %1758 = vmatpush1.xpose.msra.mxu0 %v1753
        %1759 = vmatprep.subr.mxu0 0.0
        %1760 = vmatpush1.xpose.msra.mxu0 %v1755
        %1761 = vmatprep.subr.mxu0 0.0
        %1762 = vmatpush1.xpose.msra.mxu0 0.0
        %1763 = vmatprep.subr.mxu0 0.0
        %1764 = vmatpush1.xpose.msra.mxu0 0.0
        %1765 = vmatprep.subr.mxu0 0.0
        %1766 = vmatpush1.xpose.msra.mxu0 0.0
        %1767 = vmatprep.subr.mxu0 0.0
        %1768 = vmatpush1.xpose.msra.mxu0 0.0
        %1769 = vmatprep.subr.mxu0 0.0
        %1770 = vmatpush1.xpose.msra.mxu0 0.0
        %1771 = vmatprep.subr.mxu0 0.0
        %1772 = vmatpush1.xpose.msra.mxu0 0.0
        %1773 = vmatprep.subr.mxu0 0.0
        %1774 = vmatpush1.xpose.msra.mxu0 0.0
        %1775 = vmatprep.subr.mxu0 0.0
        %1776 = vmatpush1.xpose.msra.mxu0 0.0
        %1777 = vmatprep.subr.mxu0 0.0
        %1778 = vmatpush1.xpose.msra.mxu0 0.0
        %1779 = vmatprep.subr.mxu0 0.0
        %1780 = vmatpush1.xpose.msra.mxu0 0.0
        %1781 = vmatprep.subr.mxu0 0.0
        %1782 = vmatpush1.xpose.msra.mxu0 0.0
        %1783 = vmatprep.subr.mxu0 0.0
        %1784 = vmatpush1.xpose.msra.mxu0 0.0
        %1785 = vmatprep.subr.mxu0 0.0
        %1786 = vmatpush1.xpose.msra.mxu0 0.0
        %1787 = vmatprep.subr.mxu0 0.0
        %1788 = vmatpush1.xpose.msra.mxu0 0.0
        %1789 = vmatprep.subr.mxu0 0.0
        %1790 = vmatpush1.xpose.msra.mxu0 0.0
        %1791 = vmatprep.subr.mxu0 0.0
        %1792 = vmatpush1.xpose.msra.mxu0 0.0
        %1793 = vmatprep.subr.mxu0 0.0
        %1794 = vmatpush1.xpose.msra.mxu0 0.0
        %1795 = vmatprep.subr.mxu0 0.0
        %1796 = vmatpush1.xpose.msra.mxu0 0.0
        %1797 = vmatprep.subr.mxu0 0.0
        %1798 = vmatpush1.xpose.msra.mxu0 0.0
        %1799 = vmatprep.subr.mxu0 0.0
        %1800 = vmatpush1.xpose.msra.mxu0 0.0
        %1801 = vmatprep.subr.mxu0 0.0
        %1802 = vmatpush1.xpose.msra.mxu0 0.0
        %1803 = vmatprep.subr.mxu0 0.0
        %1804 = vmatpush1.xpose.msra.mxu0 0.0
        %1805 = vmatprep.subr.mxu0 0.0
        %1806 = vmatpush1.xpose.msra.mxu0 0.0
        %1807 = vmatprep.subr.mxu0 0.0
        %1808 = vmatpush1.xpose.msra.mxu0 0.0
        %1809 = vmatprep.subr.mxu0 0.0
        %1810 = vmatpush1.xpose.msra.mxu0 0.0
        %1811 = vmatprep.subr.mxu0 0.0
        %1812 = vmatpush1.xpose.msra.mxu0 0.0
        %1813 = vmatprep.subr.mxu0 0.0
        %1814 = vmatpush1.xpose.msra.mxu0 0.0
        %1815 = vmatprep.subr.mxu0 0.0
        %1816 = vmatpush1.xpose.msra.mxu0 0.0
        %1817 = vmatprep.subr.mxu0 0.0
        %1818 = vmatpush1.xpose.msra.mxu0 0.0
        %1819 = vmatprep.subr.mxu0 0.0
        %1820 = vmatpush1.xpose.msra.mxu0 0.0
        %1821 = vmatprep.mubr.f32.mxu0 0.0
        %1822 = vmatmul.mubr.f32.gmra.mrb[0].mxu0 %v1749
        %v1823 = vpop.f32.mrb[0].mxu0
        %v1824 = vadd.f32 %v912, %v1823
        %v1825 = vpop.f32.mrb[0].mxu0
        %1826 = vmatprep.mubr.f32.mxu0 0.0
        %1827 = vmatmul.mubr.f32.gmra.mrb[0].mxu0 %v1751
        %v1828 = vpop.f32.mrb[0].mxu0
        %v1829 = vadd.f32 %v913, %v1828
        %v1830 = vpop.f32.mrb[0].mxu0
        %1831 = vdwg.mxu0
        %v1832 = vsel %vm1321, %v1824, -inf
        %1833 = vmax.xlane.f32.xlu0 %v1832
        %v1834 = vpop.xlane.xlu0 %1833
        %v1835 = vsel %vm1321, %v1829, -inf
        %1836 = vmax.xlane.f32.xlu0 %v1835
        %v1837 = vpop.xlane.xlu0 %1836
        %v1838 = vsub.f32 %v1824, %v1834
        %v1839 = vsub.f32 %v1829, %v1837
        %v1840 = vmul.f32 %v1838, 1.442695
        %v1841 = vpow.pop %v1840
        %v1842 = vmul.f32 %v1839, 1.442695
        %v1843 = vpow.pop %v1842
        %v1844 = vsel %vm1321, %v1841, 0.0
        %1845 = vadd.xlane.f32.xlu0 %v1844
        %v1846 = vpop.xlane.xlu0 %1845
        %v1847 = vsel %vm1321, %v1843, 0.0
        %1848 = vadd.xlane.f32.xlu0 %v1847
        %v1849 = vpop.xlane.xlu0 %1848
        %v1850 = vrcp.pop %v1846
        %v1851 = vrcp.pop %v1849
        %v1852 = vmul.f32 %v1841, %v1850
        %v1853 = vmul.f32 %v1843, %v1851
        %1854 = vrot.lane.b32.xlu0 %v1211, 64
        %v1855 = vpop.permute.xlu0 %1854
        %1856 = vrot.lane.b32.xlu0 %v1214, 64
        %v1857 = vpop.permute.xlu0 %1856
        %v1861 = vsel %vm1321, %v1852, 0
        %v1864 = vsel %vm1321, %v1853, 0
        %1866 = vmatprep.subr.mxu0 0.0
        %1867 = vmatpush1.msra.mxu0 %v1855
        %1868 = vmatprep.subr.mxu0 0.0
        %1869 = vmatpush1.msra.mxu0 %v1857
        %1870 = vmatprep.subr.mxu0 0.0
        %1871 = vmatpush1.msra.mxu0 0.0
        %1872 = vmatprep.subr.mxu0 0.0
        %1873 = vmatpush1.msra.mxu0 0.0
        %1874 = vmatprep.subr.mxu0 0.0
        %1875 = vmatpush1.msra.mxu0 0.0
        %1876 = vmatprep.subr.mxu0 0.0
        %1877 = vmatpush1.msra.mxu0 0.0
        %1878 = vmatprep.subr.mxu0 0.0
        %1879 = vmatpush1.msra.mxu0 0.0
        %1880 = vmatprep.subr.mxu0 0.0
        %1881 = vmatpush1.msra.mxu0 0.0
        %1882 = vmatprep.subr.mxu0 0.0
        %1883 = vmatpush1.msra.mxu0 0.0
        %1884 = vmatprep.subr.mxu0 0.0
        %1885 = vmatpush1.msra.mxu0 0.0
        %1886 = vmatprep.subr.mxu0 0.0
        %1887 = vmatpush1.msra.mxu0 0.0
        %1888 = vmatprep.subr.mxu0 0.0
        %1889 = vmatpush1.msra.mxu0 0.0
        %1890 = vmatprep.subr.mxu0 0.0
        %1891 = vmatpush1.msra.mxu0 0.0
        %1892 = vmatprep.subr.mxu0 0.0
        %1893 = vmatpush1.msra.mxu0 0.0
        %1894 = vmatprep.subr.mxu0 0.0
        %1895 = vmatpush1.msra.mxu0 0.0
        %1896 = vmatprep.subr.mxu0 0.0
        %1897 = vmatpush1.msra.mxu0 0.0
        %1898 = vmatprep.subr.mxu0 0.0
        %1899 = vmatpush1.msra.mxu0 0.0
        %1900 = vmatprep.subr.mxu0 0.0
        %1901 = vmatpush1.msra.mxu0 0.0
        %1902 = vmatprep.subr.mxu0 0.0
        %1903 = vmatpush1.msra.mxu0 0.0
        %1904 = vmatprep.subr.mxu0 0.0
        %1905 = vmatpush1.msra.mxu0 0.0
        %1906 = vmatprep.subr.mxu0 0.0
        %1907 = vmatpush1.msra.mxu0 0.0
        %1908 = vmatprep.subr.mxu0 0.0
        %1909 = vmatpush1.msra.mxu0 0.0
        %1910 = vmatprep.subr.mxu0 0.0
        %1911 = vmatpush1.msra.mxu0 0.0
        %1912 = vmatprep.subr.mxu0 0.0
        %1913 = vmatpush1.msra.mxu0 0.0
        %1914 = vmatprep.subr.mxu0 0.0
        %1915 = vmatpush1.msra.mxu0 0.0
        %1916 = vmatprep.subr.mxu0 0.0
        %1917 = vmatpush1.msra.mxu0 0.0
        %1918 = vmatprep.subr.mxu0 0.0
        %1919 = vmatpush1.msra.mxu0 0.0
        %1920 = vmatprep.subr.mxu0 0.0
        %1921 = vmatpush1.msra.mxu0 0.0
        %1922 = vmatprep.subr.mxu0 0.0
        %1923 = vmatpush1.msra.mxu0 0.0
        %1924 = vmatprep.subr.mxu0 0.0
        %1925 = vmatpush1.msra.mxu0 0.0
        %1926 = vmatprep.subr.mxu0 0.0
        %1927 = vmatpush1.msra.mxu0 0.0
        %1928 = vmatprep.subr.mxu0 0.0
        %1929 = vmatpush1.msra.mxu0 0.0
        %1930 = vmatprep.mubr.f32.mxu0 0.0
        %1931 = vmatmul.mubr.f32.gmra.mrb[0].mxu0 %v1861
        %v1932 = vpop.f32.mrb[0].mxu0
        %v1933 = vadd.f32 0.0, %v1932
        %v1934 = vpop.f32.mrb[0].mxu0
        %1935 = vmatprep.mubr.f32.mxu0 0.0
        %1936 = vmatmul.mubr.f32.gmra.mrb[0].mxu0 %v1864
        %v1937 = vpop.f32.mrb[0].mxu0
        %v1938 = vadd.f32 0.0, %v1937
        %v1939 = vpop.f32.mrb[0].mxu0
        %1940 = vdwg.mxu0
        %v1941 = vpack.c.bf16 %v1938, %v1933
        %v1946 = vunpack.c.l.b16 %v1225
        %v1947 = vunpack.c.l.b16 %v1226
        %v1948 = vunpack.c.l.b16 %v1227
        %v1949 = vunpack.c.l.b16 %v1228
        %v1950 = vpack.c.b16 %v1947, %v1946
        %v1951 = vpack.c.b16 %v1949, %v1948
        %v1955 = vsel %vm1233, %v1941, 0
        %1957 = vmatprep.subr.bf16.mxu0 0
        %1958 = vmatpush1.bf16.msra.mxu0 %v1950
        %1959 = vmatprep.subr.bf16.mxu0 0
        %1960 = vmatpush1.bf16.msra.mxu0 %v1951
        %1961 = vmatprep.subr.bf16.mxu0 0
        %1962 = vmatpush1.bf16.msra.mxu0 0
        %1963 = vmatprep.subr.bf16.mxu0 0
        %1964 = vmatpush1.bf16.msra.mxu0 0
        %1965 = vmatprep.subr.bf16.mxu0 0
        %1966 = vmatpush1.bf16.msra.mxu0 0
        %1967 = vmatprep.subr.bf16.mxu0 0
        %1968 = vmatpush1.bf16.msra.mxu0 0
        %1969 = vmatprep.subr.bf16.mxu0 0
        %1970 = vmatpush1.bf16.msra.mxu0 0
        %1971 = vmatprep.subr.bf16.mxu0 0
        %1972 = vmatpush1.bf16.msra.mxu0 0
        %1973 = vmatprep.subr.bf16.mxu0 0
        %1974 = vmatpush1.bf16.msra.mxu0 0
        %1975 = vmatprep.subr.bf16.mxu0 0
        %1976 = vmatpush1.bf16.msra.mxu0 0
        %1977 = vmatprep.subr.bf16.mxu0 0
        %1978 = vmatpush1.bf16.msra.mxu0 0
        %1979 = vmatprep.subr.bf16.mxu0 0
        %1980 = vmatpush1.bf16.msra.mxu0 0
        %1981 = vmatprep.subr.bf16.mxu0 0
        %1982 = vmatpush1.bf16.msra.mxu0 0
        %1983 = vmatprep.subr.bf16.mxu0 0
        %1984 = vmatpush1.bf16.msra.mxu0 0
        %1985 = vmatprep.subr.bf16.mxu0 0
        %1986 = vmatpush1.bf16.msra.mxu0 0
        %1987 = vmatprep.subr.bf16.mxu0 0
        %1988 = vmatpush1.bf16.msra.mxu0 0
        %1989 = vmatprep.mubr.bf16.mxu0 0
        %1990 = vmatmul.mubr.bf16.gmra.mrb[0].mxu0 %v1955
        %v1991 = vpop.f32.mrb[0].mxu0
        %v1992 = vadd.f32 0.0, %v1991
        %v1993 = vpop.f32.mrb[0].mxu0
        %v1994 = vpop.f32.mrb[0].mxu0
        %v1995 = vadd.f32 0.0, %v1994
        %v1996 = vpop.f32.mrb[0].mxu0
        %1997 = vdwg.mxu0
        %v1998 = vadd.f32 %v1735, %v1992
        %v1999 = vadd.f32 %v1738, %v1995
        %2000 = vrot.lane.b32.xlu0 %v1168, 32
        %v2001 = vpop.permute.xlu0 %2000
        %2002 = vrot.lane.b32.xlu0 %v1172, 32
        %v2003 = vpop.permute.xlu0 %2002
        %2004 = vrot.lane.b32.xlu0 %v1170, 32
        %v2005 = vpop.permute.xlu0 %2004
        %2006 = vrot.lane.b32.xlu0 %v1174, 32
        %v2007 = vpop.permute.xlu0 %2006
        %v2008 = vsel %vm1233, %v2001, 0
        %v2010 = vsel %vm1233, %v2003, 0
        %v2012 = vsel %vm1233, %v2005, 0
        %v2014 = vsel %vm1233, %v2007, 0
        %2016 = vmatprep.subr.mxu0 0.0
        %2017 = vmatpush1.xpose.msra.mxu0 %v2012
        %2018 = vmatprep.subr.mxu0 0.0
        %2019 = vmatpush1.xpose.msra.mxu0 %v2014
        %2020 = vmatprep.subr.mxu0 0.0
        %2021 = vmatpush1.xpose.msra.mxu0 0.0
        %2022 = vmatprep.subr.mxu0 0.0
        %2023 = vmatpush1.xpose.msra.mxu0 0.0
        %2024 = vmatprep.subr.mxu0 0.0
        %2025 = vmatpush1.xpose.msra.mxu0 0.0
        %2026 = vmatprep.subr.mxu0 0.0
        %2027 = vmatpush1.xpose.msra.mxu0 0.0
        %2028 = vmatprep.subr.mxu0 0.0
        %2029 = vmatpush1.xpose.msra.mxu0 0.0
        %2030 = vmatprep.subr.mxu0 0.0
        %2031 = vmatpush1.xpose.msra.mxu0 0.0
        %2032 = vmatprep.subr.mxu0 0.0
        %2033 = vmatpush1.xpose.msra.mxu0 0.0
        %2034 = vmatprep.subr.mxu0 0.0
        %2035 = vmatpush1.xpose.msra.mxu0 0.0
        %2036 = vmatprep.subr.mxu0 0.0
        %2037 = vmatpush1.xpose.msra.mxu0 0.0
        %2038 = vmatprep.subr.mxu0 0.0
        %2039 = vmatpush1.xpose.msra.mxu0 0.0
        %2040 = vmatprep.subr.mxu0 0.0
        %2041 = vmatpush1.xpose.msra.mxu0 0.0
        %2042 = vmatprep.subr.mxu0 0.0
        %2043 = vmatpush1.xpose.msra.mxu0 0.0
        %2044 = vmatprep.subr.mxu0 0.0
        %2045 = vmatpush1.xpose.msra.mxu0 0.0
        %2046 = vmatprep.subr.mxu0 0.0
        %2047 = vmatpush1.xpose.msra.mxu0 0.0
        %2048 = vmatprep.subr.mxu0 0.0
        %2049 = vmatpush1.xpose.msra.mxu0 0.0
        %2050 = vmatprep.subr.mxu0 0.0
        %2051 = vmatpush1.xpose.msra.mxu0 0.0
        %2052 = vmatprep.subr.mxu0 0.0
        %2053 = vmatpush1.xpose.msra.mxu0 0.0
        %2054 = vmatprep.subr.mxu0 0.0
        %2055 = vmatpush1.xpose.msra.mxu0 0.0
        %2056 = vmatprep.subr.mxu0 0.0
        %2057 = vmatpush1.xpose.msra.mxu0 0.0
        %2058 = vmatprep.subr.mxu0 0.0
        %2059 = vmatpush1.xpose.msra.mxu0 0.0
        %2060 = vmatprep.subr.mxu0 0.0
        %2061 = vmatpush1.xpose.msra.mxu0 0.0
        %2062 = vmatprep.subr.mxu0 0.0
        %2063 = vmatpush1.xpose.msra.mxu0 0.0
        %2064 = vmatprep.subr.mxu0 0.0
        %2065 = vmatpush1.xpose.msra.mxu0 0.0
        %2066 = vmatprep.subr.mxu0 0.0
        %2067 = vmatpush1.xpose.msra.mxu0 0.0
        %2068 = vmatprep.subr.mxu0 0.0
        %2069 = vmatpush1.xpose.msra.mxu0 0.0
        %2070 = vmatprep.subr.mxu0 0.0
        %2071 = vmatpush1.xpose.msra.mxu0 0.0
        %2072 = vmatprep.subr.mxu0 0.0
        %2073 = vmatpush1.xpose.msra.mxu0 0.0
        %2074 = vmatprep.subr.mxu0 0.0
        %2075 = vmatpush1.xpose.msra.mxu0 0.0
        %2076 = vmatprep.subr.mxu0 0.0
        %2077 = vmatpush1.xpose.msra.mxu0 0.0
        %2078 = vmatprep.subr.mxu0 0.0
        %2079 = vmatpush1.xpose.msra.mxu0 0.0
        %2080 = vmatprep.mubr.f32.mxu0 0.0
        %2081 = vmatmul.mubr.f32.gmra.mrb[0].mxu0 %v2008
        %v2082 = vpop.f32.mrb[0].mxu0
        %v2083 = vadd.f32 %v912, %v2082
        %v2084 = vpop.f32.mrb[0].mxu0
        %2085 = vmatprep.mubr.f32.mxu0 0.0
        %2086 = vmatmul.mubr.f32.gmra.mrb[0].mxu0 %v2010
        %v2087 = vpop.f32.mrb[0].mxu0
        %v2088 = vadd.f32 %v913, %v2087
        %v2089 = vpop.f32.mrb[0].mxu0
        %2090 = vdwg.mxu0
        %v2091 = vsel %vm1321, %v2083, -inf
        %2092 = vmax.xlane.f32.xlu0 %v2091
        %v2093 = vpop.xlane.xlu0 %2092
        %v2094 = vsel %vm1321, %v2088, -inf
        %2095 = vmax.xlane.f32.xlu0 %v2094
        %v2096 = vpop.xlane.xlu0 %2095
        %v2097 = vsub.f32 %v2083, %v2093
        %v2098 = vsub.f32 %v2088, %v2096
        %v2099 = vmul.f32 %v2097, 1.442695
        %v2100 = vpow.pop %v2099
        %v2101 = vmul.f32 %v2098, 1.442695
        %v2102 = vpow.pop %v2101
        %v2103 = vsel %vm1321, %v2100, 0.0
        %2104 = vadd.xlane.f32.xlu0 %v2103
        %v2105 = vpop.xlane.xlu0 %2104
        %v2106 = vsel %vm1321, %v2102, 0.0
        %2107 = vadd.xlane.f32.xlu0 %v2106
        %v2108 = vpop.xlane.xlu0 %2107
        %v2109 = vrcp.pop %v2105
        %v2110 = vrcp.pop %v2108
        %v2111 = vmul.f32 %v2100, %v2109
        %v2112 = vmul.f32 %v2102, %v2110
        %2113 = vrot.lane.b32.xlu0 %v1211, 32
        %v2114 = vpop.permute.xlu0 %2113
        %2115 = vrot.lane.b32.xlu0 %v1214, 32
        %v2116 = vpop.permute.xlu0 %2115
        %v2120 = vsel %vm1321, %v2111, 0
        %v2123 = vsel %vm1321, %v2112, 0
        %2125 = vmatprep.subr.mxu0 0.0
        %2126 = vmatpush1.msra.mxu0 %v2114
        %2127 = vmatprep.subr.mxu0 0.0
        %2128 = vmatpush1.msra.mxu0 %v2116
        %2129 = vmatprep.subr.mxu0 0.0
        %2130 = vmatpush1.msra.mxu0 0.0
        %2131 = vmatprep.subr.mxu0 0.0
        %2132 = vmatpush1.msra.mxu0 0.0
        %2133 = vmatprep.subr.mxu0 0.0
        %2134 = vmatpush1.msra.mxu0 0.0
        %2135 = vmatprep.subr.mxu0 0.0
        %2136 = vmatpush1.msra.mxu0 0.0
        %2137 = vmatprep.subr.mxu0 0.0
        %2138 = vmatpush1.msra.mxu0 0.0
        %2139 = vmatprep.subr.mxu0 0.0
        %2140 = vmatpush1.msra.mxu0 0.0
        %2141 = vmatprep.subr.mxu0 0.0
        %2142 = vmatpush1.msra.mxu0 0.0
        %2143 = vmatprep.subr.mxu0 0.0
        %2144 = vmatpush1.msra.mxu0 0.0
        %2145 = vmatprep.subr.mxu0 0.0
        %2146 = vmatpush1.msra.mxu0 0.0
        %2147 = vmatprep.subr.mxu0 0.0
        %2148 = vmatpush1.msra.mxu0 0.0
        %2149 = vmatprep.subr.mxu0 0.0
        %2150 = vmatpush1.msra.mxu0 0.0
        %2151 = vmatprep.subr.mxu0 0.0
        %2152 = vmatpush1.msra.mxu0 0.0
        %2153 = vmatprep.subr.mxu0 0.0
        %2154 = vmatpush1.msra.mxu0 0.0
        %2155 = vmatprep.subr.mxu0 0.0
        %2156 = vmatpush1.msra.mxu0 0.0
        %2157 = vmatprep.subr.mxu0 0.0
        %2158 = vmatpush1.msra.mxu0 0.0
        %2159 = vmatprep.subr.mxu0 0.0
        %2160 = vmatpush1.msra.mxu0 0.0
        %2161 = vmatprep.subr.mxu0 0.0
        %2162 = vmatpush1.msra.mxu0 0.0
        %2163 = vmatprep.subr.mxu0 0.0
        %2164 = vmatpush1.msra.mxu0 0.0
        %2165 = vmatprep.subr.mxu0 0.0
        %2166 = vmatpush1.msra.mxu0 0.0
        %2167 = vmatprep.subr.mxu0 0.0
        %2168 = vmatpush1.msra.mxu0 0.0
        %2169 = vmatprep.subr.mxu0 0.0
        %2170 = vmatpush1.msra.mxu0 0.0
        %2171 = vmatprep.subr.mxu0 0.0
        %2172 = vmatpush1.msra.mxu0 0.0
        %2173 = vmatprep.subr.mxu0 0.0
        %2174 = vmatpush1.msra.mxu0 0.0
        %2175 = vmatprep.subr.mxu0 0.0
        %2176 = vmatpush1.msra.mxu0 0.0
        %2177 = vmatprep.subr.mxu0 0.0
        %2178 = vmatpush1.msra.mxu0 0.0
        %2179 = vmatprep.subr.mxu0 0.0
        %2180 = vmatpush1.msra.mxu0 0.0
        %2181 = vmatprep.subr.mxu0 0.0
        %2182 = vmatpush1.msra.mxu0 0.0
        %2183 = vmatprep.subr.mxu0 0.0
        %2184 = vmatpush1.msra.mxu0 0.0
        %2185 = vmatprep.subr.mxu0 0.0
        %2186 = vmatpush1.msra.mxu0 0.0
        %2187 = vmatprep.subr.mxu0 0.0
        %2188 = vmatpush1.msra.mxu0 0.0
        %2189 = vmatprep.mubr.f32.mxu0 0.0
        %2190 = vmatmul.mubr.f32.gmra.mrb[0].mxu0 %v2120
        %v2191 = vpop.f32.mrb[0].mxu0
        %v2192 = vadd.f32 0.0, %v2191
        %v2193 = vpop.f32.mrb[0].mxu0
        %2194 = vmatprep.mubr.f32.mxu0 0.0
        %2195 = vmatmul.mubr.f32.gmra.mrb[0].mxu0 %v2123
        %v2196 = vpop.f32.mrb[0].mxu0
        %v2197 = vadd.f32 0.0, %v2196
        %v2198 = vpop.f32.mrb[0].mxu0
        %2199 = vdwg.mxu0
        %v2200 = vpack.c.bf16 %v2197, %v2192
        %v2205 = vunpack.c.l.b16 %v1229
        %v2206 = vunpack.c.l.b16 %v1230
        %v2207 = vunpack.c.l.b16 %v1231
        %v2208 = vunpack.c.l.b16 %v1232
        %v2209 = vpack.c.b16 %v2206, %v2205
        %v2210 = vpack.c.b16 %v2208, %v2207
        %v2214 = vsel %vm1233, %v2200, 0
        %2216 = vmatprep.subr.bf16.mxu0 0
        %2217 = vmatpush1.bf16.msra.mxu0 %v2209
        %2218 = vmatprep.subr.bf16.mxu0 0
        %2219 = vmatpush1.bf16.msra.mxu0 %v2210
        %2220 = vmatprep.subr.bf16.mxu0 0
        %2221 = vmatpush1.bf16.msra.mxu0 0
        %2222 = vmatprep.subr.bf16.mxu0 0
        %2223 = vmatpush1.bf16.msra.mxu0 0
        %2224 = vmatprep.subr.bf16.mxu0 0
        %2225 = vmatpush1.bf16.msra.mxu0 0
        %2226 = vmatprep.subr.bf16.mxu0 0
        %2227 = vmatpush1.bf16.msra.mxu0 0
        %2228 = vmatprep.subr.bf16.mxu0 0
        %2229 = vmatpush1.bf16.msra.mxu0 0
        %2230 = vmatprep.subr.bf16.mxu0 0
        %2231 = vmatpush1.bf16.msra.mxu0 0
        %2232 = vmatprep.subr.bf16.mxu0 0
        %2233 = vmatpush1.bf16.msra.mxu0 0
        %2234 = vmatprep.subr.bf16.mxu0 0
        %2235 = vmatpush1.bf16.msra.mxu0 0
        %2236 = vmatprep.subr.bf16.mxu0 0
        %2237 = vmatpush1.bf16.msra.mxu0 0
        %2238 = vmatprep.subr.bf16.mxu0 0
        %2239 = vmatpush1.bf16.msra.mxu0 0
        %2240 = vmatprep.subr.bf16.mxu0 0
        %2241 = vmatpush1.bf16.msra.mxu0 0
        %2242 = vmatprep.subr.bf16.mxu0 0
        %2243 = vmatpush1.bf16.msra.mxu0 0
        %2244 = vmatprep.subr.bf16.mxu0 0
        %2245 = vmatpush1.bf16.msra.mxu0 0
        %2246 = vmatprep.subr.bf16.mxu0 0
        %2247 = vmatpush1.bf16.msra.mxu0 0
        %2248 = vmatprep.mubr.bf16.mxu0 0
        %2249 = vmatmul.mubr.bf16.gmra.mrb[0].mxu0 %v2214
        %v2250 = vpop.f32.mrb[0].mxu0
        %v2251 = vadd.f32 0.0, %v2250
        %v2252 = vpop.f32.mrb[0].mxu0
        %v2253 = vpop.f32.mrb[0].mxu0
        %v2254 = vadd.f32 0.0, %v2253
        %v2255 = vpop.f32.mrb[0].mxu0
        %2256 = vdwg.mxu0
        %v2257 = vadd.f32 %v1998, %v2251
        %v2258 = vadd.f32 %v1999, %v2254
        %v2259 = vadd.f32 %v910, %v2257
        %v2260 = vadd.f32 %v911, %v2258
        %v2261 = vld [vmem:[%s716] sm:$0x1]
        %v2263 = vlaneseq
        %v2264 = vshrl.u32 %v2263, 7
        %v2265 = vsub.s32 0, %v2264
        %v2266 = vrot.slane %v2261, %v2265
        %v2268 = vadd.f32 %v2259, %v2266
        %v2269 = vadd.f32 %v2260, %v2266
        %v2270 = vld [vmem:[%s719] sm:$0x1]
        %v2271 = vld [vmem:[%s722] sm:$0x1]
        %2272 = vadd.xlane.f32.xlu0 %v2268
        %v2273 = vpop.xlane.xlu0 %2272
        %2274 = vadd.xlane.f32.xlu0 %v2269
        %v2275 = vpop.xlane.xlu0 %2274
        %v2276 = vmul.f32 %v2273, %v920
        %v2277 = vmul.f32 %v2275, %v920
        %v2278 = vsub.f32 %v2268, %v2276
        %v2279 = vsub.f32 %v2269, %v2277
        %v2280 = vmul.f32 %v2278, %v2278
        %v2281 = vmul.f32 %v2279, %v2279
        %2282 = vadd.xlane.f32.xlu0 %v2280
        %v2283 = vpop.xlane.xlu0 %2282
        %2284 = vadd.xlane.f32.xlu0 %v2281
        %v2285 = vpop.xlane.xlu0 %2284
        %v2286 = vmul.f32 %v2283, %v920
        %v2287 = vmul.f32 %v2285, %v920
        %v2288 = vadd.f32 %v2286, 1e-12
        %v2289 = vadd.f32 %v2287, 1e-12
        %v2290 = vrsqrt.pop %v2288
        %v2291 = vrsqrt.pop %v2289
        %v2292 = vmul.f32 %v2278, %v2290
        %v2293 = vmul.f32 %v2279, %v2291
        %v2295 = vlaneseq
        %v2296 = vshrl.u32 %v2295, 7
        %v2297 = vsub.s32 0, %v2296
        %v2298 = vrot.slane %v2270, %v2297
        %v2300 = vmul.f32 %v2292, %v2298
        %v2301 = vmul.f32 %v2293, %v2298
        %v2303 = vlaneseq
        %v2304 = vshrl.u32 %v2303, 7
        %v2305 = vsub.s32 0, %v2304
        %v2306 = vrot.slane %v2271, %v2305
        %v2308 = vadd.f32 %v2300, %v2306
        %v2309 = vadd.f32 %v2301, %v2306
        %v2310 = vld [vmem:[%s727] sm:$0xff]
        %v2311 = vld [vmem:[%s727 + $0x8] sm:$0xff]
        %v2312 = vld [vmem:[%s727 + $0x10] sm:$0xff]
        %v2313 = vld [vmem:[%s727 + $0x18] sm:$0xff]
        %v2314 = vld [vmem:[%s727 + $0x20] sm:$0xff]
        %v2315 = vld [vmem:[%s727 + $0x28] sm:$0xff]
        %v2316 = vld [vmem:[%s727 + $0x30] sm:$0xff]
        %v2317 = vld [vmem:[%s727 + $0x38] sm:$0xff]
        %v2318 = vld [vmem:[%s727 + $0x40] sm:$0xff]
        %v2319 = vld [vmem:[%s727 + $0x48] sm:$0xff]
        %v2320 = vld [vmem:[%s727 + $0x50] sm:$0xff]
        %v2321 = vld [vmem:[%s727 + $0x58] sm:$0xff]
        %v2322 = vld [vmem:[%s727 + $0x60] sm:$0xff]
        %v2323 = vld [vmem:[%s727 + $0x68] sm:$0xff]
        %v2324 = vld [vmem:[%s727 + $0x70] sm:$0xff]
        %v2325 = vld [vmem:[%s727 + $0x78] sm:$0xff]
        %v2326 = vld [vmem:[%s727 + $0x80] sm:$0xff]
        %v2327 = vld [vmem:[%s727 + $0x88] sm:$0xff]
        %v2328 = vld [vmem:[%s727 + $0x90] sm:$0xff]
        %v2329 = vld [vmem:[%s727 + $0x98] sm:$0xff]
        %v2330 = vld [vmem:[%s727 + $0xa0] sm:$0xff]
        %v2331 = vld [vmem:[%s727 + $0xa8] sm:$0xff]
        %v2332 = vld [vmem:[%s727 + $0xb0] sm:$0xff]
        %v2333 = vld [vmem:[%s727 + $0xb8] sm:$0xff]
        %v2334 = vld [vmem:[%s727 + $0xc0] sm:$0xff]
        %v2335 = vld [vmem:[%s727 + $0xc8] sm:$0xff]
        %v2336 = vld [vmem:[%s727 + $0xd0] sm:$0xff]
        %v2337 = vld [vmem:[%s727 + $0xd8] sm:$0xff]
        %v2338 = vld [vmem:[%s727 + $0xe0] sm:$0xff]
        %v2339 = vld [vmem:[%s727 + $0xe8] sm:$0xff]
        %v2340 = vld [vmem:[%s727 + $0xf0] sm:$0xff]
        %v2341 = vld [vmem:[%s727 + $0xf8] sm:$0xff]
        %v2342 = vpack.c.bf16 %v2309, %v2308
        %v2343 = vld [vmem:[%s731] sm:$0xf]
        %v2345 = vlaneseq
        %v2346 = vshrl.u32 %v2345, 7
        %v2347 = vsub.s32 0, %v2346
        %v2348 = vrot.slane %v2343, %v2347
        %v2349 = vlaneseq
        %v2350 = vshrl.u32 %v2349, 7
        %v2351 = vsub.s32 1, %v2350
        %v2352 = vrot.slane %v2343, %v2351
        %v2353 = vlaneseq
        %v2354 = vshrl.u32 %v2353, 7
        %v2355 = vsub.s32 2, %v2354
        %v2356 = vrot.slane %v2343, %v2355
        %v2357 = vlaneseq
        %v2358 = vshrl.u32 %v2357, 7
        %v2359 = vsub.s32 3, %v2358
        %v2360 = vrot.slane %v2343, %v2359
        %v2397 = vunpack.c.l.b16 %v2310
        %v2398 = vunpack.c.h.b16 %v2310
        %v2399 = vunpack.c.l.b16 %v2311
        %v2400 = vunpack.c.h.b16 %v2311
        %v2401 = vunpack.c.l.b16 %v2312
        %v2402 = vunpack.c.h.b16 %v2312
        %v2403 = vunpack.c.l.b16 %v2313
        %v2404 = vunpack.c.h.b16 %v2313
        %v2405 = vunpack.c.l.b16 %v2314
        %v2406 = vunpack.c.h.b16 %v2314
        %v2407 = vunpack.c.l.b16 %v2315
        %v2408 = vunpack.c.h.b16 %v2315
        %v2409 = vunpack.c.l.b16 %v2316
        %v2410 = vunpack.c.h.b16 %v2316
        %v2411 = vunpack.c.l.b16 %v2317
        %v2412 = vunpack.c.h.b16 %v2317
        %v2413 = vunpack.c.l.b16 %v2318
        %v2414 = vunpack.c.h.b16 %v2318
        %v2415 = vunpack.c.l.b16 %v2319
        %v2416 = vunpack.c.h.b16 %v2319
        %v2417 = vunpack.c.l.b16 %v2320
        %v2418 = vunpack.c.h.b16 %v2320
        %v2419 = vunpack.c.l.b16 %v2321
        %v2420 = vunpack.c.h.b16 %v2321
        %v2421 = vunpack.c.l.b16 %v2322
        %v2422 = vunpack.c.h.b16 %v2322
        %v2423 = vunpack.c.l.b16 %v2323
        %v2424 = vunpack.c.h.b16 %v2323
        %v2425 = vunpack.c.l.b16 %v2324
        %v2426 = vunpack.c.h.b16 %v2324
        %v2427 = vunpack.c.l.b16 %v2325
        %v2428 = vunpack.c.h.b16 %v2325
        %v2429 = vunpack.c.l.b16 %v2326
        %v2430 = vunpack.c.h.b16 %v2326
        %v2431 = vunpack.c.l.b16 %v2327
        %v2432 = vunpack.c.h.b16 %v2327
        %v2433 = vunpack.c.l.b16 %v2328
        %v2434 = vunpack.c.h.b16 %v2328
        %v2435 = vunpack.c.l.b16 %v2329
        %v2436 = vunpack.c.h.b16 %v2329
        %v2437 = vunpack.c.l.b16 %v2330
        %v2438 = vunpack.c.h.b16 %v2330
        %v2439 = vunpack.c.l.b16 %v2331
        %v2440 = vunpack.c.h.b16 %v2331
        %v2441 = vunpack.c.l.b16 %v2332
        %v2442 = vunpack.c.h.b16 %v2332
        %v2443 = vunpack.c.l.b16 %v2333
        %v2444 = vunpack.c.h.b16 %v2333
        %v2445 = vunpack.c.l.b16 %v2334
        %v2446 = vunpack.c.h.b16 %v2334
        %v2447 = vunpack.c.l.b16 %v2335
        %v2448 = vunpack.c.h.b16 %v2335
        %v2449 = vunpack.c.l.b16 %v2336
        %v2450 = vunpack.c.h.b16 %v2336
        %v2451 = vunpack.c.l.b16 %v2337
        %v2452 = vunpack.c.h.b16 %v2337
        %v2453 = vunpack.c.l.b16 %v2338
        %v2454 = vunpack.c.h.b16 %v2338
        %v2455 = vunpack.c.l.b16 %v2339
        %v2456 = vunpack.c.h.b16 %v2339
        %v2457 = vunpack.c.l.b16 %v2340
        %v2458 = vunpack.c.h.b16 %v2340
        %v2459 = vunpack.c.l.b16 %v2341
        %v2460 = vunpack.c.h.b16 %v2341
        %v2461 = vpack.c.b16 %v2401, %v2397
        %v2462 = vpack.c.b16 %v2402, %v2398
        %v2463 = vpack.c.b16 %v2403, %v2399
        %v2464 = vpack.c.b16 %v2404, %v2400
        %v2465 = vpack.c.b16 %v2409, %v2405
        %v2466 = vpack.c.b16 %v2410, %v2406
        %v2467 = vpack.c.b16 %v2411, %v2407
        %v2468 = vpack.c.b16 %v2412, %v2408
        %v2469 = vpack.c.b16 %v2417, %v2413
        %v2470 = vpack.c.b16 %v2418, %v2414
        %v2471 = vpack.c.b16 %v2419, %v2415
        %v2472 = vpack.c.b16 %v2420, %v2416
        %v2473 = vpack.c.b16 %v2425, %v2421
        %v2474 = vpack.c.b16 %v2426, %v2422
        %v2475 = vpack.c.b16 %v2427, %v2423
        %v2476 = vpack.c.b16 %v2428, %v2424
        %v2477 = vpack.c.b16 %v2433, %v2429
        %v2478 = vpack.c.b16 %v2434, %v2430
        %v2479 = vpack.c.b16 %v2435, %v2431
        %v2480 = vpack.c.b16 %v2436, %v2432
        %v2481 = vpack.c.b16 %v2441, %v2437
        %v2482 = vpack.c.b16 %v2442, %v2438
        %v2483 = vpack.c.b16 %v2443, %v2439
        %v2484 = vpack.c.b16 %v2444, %v2440
        %v2485 = vpack.c.b16 %v2449, %v2445
        %v2486 = vpack.c.b16 %v2450, %v2446
        %v2487 = vpack.c.b16 %v2451, %v2447
        %v2488 = vpack.c.b16 %v2452, %v2448
        %v2489 = vpack.c.b16 %v2457, %v2453
        %v2490 = vpack.c.b16 %v2458, %v2454
        %v2491 = vpack.c.b16 %v2459, %v2455
        %v2492 = vpack.c.b16 %v2460, %v2456
        %2525 = vmatprep.subr.bf16.mxu0 %v2462
        %2526 = vmatpush1.bf16.msra.mxu0 %v2461
        %2527 = vmatprep.subr.bf16.mxu0 %v2466
        %2528 = vmatpush1.bf16.msra.mxu0 %v2465
        %2529 = vmatprep.subr.bf16.mxu0 %v2470
        %2530 = vmatpush1.bf16.msra.mxu0 %v2469
        %2531 = vmatprep.subr.bf16.mxu0 %v2474
        %2532 = vmatpush1.bf16.msra.mxu0 %v2473
        %2533 = vmatprep.subr.bf16.mxu0 %v2478
        %2534 = vmatpush1.bf16.msra.mxu0 %v2477
        %2535 = vmatprep.subr.bf16.mxu0 %v2482
        %2536 = vmatpush1.bf16.msra.mxu0 %v2481
        %2537 = vmatprep.subr.bf16.mxu0 %v2486
        %2538 = vmatpush1.bf16.msra.mxu0 %v2485
        %2539 = vmatprep.subr.bf16.mxu0 %v2490
        %2540 = vmatpush1.bf16.msra.mxu0 %v2489
        %2541 = vmatprep.subr.bf16.mxu0 0
        %2542 = vmatpush1.bf16.msra.mxu0 0
        %2543 = vmatprep.subr.bf16.mxu0 0
        %2544 = vmatpush1.bf16.msra.mxu0 0
        %2545 = vmatprep.subr.bf16.mxu0 0
        %2546 = vmatpush1.bf16.msra.mxu0 0
        %2547 = vmatprep.subr.bf16.mxu0 0
        %2548 = vmatpush1.bf16.msra.mxu0 0
        %2549 = vmatprep.subr.bf16.mxu0 0
        %2550 = vmatpush1.bf16.msra.mxu0 0
        %2551 = vmatprep.subr.bf16.mxu0 0
        %2552 = vmatpush1.bf16.msra.mxu0 0
        %2553 = vmatprep.subr.bf16.mxu0 0
        %2554 = vmatpush1.bf16.msra.mxu0 0
        %2555 = vmatprep.subr.bf16.mxu0 0
        %2556 = vmatpush1.bf16.msra.mxu0 0
        %2557 = vmatprep.mubr.bf16.mxu0 0
        %2558 = vmatmul.mubr.bf16.gmra.mrb[0].mxu0 %v2342
        %v2559 = vpop.f32.mrb[0].mxu0
        %v2560 = vadd.f32 %v2348, %v2559
        %v2561 = vpop.f32.mrb[0].mxu0
        %v2562 = vadd.f32 %v2352, %v2561
        %v2563 = vpop.f32.mrb[0].mxu0
        %v2564 = vadd.f32 %v2348, %v2563
        %v2565 = vpop.f32.mrb[0].mxu0
        %v2566 = vadd.f32 %v2352, %v2565
        %2567 = vdwg.mxu0
        %2568 = vmatprep.subr.bf16.mxu0 %v2464
        %2569 = vmatpush1.bf16.msra.mxu0 %v2463
        %2570 = vmatprep.subr.bf16.mxu0 %v2468
        %2571 = vmatpush1.bf16.msra.mxu0 %v2467
        %2572 = vmatprep.subr.bf16.mxu0 %v2472
        %2573 = vmatpush1.bf16.msra.mxu0 %v2471
        %2574 = vmatprep.subr.bf16.mxu0 %v2476
        %2575 = vmatpush1.bf16.msra.mxu0 %v2475
        %2576 = vmatprep.subr.bf16.mxu0 %v2480
        %2577 = vmatpush1.bf16.msra.mxu0 %v2479
        %2578 = vmatprep.subr.bf16.mxu0 %v2484
        %2579 = vmatpush1.bf16.msra.mxu0 %v2483
        %2580 = vmatprep.subr.bf16.mxu0 %v2488
        %2581 = vmatpush1.bf16.msra.mxu0 %v2487
        %2582 = vmatprep.subr.bf16.mxu0 %v2492
        %2583 = vmatpush1.bf16.msra.mxu0 %v2491
        %2584 = vmatprep.subr.bf16.mxu0 0
        %2585 = vmatpush1.bf16.msra.mxu0 0
        %2586 = vmatprep.subr.bf16.mxu0 0
        %2587 = vmatpush1.bf16.msra.mxu0 0
        %2588 = vmatprep.subr.bf16.mxu0 0
        %2589 = vmatpush1.bf16.msra.mxu0 0
        %2590 = vmatprep.subr.bf16.mxu0 0
        %2591 = vmatpush1.bf16.msra.mxu0 0
        %2592 = vmatprep.subr.bf16.mxu0 0
        %2593 = vmatpush1.bf16.msra.mxu0 0
        %2594 = vmatprep.subr.bf16.mxu0 0
        %2595 = vmatpush1.bf16.msra.mxu0 0
        %2596 = vmatprep.subr.bf16.mxu0 0
        %2597 = vmatpush1.bf16.msra.mxu0 0
        %2598 = vmatprep.subr.bf16.mxu0 0
        %2599 = vmatpush1.bf16.msra.mxu0 0
        %2600 = vmatprep.mubr.bf16.mxu0 0
        %2601 = vmatmul.mubr.bf16.gmra.mrb[0].mxu0 %v2342
        %v2602 = vpop.f32.mrb[0].mxu0
        %v2603 = vadd.f32 %v2356, %v2602
        %v2604 = vpop.f32.mrb[0].mxu0
        %v2605 = vadd.f32 %v2360, %v2604
        %v2606 = vpop.f32.mrb[0].mxu0
        %v2607 = vadd.f32 %v2356, %v2606
        %v2608 = vpop.f32.mrb[0].mxu0
        %v2609 = vadd.f32 %v2360, %v2608
        %2610 = vdwg.mxu0
        %v2611 = vmul.f32 %v2560, 0.5
        %v2612 = vmul.f32 %v2562, 0.5
        %v2613 = vmul.f32 %v2603, 0.5
        %v2614 = vmul.f32 %v2605, 0.5
        %v2615 = vmul.f32 %v2564, 0.5
        %v2616 = vmul.f32 %v2566, 0.5
        %v2617 = vmul.f32 %v2607, 0.5
        %v2618 = vmul.f32 %v2609, 0.5
        %v2619 = vmul.f32 %v2560, 0.044715
        %v2620 = vmul.f32 %v2562, 0.044715
        %v2621 = vmul.f32 %v2603, 0.044715
        %v2622 = vmul.f32 %v2605, 0.044715
        %v2623 = vmul.f32 %v2564, 0.044715
        %v2624 = vmul.f32 %v2566, 0.044715
        %v2625 = vmul.f32 %v2607, 0.044715
        %v2626 = vmul.f32 %v2609, 0.044715
        %v2627 = vmul.f32 %v2619, %v2560
        %v2628 = vmul.f32 %v2620, %v2562
        %v2629 = vmul.f32 %v2621, %v2603
        %v2630 = vmul.f32 %v2622, %v2605
        %v2631 = vmul.f32 %v2623, %v2564
        %v2632 = vmul.f32 %v2624, %v2566
        %v2633 = vmul.f32 %v2625, %v2607
        %v2634 = vmul.f32 %v2626, %v2609
        %v2635 = vmul.f32 %v2627, %v2560
        %v2636 = vmul.f32 %v2628, %v2562
        %v2637 = vmul.f32 %v2629, %v2603
        %v2638 = vmul.f32 %v2630, %v2605
        %v2639 = vmul.f32 %v2631, %v2564
        %v2640 = vmul.f32 %v2632, %v2566
        %v2641 = vmul.f32 %v2633, %v2607
        %v2642 = vmul.f32 %v2634, %v2609
        %v2643 = vadd.f32 %v2560, %v2635
        %v2644 = vadd.f32 %v2562, %v2636
        %v2645 = vadd.f32 %v2603, %v2637
        %v2646 = vadd.f32 %v2605, %v2638
        %v2647 = vadd.f32 %v2564, %v2639
        %v2648 = vadd.f32 %v2566, %v2640
        %v2649 = vadd.f32 %v2607, %v2641
        %v2650 = vadd.f32 %v2609, %v2642
        %v2651 = vmul.f32 %v2643, 0.7978846
        %v2652 = vmul.f32 %v2644, 0.7978846
        %v2653 = vmul.f32 %v2645, 0.7978846
        %v2654 = vmul.f32 %v2646, 0.7978846
        %v2655 = vmul.f32 %v2647, 0.7978846
        %v2656 = vmul.f32 %v2648, 0.7978846
        %v2657 = vmul.f32 %v2649, 0.7978846
        %v2658 = vmul.f32 %v2650, 0.7978846
        %v2659 = vtanh.pop %v2651
        %v2660 = vtanh.pop %v2652
        %v2661 = vtanh.pop %v2653
        %v2662 = vtanh.pop %v2654
        %v2663 = vtanh.pop %v2655
        %v2664 = vtanh.pop %v2656
        %v2665 = vtanh.pop %v2657
        %v2666 = vtanh.pop %v2658
        %v2667 = vadd.f32 %v2659, 1.0
        %v2668 = vadd.f32 %v2660, 1.0
        %v2669 = vadd.f32 %v2661, 1.0
        %v2670 = vadd.f32 %v2662, 1.0
        %v2671 = vadd.f32 %v2663, 1.0
        %v2672 = vadd.f32 %v2664, 1.0
        %v2673 = vadd.f32 %v2665, 1.0
        %v2674 = vadd.f32 %v2666, 1.0
        %v2675 = vmul.f32 %v2611, %v2667
        %v2676 = vmul.f32 %v2612, %v2668
        %v2677 = vmul.f32 %v2613, %v2669
        %v2678 = vmul.f32 %v2614, %v2670
        %v2679 = vmul.f32 %v2615, %v2671
        %v2680 = vmul.f32 %v2616, %v2672
        %v2681 = vmul.f32 %v2617, %v2673
        %v2682 = vmul.f32 %v2618, %v2674
        %v2683 = vld [vmem:[%s736] sm:$0xf]
        %v2684 = vld [vmem:[%s736 + $0x4] sm:$0xf]
        %v2685 = vld [vmem:[%s736 + $0x8] sm:$0xf]
        %v2686 = vld [vmem:[%s736 + $0xc] sm:$0xf]
        %v2687 = vld [vmem:[%s736 + $0x10] sm:$0xf]
        %v2688 = vld [vmem:[%s736 + $0x14] sm:$0xf]
        %v2689 = vld [vmem:[%s736 + $0x18] sm:$0xf]
        %v2690 = vld [vmem:[%s736 + $0x1c] sm:$0xf]
        %v2691 = vld [vmem:[%s736 + $0x20] sm:$0xf]
        %v2692 = vld [vmem:[%s736 + $0x24] sm:$0xf]
        %v2693 = vld [vmem:[%s736 + $0x28] sm:$0xf]
        %v2694 = vld [vmem:[%s736 + $0x2c] sm:$0xf]
        %v2695 = vld [vmem:[%s736 + $0x30] sm:$0xf]
        %v2696 = vld [vmem:[%s736 + $0x34] sm:$0xf]
        %v2697 = vld [vmem:[%s736 + $0x38] sm:$0xf]
        %v2698 = vld [vmem:[%s736 + $0x3c] sm:$0xf]
        %v2699 = vld [vmem:[%s736 + $0x40] sm:$0xf]
        %v2700 = vld [vmem:[%s736 + $0x44] sm:$0xf]
        %v2701 = vld [vmem:[%s736 + $0x48] sm:$0xf]
        %v2702 = vld [vmem:[%s736 + $0x4c] sm:$0xf]
        %v2703 = vld [vmem:[%s736 + $0x50] sm:$0xf]
        %v2704 = vld [vmem:[%s736 + $0x54] sm:$0xf]
        %v2705 = vld [vmem:[%s736 + $0x58] sm:$0xf]
        %v2706 = vld [vmem:[%s736 + $0x5c] sm:$0xf]
        %v2707 = vld [vmem:[%s736 + $0x60] sm:$0xf]
        %v2708 = vld [vmem:[%s736 + $0x64] sm:$0xf]
        %v2709 = vld [vmem:[%s736 + $0x68] sm:$0xf]
        %v2710 = vld [vmem:[%s736 + $0x6c] sm:$0xf]
        %v2711 = vld [vmem:[%s736 + $0x70] sm:$0xf]
        %v2712 = vld [vmem:[%s736 + $0x74] sm:$0xf]
        %v2713 = vld [vmem:[%s736 + $0x78] sm:$0xf]
        %v2714 = vld [vmem:[%s736 + $0x7c] sm:$0xf]
        %v2715 = vld [vmem:[%s736 + $0x80] sm:$0xf]
        %v2716 = vld [vmem:[%s736 + $0x84] sm:$0xf]
        %v2717 = vld [vmem:[%s736 + $0x88] sm:$0xf]
        %v2718 = vld [vmem:[%s736 + $0x8c] sm:$0xf]
        %v2719 = vld [vmem:[%s736 + $0x90] sm:$0xf]
        %v2720 = vld [vmem:[%s736 + $0x94] sm:$0xf]
        %v2721 = vld [vmem:[%s736 + $0x98] sm:$0xf]
        %v2722 = vld [vmem:[%s736 + $0x9c] sm:$0xf]
        %v2723 = vld [vmem:[%s736 + $0xa0] sm:$0xf]
        %v2724 = vld [vmem:[%s736 + $0xa4] sm:$0xf]
        %v2725 = vld [vmem:[%s736 + $0xa8] sm:$0xf]
        %v2726 = vld [vmem:[%s736 + $0xac] sm:$0xf]
        %v2727 = vld [vmem:[%s736 + $0xb0] sm:$0xf]
        %v2728 = vld [vmem:[%s736 + $0xb4] sm:$0xf]
        %v2729 = vld [vmem:[%s736 + $0xb8] sm:$0xf]
        %v2730 = vld [vmem:[%s736 + $0xbc] sm:$0xf]
        %v2731 = vld [vmem:[%s736 + $0xc0] sm:$0xf]
        %v2732 = vld [vmem:[%s736 + $0xc4] sm:$0xf]
        %v2733 = vld [vmem:[%s736 + $0xc8] sm:$0xf]
        %v2734 = vld [vmem:[%s736 + $0xcc] sm:$0xf]
        %v2735 = vld [vmem:[%s736 + $0xd0] sm:$0xf]
        %v2736 = vld [vmem:[%s736 + $0xd4] sm:$0xf]
        %v2737 = vld [vmem:[%s736 + $0xd8] sm:$0xf]
        %v2738 = vld [vmem:[%s736 + $0xdc] sm:$0xf]
        %v2739 = vld [vmem:[%s736 + $0xe0] sm:$0xf]
        %v2740 = vld [vmem:[%s736 + $0xe4] sm:$0xf]
        %v2741 = vld [vmem:[%s736 + $0xe8] sm:$0xf]
        %v2742 = vld [vmem:[%s736 + $0xec] sm:$0xf]
        %v2743 = vld [vmem:[%s736 + $0xf0] sm:$0xf]
        %v2744 = vld [vmem:[%s736 + $0xf4] sm:$0xf]
        %v2745 = vld [vmem:[%s736 + $0xf8] sm:$0xf]
        %v2746 = vld [vmem:[%s736 + $0xfc] sm:$0xf]
        %v2747 = vpack.c.bf16 %v2679, %v2675
        %v2748 = vpack.c.bf16 %v2680, %v2676
        %v2749 = vpack.c.bf16 %v2681, %v2677
        %v2750 = vpack.c.bf16 %v2682, %v2678
        %v2815 = vunpack.c.l.b16 %v2683
        %v2816 = vunpack.c.l.b16 %v2684
        %v2817 = vunpack.c.l.b16 %v2685
        %v2818 = vunpack.c.l.b16 %v2686
        %v2819 = vunpack.c.l.b16 %v2687
        %v2820 = vunpack.c.l.b16 %v2688
        %v2821 = vunpack.c.l.b16 %v2689
        %v2822 = vunpack.c.l.b16 %v2690
        %v2823 = vunpack.c.l.b16 %v2691
        %v2824 = vunpack.c.l.b16 %v2692
        %v2825 = vunpack.c.l.b16 %v2693
        %v2826 = vunpack.c.l.b16 %v2694
        %v2827 = vunpack.c.l.b16 %v2695
        %v2828 = vunpack.c.l.b16 %v2696
        %v2829 = vunpack.c.l.b16 %v2697
        %v2830 = vunpack.c.l.b16 %v2698
        %v2831 = vunpack.c.l.b16 %v2699
        %v2832 = vunpack.c.l.b16 %v2700
        %v2833 = vunpack.c.l.b16 %v2701
        %v2834 = vunpack.c.l.b16 %v2702
        %v2835 = vunpack.c.l.b16 %v2703
        %v2836 = vunpack.c.l.b16 %v2704
        %v2837 = vunpack.c.l.b16 %v2705
        %v2838 = vunpack.c.l.b16 %v2706
        %v2839 = vunpack.c.l.b16 %v2707
        %v2840 = vunpack.c.l.b16 %v2708
        %v2841 = vunpack.c.l.b16 %v2709
        %v2842 = vunpack.c.l.b16 %v2710
        %v2843 = vunpack.c.l.b16 %v2711
        %v2844 = vunpack.c.l.b16 %v2712
        %v2845 = vunpack.c.l.b16 %v2713
        %v2846 = vunpack.c.l.b16 %v2714
        %v2847 = vunpack.c.l.b16 %v2715
        %v2848 = vunpack.c.l.b16 %v2716
        %v2849 = vunpack.c.l.b16 %v2717
        %v2850 = vunpack.c.l.b16 %v2718
        %v2851 = vunpack.c.l.b16 %v2719
        %v2852 = vunpack.c.l.b16 %v2720
        %v2853 = vunpack.c.l.b16 %v2721
        %v2854 = vunpack.c.l.b16 %v2722
        %v2855 = vunpack.c.l.b16 %v2723
        %v2856 = vunpack.c.l.b16 %v2724
        %v2857 = vunpack.c.l.b16 %v2725
        %v2858 = vunpack.c.l.b16 %v2726
        %v2859 = vunpack.c.l.b16 %v2727
        %v2860 = vunpack.c.l.b16 %v2728
        %v2861 = vunpack.c.l.b16 %v2729
        %v2862 = vunpack.c.l.b16 %v2730
        %v2863 = vunpack.c.l.b16 %v2731
        %v2864 = vunpack.c.l.b16 %v2732
        %v2865 = vunpack.c.l.b16 %v2733
        %v2866 = vunpack.c.l.b16 %v2734
        %v2867 = vunpack.c.l.b16 %v2735
        %v2868 = vunpack.c.l.b16 %v2736
        %v2869 = vunpack.c.l.b16 %v2737
        %v2870 = vunpack.c.l.b16 %v2738
        %v2871 = vunpack.c.l.b16 %v2739
        %v2872 = vunpack.c.l.b16 %v2740
        %v2873 = vunpack.c.l.b16 %v2741
        %v2874 = vunpack.c.l.b16 %v2742
        %v2875 = vunpack.c.l.b16 %v2743
        %v2876 = vunpack.c.l.b16 %v2744
        %v2877 = vunpack.c.l.b16 %v2745
        %v2878 = vunpack.c.l.b16 %v2746
        %v2879 = vpack.c.b16 %v2816, %v2815
        %v2880 = vpack.c.b16 %v2818, %v2817
        %v2881 = vpack.c.b16 %v2820, %v2819
        %v2882 = vpack.c.b16 %v2822, %v2821
        %v2883 = vpack.c.b16 %v2824, %v2823
        %v2884 = vpack.c.b16 %v2826, %v2825
        %v2885 = vpack.c.b16 %v2828, %v2827
        %v2886 = vpack.c.b16 %v2830, %v2829
        %v2887 = vpack.c.b16 %v2832, %v2831
        %v2888 = vpack.c.b16 %v2834, %v2833
        %v2889 = vpack.c.b16 %v2836, %v2835
        %v2890 = vpack.c.b16 %v2838, %v2837
        %v2891 = vpack.c.b16 %v2840, %v2839
        %v2892 = vpack.c.b16 %v2842, %v2841
        %v2893 = vpack.c.b16 %v2844, %v2843
        %v2894 = vpack.c.b16 %v2846, %v2845
        %v2895 = vpack.c.b16 %v2848, %v2847
        %v2896 = vpack.c.b16 %v2850, %v2849
        %v2897 = vpack.c.b16 %v2852, %v2851
        %v2898 = vpack.c.b16 %v2854, %v2853
        %v2899 = vpack.c.b16 %v2856, %v2855
        %v2900 = vpack.c.b16 %v2858, %v2857
        %v2901 = vpack.c.b16 %v2860, %v2859
        %v2902 = vpack.c.b16 %v2862, %v2861
        %v2903 = vpack.c.b16 %v2864, %v2863
        %v2904 = vpack.c.b16 %v2866, %v2865
        %v2905 = vpack.c.b16 %v2868, %v2867
        %v2906 = vpack.c.b16 %v2870, %v2869
        %v2907 = vpack.c.b16 %v2872, %v2871
        %v2908 = vpack.c.b16 %v2874, %v2873
        %v2909 = vpack.c.b16 %v2876, %v2875
        %v2910 = vpack.c.b16 %v2878, %v2877
        %2943 = vmatprep.subr.bf16.mxu0 0
        %2944 = vmatpush1.bf16.msra.mxu0 %v2879
        %2945 = vmatprep.subr.bf16.mxu0 0
        %2946 = vmatpush1.bf16.msra.mxu0 %v2880
        %2947 = vmatprep.subr.bf16.mxu0 0
        %2948 = vmatpush1.bf16.msra.mxu0 %v2881
        %2949 = vmatprep.subr.bf16.mxu0 0
        %2950 = vmatpush1.bf16.msra.mxu0 %v2882
        %2951 = vmatprep.subr.bf16.mxu0 0
        %2952 = vmatpush1.bf16.msra.mxu0 %v2883
        %2953 = vmatprep.subr.bf16.mxu0 0
        %2954 = vmatpush1.bf16.msra.mxu0 %v2884
        %2955 = vmatprep.subr.bf16.mxu0 0
        %2956 = vmatpush1.bf16.msra.mxu0 %v2885
        %2957 = vmatprep.subr.bf16.mxu0 0
        %2958 = vmatpush1.bf16.msra.mxu0 %v2886
        %2959 = vmatprep.subr.bf16.mxu0 0
        %2960 = vmatpush1.bf16.msra.mxu0 %v2887
        %2961 = vmatprep.subr.bf16.mxu0 0
        %2962 = vmatpush1.bf16.msra.mxu0 %v2888
        %2963 = vmatprep.subr.bf16.mxu0 0
        %2964 = vmatpush1.bf16.msra.mxu0 %v2889
        %2965 = vmatprep.subr.bf16.mxu0 0
        %2966 = vmatpush1.bf16.msra.mxu0 %v2890
        %2967 = vmatprep.subr.bf16.mxu0 0
        %2968 = vmatpush1.bf16.msra.mxu0 %v2891
        %2969 = vmatprep.subr.bf16.mxu0 0
        %2970 = vmatpush1.bf16.msra.mxu0 %v2892
        %2971 = vmatprep.subr.bf16.mxu0 0
        %2972 = vmatpush1.bf16.msra.mxu0 %v2893
        %2973 = vmatprep.subr.bf16.mxu0 0
        %2974 = vmatpush1.bf16.msra.mxu0 %v2894
        %2975 = vmatprep.mubr.bf16.mxu0 %v2748
        %2976 = vmatmul.mubr.bf16.gmra.mrb[0].mxu0 %v2747
        %v2977 = vpop.f32.mrb[0].mxu0
        %v2978 = vadd.f32 0.0, %v2977
        %v2979 = vpop.f32.mrb[0].mxu0
        %v2980 = vpop.f32.mrb[0].mxu0
        %v2981 = vadd.f32 0.0, %v2980
        %v2982 = vpop.f32.mrb[0].mxu0
        %2983 = vdwg.mxu0
        %2984 = vmatprep.subr.bf16.mxu0 0
        %2985 = vmatpush1.bf16.msra.mxu0 %v2895
        %2986 = vmatprep.subr.bf16.mxu0 0
        %2987 = vmatpush1.bf16.msra.mxu0 %v2896
        %2988 = vmatprep.subr.bf16.mxu0 0
        %2989 = vmatpush1.bf16.msra.mxu0 %v2897
        %2990 = vmatprep.subr.bf16.mxu0 0
        %2991 = vmatpush1.bf16.msra.mxu0 %v2898
        %2992 = vmatprep.subr.bf16.mxu0 0
        %2993 = vmatpush1.bf16.msra.mxu0 %v2899
        %2994 = vmatprep.subr.bf16.mxu0 0
        %2995 = vmatpush1.bf16.msra.mxu0 %v2900
        %2996 = vmatprep.subr.bf16.mxu0 0
        %2997 = vmatpush1.bf16.msra.mxu0 %v2901
        %2998 = vmatprep.subr.bf16.mxu0 0
        %2999 = vmatpush1.bf16.msra.mxu0 %v2902
        %3000 = vmatprep.subr.bf16.mxu0 0
        %3001 = vmatpush1.bf16.msra.mxu0 %v2903
        %3002 = vmatprep.subr.bf16.mxu0 0
        %3003 = vmatpush1.bf16.msra.mxu0 %v2904
        %3004 = vmatprep.subr.bf16.mxu0 0
        %3005 = vmatpush1.bf16.msra.mxu0 %v2905
        %3006 = vmatprep.subr.bf16.mxu0 0
        %3007 = vmatpush1.bf16.msra.mxu0 %v2906
        %3008 = vmatprep.subr.bf16.mxu0 0
        %3009 = vmatpush1.bf16.msra.mxu0 %v2907
        %3010 = vmatprep.subr.bf16.mxu0 0
        %3011 = vmatpush1.bf16.msra.mxu0 %v2908
        %3012 = vmatprep.subr.bf16.mxu0 0
        %3013 = vmatpush1.bf16.msra.mxu0 %v2909
        %3014 = vmatprep.subr.bf16.mxu0 0
        %3015 = vmatpush1.bf16.msra.mxu0 %v2910
        %3016 = vmatprep.mubr.bf16.mxu0 %v2750
        %3017 = vmatmul.mubr.bf16.gmra.mrb[0].mxu0 %v2749
        %v3018 = vpop.f32.mrb[0].mxu0
        %v3019 = vadd.f32 %v2978, %v3018
        %v3020 = vpop.f32.mrb[0].mxu0
        %v3021 = vpop.f32.mrb[0].mxu0
        %v3022 = vadd.f32 %v2981, %v3021
        %v3023 = vpop.f32.mrb[0].mxu0
        %3024 = vdwg.mxu0
        %v3025 = vadd.f32 %v2268, %v3019
        %v3026 = vadd.f32 %v2269, %v3022
        %v3027 = vld [vmem:[%s739] sm:$0x1]
        %v3029 = vlaneseq
        %v3030 = vshrl.u32 %v3029, 7
        %v3031 = vsub.s32 0, %v3030
        %v3032 = vrot.slane %v3027, %v3031
        %v3034 = vadd.f32 %v3025, %v3032
        %v3035 = vadd.f32 %v3026, %v3032
        %3036 = vst [vmem:[#allocation2] sm:$0xff] %v3034
        %3037 = vst [vmem:[#allocation2 + $0x8] sm:$0xff] %v3035
        %p3038 = scmp.eq.s32.totalorder %s30, 1
        // Predicated region
        $region97: #{phikon_forward.1} parent=91 // pred_check
          %p3039 = pneg %p3038
        $region98: #{phikon_forward.1} parent=91 // pred_check_branch
          %3041 = sbr.rel (%p3039) target = $region100
        $region99: #{phikon_forward.1} parent=91 // pred_region
          %v3043 = vrot.slane %v3035, 7
          %vm3045 = vcmask 1040384
          %v3046 = vsel %vm3045, %v3034, %v3043
          %v3047 = vld [vmem:[%s16] sm:$0x1]
          %v3048 = vld [vmem:[%s17] sm:$0x1]
          %vm3049 = vcmask 1041408
          %v3050 = vsel %vm3049, %v3046, 0.0
          %3051 = vadd.xlane.f32.xlu0 %v3050
          %v3052 = vpop.xlane.xlu0 %3051
          %v3053 = vmul.f32 %v3052, %v920
          %v3054 = vsub.f32 %v3046, %v3053
          %v3055 = vmul.f32 %v3054, %v3054
          %v3056 = vsel %vm3049, %v3055, 0.0
          %3057 = vadd.xlane.f32.xlu0 %v3056
          %v3058 = vpop.xlane.xlu0 %3057
          %v3059 = vmul.f32 %v3058, %v920
          %v3060 = vadd.f32 %v3059, 1e-12
          %v3061 = vrsqrt.pop %v3060
          %v3062 = vmul.f32 %v3054, %v3061
          %v3064 = vlaneseq
          %v3065 = vshrl.u32 %v3064, 7
          %v3066 = vsub.s32 0, %v3065
          %v3067 = vrot.slane %v3047, %v3066
          %v3069 = vmul.f32 %v3062, %v3067
          %v3071 = vlaneseq
          %v3072 = vshrl.u32 %v3071, 7
          %v3073 = vsub.s32 0, %v3072
          %v3074 = vrot.slane %v3048, %v3073
          %v3076 = vadd.f32 %v3069, %v3074
          %3077 = vst [vmem:[#allocation3] sm:$0x3] %v3076
        $region100: #{phikon_forward.1} parent=91 // pred_fallthru
          _
        // Predicated region
        $region101: #{phikon_forward.1} parent=91 // pred_check
          %p3078 = pneg %p481
        $region102: #{phikon_forward.1} parent=91 // pred_check_branch
          %3080 = sbr.rel (%p3078) target = $region104
        $region103: #{phikon_forward.1} parent=91 // pred_region
          %s3082 = ssub.s32 32, 32
          %3083 = vsyncadd [#allocation4], %s3082
          %s3085 = sshll.u32 [#allocation3], 4
          %s3086 = int_to_ptr.vmem [resolvable:$true] %s3085
          %3088 = dma.vmem_to_hbm [thread:$0]  %s3086, 32, %s18, [#allocation4]
        $region104: #{phikon_forward.1} parent=91 // pred_fallthru
          _
        // Predicated region
        $region105: #{phikon_forward.1} parent=91 // pred_check
          %p3089 = pneg %p481
        $region106: #{phikon_forward.1} parent=91 // pred_check_branch
          %3091 = sbr.rel (%p3089) target = $region108
        $region107: #{phikon_forward.1} parent=91 // pred_region
          %3092 = dma.done [#allocation4], 32
        $region108: #{phikon_forward.1} parent=91 // pred_fallthru
          _
      $region92: #{phikon_forward.1} parent=5 // pred_fallthru
        _
      %p3093 = scmp.le.s32.totalorder 2, %s25
      // Predicated region
      $region109: #{phikon_forward.1} parent=5 // pred_check
        %p3094 = pneg %p3093
      $region110: #{phikon_forward.1} parent=5 // pred_check_branch
        %3096 = sbr.rel (%p3094) target = $region112
      $region111: #{phikon_forward.1} parent=5 // pred_region
        %s3097 = ssub.s32 %s25, 2
      $region112: #{phikon_forward.1} parent=5 // pred_fallthru
        _
    $region6: #{phikon_forward.1} parent=1 // loop_footer
      %s29 = sadd.s32 1, %s25
    $region7: #{phikon_forward.1} parent=1 // loop_footer_branch
      %24 = sbr.rel target = $region3
    $region8: #{phikon_forward.1} parent=1 // loop_exit
      _
    %3098 = vsyncpa [#allocation4], 1
    %s3099 = scalar_lea.sflag [#allocation4], 1
    %3100 = vsyncpa %s3099, 1

</llo_original>
